<compile_context>
chip_gen: v5e
topology: v5e:2x2
jax: 0.10.0
libtpu: 0.0.40
codegen_flags: <defaults>
</compile_context>

<pallas_src>
from functools import partial

import jax
import jax.numpy as jnp
from jax.experimental import pallas as pl
from jax.experimental.pallas import tpu as pltpu


def _upsample_rows_kernel(x_ref, o_ref, *, sh, sw):
    """x_ref: (Rb, W) input rows; o_ref: (Rb, sh*W*sw) lane-dense output rows.

    For input row r: out[r, k*W*sw + w*sw + j] = x[r, w]  (k < sh, j < sw),
    which is byte-identical to nearest-neighbor NCHW upsampling.
    """
    rb, w = x_ref.shape
    x = x_ref[...]
    if sw == 1:
        xe = x
    else:
        # Width expansion: xe[:, w*sw + j] = x[:, w].  This is the one
        # unavoidable lane interleave, done on a block 1/sh of the output size.
        xe = jnp.broadcast_to(x[:, :, None], (rb, w, sw)).reshape(rb, w * sw)
    row = w * sw
    # sh dense, statically-offset stores of the same vregs; no output-sized
    # broadcast/reshape temporary is materialized.
    for k in range(sh):
        o_ref[:, k * row:(k + 1) * row] = xe


def _round_up(a, m):
    return ((a + m - 1) // m) * m


def _vmem_capacity_bytes(default=64 << 20):
    # Conservative default (v7x per-TC VMEM) if the query is unavailable.
    try:
        cap = getattr(pltpu.get_tpu_info(), "vmem_capacity_bytes", None)
        if cap:
            return int(cap)
    except Exception:
        pass
    return default


def _pick_row_block(total_rows, in_row_bytes, out_row_bytes, sublane):
    """cdiv-based row-block sizing tied to the per-core VMEM budget."""
    vmem_cap = _vmem_capacity_bytes()
    # ~75% of per-core VMEM (<= ~48 MiB of v7x's 64 MiB; <= 96 MiB on the
    # 128 MiB generations), leaving headroom for compiler temporaries.
    budget = min((vmem_cap * 3) // 4, 96 << 20)
    # Steady-state footprint per input row: double-buffered in + out blocks
    # plus the width-expanded temporary (counted as a full out row, to be safe).
    per_row = 2 * in_row_bytes + 3 * out_row_bytes
    rows = max(1, budget // per_row)
    # Cap the output block around 16 MiB: long efficient DMAs, bounded latency.
    rows = min(rows, max(1, (16 << 20) // out_row_bytes))
    rb = max(sublane, (rows // sublane) * sublane)
    if rb >= total_rows:
        return total_rows
    grid_len = pl.cdiv(total_rows, rb)
    if grid_len > 1 and grid_len % 2 == 1:
        # Prefer an even step count (v7x has 2 TensorCores) by adding at most
        # one extra, slightly smaller step -- never by halving the block size.
        rb_alt = max(sublane, _round_up(pl.cdiv(total_rows, grid_len + 1), sublane))
        if rb_alt < total_rows and pl.cdiv(total_rows, rb_alt) % 2 == 0:
            rb = rb_alt
    return rb


def upsample(x, scale_factor=1, mode="nearest"):
    """JAX/Pallas equivalent of the PyTorch Upsample module's forward."""
    if mode != "nearest":
        # TODO(synk): only 'nearest' mode (the module default) is implemented.
        raise NotImplementedError("only mode='nearest' is supported")

    if isinstance(scale_factor, (tuple, list)):
        sh_f, sw_f = scale_factor
    else:
        sh_f = sw_f = scale_factor
    if float(sh_f) != int(sh_f) or float(sw_f) != int(sw_f):
        # TODO(synk): fractional nearest scales need a gather-style index map.
        raise NotImplementedError("only integer scale factors are supported")
    sh, sw = int(sh_f), int(sw_f)
    if sh < 1 or sw < 1:
        raise ValueError("scale_factor must be >= 1")

    N, C, H, W = x.shape
    if sh == 1 and sw == 1:
        return x  # no-op: avoid a full HBM round-trip copy

    total_rows = N * C * H
    out_row = sh * W * sw
    itemsize = jnp.dtype(x.dtype).itemsize
    sublane = max(8, 32 // itemsize)  # 8 for f32, 16 for bf16, 32 for int8
    rb = _pick_row_block(total_rows, W * itemsize, out_row * itemsize, sublane)
    grid = (pl.cdiv(total_rows, rb),)

    # VMEM limit from the actual footprint with ~1.5x headroom, clamped to the
    # physical per-core capacity (raises the small scoped default on v5e).
    need = rb * (2 * W + 3 * out_row) * itemsize
    vmem_limit = int(min(_vmem_capacity_bytes(), max(32 << 20, need + need // 2)))

    # Byte-identical row-major views of the NCHW input/output tensors.
    xr = x.reshape(total_rows, W)

    out_flat = pl.pallas_call(
        partial(_upsample_rows_kernel, sh=sh, sw=sw),
        out_shape=jax.ShapeDtypeStruct((total_rows, out_row), x.dtype),
        grid=grid,
        in_specs=[pl.BlockSpec((rb, W), lambda i: (i, 0))],
        out_specs=pl.BlockSpec((rb, out_row), lambda i: (i, 0)),
        compiler_params=pltpu.CompilerParams(
            dimension_semantics=("parallel",),
            vmem_limit_bytes=vmem_limit,
        ),
    )(xr)

    # Row-major contiguous, so this reshape back to NCHW is free.
    return out_flat.reshape(N, C, H * sh, W * sw)


if __name__ == "__main__":
    key = jax.random.PRNGKey(0)
    # small NCHW input consistent with the module's forward
    x = jax.random.normal(key, (2, 4, 16, 16), dtype=jnp.float32)
    scale_factor = 2

    y = upsample(x, scale_factor=scale_factor, mode="nearest")
    y = jax.block_until_ready(y)

    # reference: nearest upsample with integer scale == repeat along H and W
    ref = jnp.repeat(jnp.repeat(x, scale_factor, axis=2), scale_factor, axis=3)

    assert y.shape == (2, 4, 16 * scale_factor, 16 * scale_factor), y.shape
    assert y.dtype == x.dtype
    assert jnp.array_equal(y, ref), "mismatch vs reference nearest upsample"

    print("KERNEL_OK")
</pallas_src>

<mosaic_0001>
module attributes {stable_mosaic.version = 11 : i64} {
  func.func @_upsample_rows_kernel(%arg0: i32, %arg1: memref<128x16xf32, #tpu.memory_space<vmem>>, %arg2: memref<128x64xf32, #tpu.memory_space<vmem>>) attributes {dimension_semantics = [#tpu.dimension_semantics<parallel>], iteration_bounds = array<i64: 1>, scalar_prefetch = 0 : i64, scratch_operands = 0 : i64, tpu.core_type = #tpu.core_type<tc>, window_params = [{transform_indices = @transform_0, window_bounds = array<i64: 128, 16>}, {transform_indices = @transform_1, window_bounds = array<i64: 128, 64>}]} {
    %c0 = arith.constant 0 : index
    %c0_0 = arith.constant 0 : index
    %0 = vector.load %arg1[%c0, %c0_0] : memref<128x16xf32, #tpu.memory_space<vmem>>, vector<128x16xf32>
    %1 = vector.shape_cast %0 : vector<128x16xf32> to vector<128x16x1xf32>
    %2 = vector.shape_cast %1 : vector<128x16x1xf32> to vector<128x16x1xf32>
    %3 = vector.broadcast %2 : vector<128x16x1xf32> to vector<128x16x2xf32>
    %4 = vector.shape_cast %3 : vector<128x16x2xf32> to vector<128x32xf32>
    %c0_1 = arith.constant 0 : index
    %c0_2 = arith.constant 0 : index
    %5 = vector.load %arg2[%c0_1, %c0_2] : memref<128x64xf32, #tpu.memory_space<vmem>>, vector<128x32xf32>
    tpu.vector_store %arg2[%c0_1, %c0_2], %4 {strides = array<i32>} : memref<128x64xf32, #tpu.memory_space<vmem>>, vector<128x32xf32>,
    %c0_3 = arith.constant 0 : index
    %c32 = arith.constant 32 : index
    %6 = vector.load %arg2[%c0_3, %c32] : memref<128x64xf32, #tpu.memory_space<vmem>>, vector<128x32xf32>
    tpu.vector_store %arg2[%c0_3, %c32], %4 {strides = array<i32>} : memref<128x64xf32, #tpu.memory_space<vmem>>, vector<128x32xf32>,
    return
  }
  func.func @transform_0(%arg0: i32) -> (i32, i32) {
    %c0_i32 = arith.constant 0 : i32
    %c0_i32_0 = arith.constant 0 : i32
    return %arg0, %c0_i32 : i32, i32
  }
  func.func @transform_1(%arg0: i32) -> (i32, i32) {
    %c0_i32 = arith.constant 0 : i32
    %c0_i32_0 = arith.constant 0 : i32
    return %arg0, %c0_i32 : i32, i32
  }
}

</mosaic_0001>

<llo_original>
// kernel: tpu_custom_call.1
$region0: #{tpu_custom_call.1}
  #allocation0 [shape = 'u32[]', space=smem, size = 0x4, offset = 0x4, fixed_abs, tag = 'smem constant byte address 0x4 - core index']
  #allocation1 [shape = 'u32[72,128]{1,0:T(1,128)}', space=vmem, size = 0x9000, scoped, tag = 'internal scratch']
  %s0 = inlined_call_operand.vmem [shape: f32[128,16], index: 0, kind: input, shape index: {}]
  %s1 = inlined_call_operand.vmem [shape: f32[128,64], index: 1, kind: output, shape index: {}]
  %s2 = sld [smem:[#allocation0]]
  $region14: #{tpu_custom_call.1} parent=0
    _
  %s4 = ssub.s32 1, %s2
  %s5 = scalar_select 0, %s4, %s2
  // Predicated region
  $region2: #{tpu_custom_call.1} parent=0 // pred_check
    _
  $region3: #{tpu_custom_call.1} parent=0 // pred_check_branch
    %7 = sbr.rel (0) target = $region5
  $region4: #{tpu_custom_call.1} parent=0 // pred_region
    _
  $region5: #{tpu_custom_call.1} parent=0 // pred_fallthru
    _
  %v8 = vld [vmem:[%s0] sm:$0xff]
  %v9 = vld [vmem:[%s0 + $0x8] sm:$0xff]
  %v10 = vld [vmem:[%s0 + $0x10] sm:$0xff]
  %v11 = vld [vmem:[%s0 + $0x18] sm:$0xff]
  %v12 = vld [vmem:[%s0 + $0x20] sm:$0xff]
  %v13 = vld [vmem:[%s0 + $0x28] sm:$0xff]
  %v14 = vld [vmem:[%s0 + $0x30] sm:$0xff]
  %v15 = vld [vmem:[%s0 + $0x38] sm:$0xff]
  %v16 = vld [vmem:[%s0 + $0x40] sm:$0xff]
  %v17 = vld [vmem:[%s0 + $0x48] sm:$0xff]
  %v18 = vld [vmem:[%s0 + $0x50] sm:$0xff]
  %v19 = vld [vmem:[%s0 + $0x58] sm:$0xff]
  %v20 = vld [vmem:[%s0 + $0x60] sm:$0xff]
  %v21 = vld [vmem:[%s0 + $0x68] sm:$0xff]
  %v22 = vld [vmem:[%s0 + $0x70] sm:$0xff]
  %v23 = vld [vmem:[%s0 + $0x78] sm:$0xff]
  %v24 = vperm.slane %v8, 0
  %v25 = vlaneseq
  %v26 = vshrl.u32 %v25, 7
  %28 = vset.pattern.permute.xlu0 %v26
  %29 = vperm.xlu0 %28, %v24
  %v30 = vpop.permute.xlu0 %29
  %v31 = vlaneseq
  %v32 = vshrl.u32 %v31, 7
  %v33 = vadd.s32 %v32, 8
  %34 = vset.pattern.permute.xlu0 %v33
  %35 = vperm.xlu0 %34, %v24
  %v36 = vpop.permute.xlu0 %35
  %v37 = vperm.slane %v8, 1
  %v38 = vlaneseq
  %v39 = vshrl.u32 %v38, 7
  %41 = vset.pattern.permute.xlu0 %v39
  %42 = vperm.xlu0 %41, %v37
  %v43 = vpop.permute.xlu0 %42
  %v44 = vlaneseq
  %v45 = vshrl.u32 %v44, 7
  %v46 = vadd.s32 %v45, 8
  %47 = vset.pattern.permute.xlu0 %v46
  %48 = vperm.xlu0 %47, %v37
  %v49 = vpop.permute.xlu0 %48
  %v50 = vperm.slane %v8, 2
  %v51 = vlaneseq
  %v52 = vshrl.u32 %v51, 7
  %54 = vset.pattern.permute.xlu0 %v52
  %55 = vperm.xlu0 %54, %v50
  %v56 = vpop.permute.xlu0 %55
  %v57 = vlaneseq
  %v58 = vshrl.u32 %v57, 7
  %v59 = vadd.s32 %v58, 8
  %60 = vset.pattern.permute.xlu0 %v59
  %61 = vperm.xlu0 %60, %v50
  %v62 = vpop.permute.xlu0 %61
  %v63 = vperm.slane %v8, 3
  %v64 = vlaneseq
  %v65 = vshrl.u32 %v64, 7
  %67 = vset.pattern.permute.xlu0 %v65
  %68 = vperm.xlu0 %67, %v63
  %v69 = vpop.permute.xlu0 %68
  %v70 = vlaneseq
  %v71 = vshrl.u32 %v70, 7
  %v72 = vadd.s32 %v71, 8
  %73 = vset.pattern.permute.xlu0 %v72
  %74 = vperm.xlu0 %73, %v63
  %v75 = vpop.permute.xlu0 %74
  %v76 = vperm.slane %v8, 4
  %v77 = vlaneseq
  %v78 = vshrl.u32 %v77, 7
  %80 = vset.pattern.permute.xlu0 %v78
  %81 = vperm.xlu0 %80, %v76
  %v82 = vpop.permute.xlu0 %81
  %v83 = vlaneseq
  %v84 = vshrl.u32 %v83, 7
  %v85 = vadd.s32 %v84, 8
  %86 = vset.pattern.permute.xlu0 %v85
  %87 = vperm.xlu0 %86, %v76
  %v88 = vpop.permute.xlu0 %87
  %v89 = vperm.slane %v8, 5
  %v90 = vlaneseq
  %v91 = vshrl.u32 %v90, 7
  %93 = vset.pattern.permute.xlu0 %v91
  %94 = vperm.xlu0 %93, %v89
  %v95 = vpop.permute.xlu0 %94
  %v96 = vlaneseq
  %v97 = vshrl.u32 %v96, 7
  %v98 = vadd.s32 %v97, 8
  %99 = vset.pattern.permute.xlu0 %v98
  %100 = vperm.xlu0 %99, %v89
  %v101 = vpop.permute.xlu0 %100
  %v102 = vperm.slane %v8, 6
  %v103 = vlaneseq
  %v104 = vshrl.u32 %v103, 7
  %106 = vset.pattern.permute.xlu0 %v104
  %107 = vperm.xlu0 %106, %v102
  %v108 = vpop.permute.xlu0 %107
  %v109 = vlaneseq
  %v110 = vshrl.u32 %v109, 7
  %v111 = vadd.s32 %v110, 8
  %112 = vset.pattern.permute.xlu0 %v111
  %113 = vperm.xlu0 %112, %v102
  %v114 = vpop.permute.xlu0 %113
  %v115 = vperm.slane %v8, 7
  %v116 = vlaneseq
  %v117 = vshrl.u32 %v116, 7
  %119 = vset.pattern.permute.xlu0 %v117
  %120 = vperm.xlu0 %119, %v115
  %v121 = vpop.permute.xlu0 %120
  %v122 = vlaneseq
  %v123 = vshrl.u32 %v122, 7
  %v124 = vadd.s32 %v123, 8
  %125 = vset.pattern.permute.xlu0 %v124
  %126 = vperm.xlu0 %125, %v115
  %v127 = vpop.permute.xlu0 %126
  %v128 = vperm.slane %v9, 0
  %v129 = vlaneseq
  %v130 = vshrl.u32 %v129, 7
  %132 = vset.pattern.permute.xlu0 %v130
  %133 = vperm.xlu0 %132, %v128
  %v134 = vpop.permute.xlu0 %133
  %v135 = vlaneseq
  %v136 = vshrl.u32 %v135, 7
  %v137 = vadd.s32 %v136, 8
  %138 = vset.pattern.permute.xlu0 %v137
  %139 = vperm.xlu0 %138, %v128
  %v140 = vpop.permute.xlu0 %139
  %v141 = vperm.slane %v9, 1
  %v142 = vlaneseq
  %v143 = vshrl.u32 %v142, 7
  %145 = vset.pattern.permute.xlu0 %v143
  %146 = vperm.xlu0 %145, %v141
  %v147 = vpop.permute.xlu0 %146
  %v148 = vlaneseq
  %v149 = vshrl.u32 %v148, 7
  %v150 = vadd.s32 %v149, 8
  %151 = vset.pattern.permute.xlu0 %v150
  %152 = vperm.xlu0 %151, %v141
  %v153 = vpop.permute.xlu0 %152
  %v154 = vperm.slane %v9, 2
  %v155 = vlaneseq
  %v156 = vshrl.u32 %v155, 7
  %158 = vset.pattern.permute.xlu0 %v156
  %159 = vperm.xlu0 %158, %v154
  %v160 = vpop.permute.xlu0 %159
  %v161 = vlaneseq
  %v162 = vshrl.u32 %v161, 7
  %v163 = vadd.s32 %v162, 8
  %164 = vset.pattern.permute.xlu0 %v163
  %165 = vperm.xlu0 %164, %v154
  %v166 = vpop.permute.xlu0 %165
  %v167 = vperm.slane %v9, 3
  %v168 = vlaneseq
  %v169 = vshrl.u32 %v168, 7
  %171 = vset.pattern.permute.xlu0 %v169
  %172 = vperm.xlu0 %171, %v167
  %v173 = vpop.permute.xlu0 %172
  %v174 = vlaneseq
  %v175 = vshrl.u32 %v174, 7
  %v176 = vadd.s32 %v175, 8
  %177 = vset.pattern.permute.xlu0 %v176
  %178 = vperm.xlu0 %177, %v167
  %v179 = vpop.permute.xlu0 %178
  %v180 = vperm.slane %v9, 4
  %v181 = vlaneseq
  %v182 = vshrl.u32 %v181, 7
  %184 = vset.pattern.permute.xlu0 %v182
  %185 = vperm.xlu0 %184, %v180
  %v186 = vpop.permute.xlu0 %185
  %v187 = vlaneseq
  %v188 = vshrl.u32 %v187, 7
  %v189 = vadd.s32 %v188, 8
  %190 = vset.pattern.permute.xlu0 %v189
  %191 = vperm.xlu0 %190, %v180
  %v192 = vpop.permute.xlu0 %191
  %v193 = vperm.slane %v9, 5
  %v194 = vlaneseq
  %v195 = vshrl.u32 %v194, 7
  %197 = vset.pattern.permute.xlu0 %v195
  %198 = vperm.xlu0 %197, %v193
  %v199 = vpop.permute.xlu0 %198
  %v200 = vlaneseq
  %v201 = vshrl.u32 %v200, 7
  %v202 = vadd.s32 %v201, 8
  %203 = vset.pattern.permute.xlu0 %v202
  %204 = vperm.xlu0 %203, %v193
  %v205 = vpop.permute.xlu0 %204
  %v206 = vperm.slane %v9, 6
  %v207 = vlaneseq
  %v208 = vshrl.u32 %v207, 7
  %210 = vset.pattern.permute.xlu0 %v208
  %211 = vperm.xlu0 %210, %v206
  %v212 = vpop.permute.xlu0 %211
  %v213 = vlaneseq
  %v214 = vshrl.u32 %v213, 7
  %v215 = vadd.s32 %v214, 8
  %216 = vset.pattern.permute.xlu0 %v215
  %217 = vperm.xlu0 %216, %v206
  %v218 = vpop.permute.xlu0 %217
  %v219 = vperm.slane %v9, 7
  %v220 = vlaneseq
  %v221 = vshrl.u32 %v220, 7
  %223 = vset.pattern.permute.xlu0 %v221
  %224 = vperm.xlu0 %223, %v219
  %v225 = vpop.permute.xlu0 %224
  %v226 = vlaneseq
  %v227 = vshrl.u32 %v226, 7
  %v228 = vadd.s32 %v227, 8
  %229 = vset.pattern.permute.xlu0 %v228
  %230 = vperm.xlu0 %229, %v219
  %v231 = vpop.permute.xlu0 %230
  %v232 = vperm.slane %v10, 0
  %v233 = vlaneseq
  %v234 = vshrl.u32 %v233, 7
  %236 = vset.pattern.permute.xlu0 %v234
  %237 = vperm.xlu0 %236, %v232
  %v238 = vpop.permute.xlu0 %237
  %v239 = vlaneseq
  %v240 = vshrl.u32 %v239, 7
  %v241 = vadd.s32 %v240, 8
  %242 = vset.pattern.permute.xlu0 %v241
  %243 = vperm.xlu0 %242, %v232
  %v244 = vpop.permute.xlu0 %243
  %v245 = vperm.slane %v10, 1
  %v246 = vlaneseq
  %v247 = vshrl.u32 %v246, 7
  %249 = vset.pattern.permute.xlu0 %v247
  %250 = vperm.xlu0 %249, %v245
  %v251 = vpop.permute.xlu0 %250
  %v252 = vlaneseq
  %v253 = vshrl.u32 %v252, 7
  %v254 = vadd.s32 %v253, 8
  %255 = vset.pattern.permute.xlu0 %v254
  %256 = vperm.xlu0 %255, %v245
  %v257 = vpop.permute.xlu0 %256
  %v258 = vperm.slane %v10, 2
  %v259 = vlaneseq
  %v260 = vshrl.u32 %v259, 7
  %262 = vset.pattern.permute.xlu0 %v260
  %263 = vperm.xlu0 %262, %v258
  %v264 = vpop.permute.xlu0 %263
  %v265 = vlaneseq
  %v266 = vshrl.u32 %v265, 7
  %v267 = vadd.s32 %v266, 8
  %268 = vset.pattern.permute.xlu0 %v267
  %269 = vperm.xlu0 %268, %v258
  %v270 = vpop.permute.xlu0 %269
  %v271 = vperm.slane %v10, 3
  %v272 = vlaneseq
  %v273 = vshrl.u32 %v272, 7
  %275 = vset.pattern.permute.xlu0 %v273
  %276 = vperm.xlu0 %275, %v271
  %v277 = vpop.permute.xlu0 %276
  %v278 = vlaneseq
  %v279 = vshrl.u32 %v278, 7
  %v280 = vadd.s32 %v279, 8
  %281 = vset.pattern.permute.xlu0 %v280
  %282 = vperm.xlu0 %281, %v271
  %v283 = vpop.permute.xlu0 %282
  %v284 = vperm.slane %v10, 4
  %v285 = vlaneseq
  %v286 = vshrl.u32 %v285, 7
  %288 = vset.pattern.permute.xlu0 %v286
  %289 = vperm.xlu0 %288, %v284
  %v290 = vpop.permute.xlu0 %289
  %v291 = vlaneseq
  %v292 = vshrl.u32 %v291, 7
  %v293 = vadd.s32 %v292, 8
  %294 = vset.pattern.permute.xlu0 %v293
  %295 = vperm.xlu0 %294, %v284
  %v296 = vpop.permute.xlu0 %295
  %v297 = vperm.slane %v10, 5
  %v298 = vlaneseq
  %v299 = vshrl.u32 %v298, 7
  %301 = vset.pattern.permute.xlu0 %v299
  %302 = vperm.xlu0 %301, %v297
  %v303 = vpop.permute.xlu0 %302
  %v304 = vlaneseq
  %v305 = vshrl.u32 %v304, 7
  %v306 = vadd.s32 %v305, 8
  %307 = vset.pattern.permute.xlu0 %v306
  %308 = vperm.xlu0 %307, %v297
  %v309 = vpop.permute.xlu0 %308
  %v310 = vperm.slane %v10, 6
  %v311 = vlaneseq
  %v312 = vshrl.u32 %v311, 7
  %314 = vset.pattern.permute.xlu0 %v312
  %315 = vperm.xlu0 %314, %v310
  %v316 = vpop.permute.xlu0 %315
  %v317 = vlaneseq
  %v318 = vshrl.u32 %v317, 7
  %v319 = vadd.s32 %v318, 8
  %320 = vset.pattern.permute.xlu0 %v319
  %321 = vperm.xlu0 %320, %v310
  %v322 = vpop.permute.xlu0 %321
  %v323 = vperm.slane %v10, 7
  %v324 = vlaneseq
  %v325 = vshrl.u32 %v324, 7
  %327 = vset.pattern.permute.xlu0 %v325
  %328 = vperm.xlu0 %327, %v323
  %v329 = vpop.permute.xlu0 %328
  %v330 = vlaneseq
  %v331 = vshrl.u32 %v330, 7
  %v332 = vadd.s32 %v331, 8
  %333 = vset.pattern.permute.xlu0 %v332
  %334 = vperm.xlu0 %333, %v323
  %v335 = vpop.permute.xlu0 %334
  %v336 = vperm.slane %v11, 0
  %v337 = vlaneseq
  %v338 = vshrl.u32 %v337, 7
  %340 = vset.pattern.permute.xlu0 %v338
  %341 = vperm.xlu0 %340, %v336
  %v342 = vpop.permute.xlu0 %341
  %v343 = vlaneseq
  %v344 = vshrl.u32 %v343, 7
  %v345 = vadd.s32 %v344, 8
  %346 = vset.pattern.permute.xlu0 %v345
  %347 = vperm.xlu0 %346, %v336
  %v348 = vpop.permute.xlu0 %347
  %v349 = vperm.slane %v11, 1
  %v350 = vlaneseq
  %v351 = vshrl.u32 %v350, 7
  %353 = vset.pattern.permute.xlu0 %v351
  %354 = vperm.xlu0 %353, %v349
  %v355 = vpop.permute.xlu0 %354
  %v356 = vlaneseq
  %v357 = vshrl.u32 %v356, 7
  %v358 = vadd.s32 %v357, 8
  %359 = vset.pattern.permute.xlu0 %v358
  %360 = vperm.xlu0 %359, %v349
  %v361 = vpop.permute.xlu0 %360
  %v362 = vperm.slane %v11, 2
  %v363 = vlaneseq
  %v364 = vshrl.u32 %v363, 7
  %366 = vset.pattern.permute.xlu0 %v364
  %367 = vperm.xlu0 %366, %v362
  %v368 = vpop.permute.xlu0 %367
  %v369 = vlaneseq
  %v370 = vshrl.u32 %v369, 7
  %v371 = vadd.s32 %v370, 8
  %372 = vset.pattern.permute.xlu0 %v371
  %373 = vperm.xlu0 %372, %v362
  %v374 = vpop.permute.xlu0 %373
  %v375 = vperm.slane %v11, 3
  %v376 = vlaneseq
  %v377 = vshrl.u32 %v376, 7
  %379 = vset.pattern.permute.xlu0 %v377
  %380 = vperm.xlu0 %379, %v375
  %v381 = vpop.permute.xlu0 %380
  %v382 = vlaneseq
  %v383 = vshrl.u32 %v382, 7
  %v384 = vadd.s32 %v383, 8
  %385 = vset.pattern.permute.xlu0 %v384
  %386 = vperm.xlu0 %385, %v375
  %v387 = vpop.permute.xlu0 %386
  %v388 = vperm.slane %v11, 4
  %v389 = vlaneseq
  %v390 = vshrl.u32 %v389, 7
  %392 = vset.pattern.permute.xlu0 %v390
  %393 = vperm.xlu0 %392, %v388
  %v394 = vpop.permute.xlu0 %393
  %v395 = vlaneseq
  %v396 = vshrl.u32 %v395, 7
  %v397 = vadd.s32 %v396, 8
  %398 = vset.pattern.permute.xlu0 %v397
  %399 = vperm.xlu0 %398, %v388
  %v400 = vpop.permute.xlu0 %399
  %v401 = vperm.slane %v11, 5
  %v402 = vlaneseq
  %v403 = vshrl.u32 %v402, 7
  %405 = vset.pattern.permute.xlu0 %v403
  %406 = vperm.xlu0 %405, %v401
  %v407 = vpop.permute.xlu0 %406
  %v408 = vlaneseq
  %v409 = vshrl.u32 %v408, 7
  %v410 = vadd.s32 %v409, 8
  %411 = vset.pattern.permute.xlu0 %v410
  %412 = vperm.xlu0 %411, %v401
  %v413 = vpop.permute.xlu0 %412
  %v414 = vperm.slane %v11, 6
  %v415 = vlaneseq
  %v416 = vshrl.u32 %v415, 7
  %418 = vset.pattern.permute.xlu0 %v416
  %419 = vperm.xlu0 %418, %v414
  %v420 = vpop.permute.xlu0 %419
  %v421 = vlaneseq
  %v422 = vshrl.u32 %v421, 7
  %v423 = vadd.s32 %v422, 8
  %424 = vset.pattern.permute.xlu0 %v423
  %425 = vperm.xlu0 %424, %v414
  %v426 = vpop.permute.xlu0 %425
  %v427 = vperm.slane %v11, 7
  %v428 = vlaneseq
  %v429 = vshrl.u32 %v428, 7
  %431 = vset.pattern.permute.xlu0 %v429
  %432 = vperm.xlu0 %431, %v427
  %v433 = vpop.permute.xlu0 %432
  %v434 = vlaneseq
  %v435 = vshrl.u32 %v434, 7
  %v436 = vadd.s32 %v435, 8
  %437 = vset.pattern.permute.xlu0 %v436
  %438 = vperm.xlu0 %437, %v427
  %v439 = vpop.permute.xlu0 %438
  %v440 = vperm.slane %v12, 0
  %v441 = vlaneseq
  %v442 = vshrl.u32 %v441, 7
  %444 = vset.pattern.permute.xlu0 %v442
  %445 = vperm.xlu0 %444, %v440
  %v446 = vpop.permute.xlu0 %445
  %v447 = vlaneseq
  %v448 = vshrl.u32 %v447, 7
  %v449 = vadd.s32 %v448, 8
  %450 = vset.pattern.permute.xlu0 %v449
  %451 = vperm.xlu0 %450, %v440
  %v452 = vpop.permute.xlu0 %451
  %v453 = vperm.slane %v12, 1
  %v454 = vlaneseq
  %v455 = vshrl.u32 %v454, 7
  %457 = vset.pattern.permute.xlu0 %v455
  %458 = vperm.xlu0 %457, %v453
  %v459 = vpop.permute.xlu0 %458
  %v460 = vlaneseq
  %v461 = vshrl.u32 %v460, 7
  %v462 = vadd.s32 %v461, 8
  %463 = vset.pattern.permute.xlu0 %v462
  %464 = vperm.xlu0 %463, %v453
  %v465 = vpop.permute.xlu0 %464
  %v466 = vperm.slane %v12, 2
  %v467 = vlaneseq
  %v468 = vshrl.u32 %v467, 7
  %470 = vset.pattern.permute.xlu0 %v468
  %471 = vperm.xlu0 %470, %v466
  %v472 = vpop.permute.xlu0 %471
  %v473 = vlaneseq
  %v474 = vshrl.u32 %v473, 7
  %v475 = vadd.s32 %v474, 8
  %476 = vset.pattern.permute.xlu0 %v475
  %477 = vperm.xlu0 %476, %v466
  %v478 = vpop.permute.xlu0 %477
  %v479 = vperm.slane %v12, 3
  %v480 = vlaneseq
  %v481 = vshrl.u32 %v480, 7
  %483 = vset.pattern.permute.xlu0 %v481
  %484 = vperm.xlu0 %483, %v479
  %v485 = vpop.permute.xlu0 %484
  %v486 = vlaneseq
  %v487 = vshrl.u32 %v486, 7
  %v488 = vadd.s32 %v487, 8
  %489 = vset.pattern.permute.xlu0 %v488
  %490 = vperm.xlu0 %489, %v479
  %v491 = vpop.permute.xlu0 %490
  %v492 = vperm.slane %v12, 4
  %v493 = vlaneseq
  %v494 = vshrl.u32 %v493, 7
  %496 = vset.pattern.permute.xlu0 %v494
  %497 = vperm.xlu0 %496, %v492
  %v498 = vpop.permute.xlu0 %497
  %v499 = vlaneseq
  %v500 = vshrl.u32 %v499, 7
  %v501 = vadd.s32 %v500, 8
  %502 = vset.pattern.permute.xlu0 %v501
  %503 = vperm.xlu0 %502, %v492
  %v504 = vpop.permute.xlu0 %503
  %v505 = vperm.slane %v12, 5
  %v506 = vlaneseq
  %v507 = vshrl.u32 %v506, 7
  %509 = vset.pattern.permute.xlu0 %v507
  %510 = vperm.xlu0 %509, %v505
  %v511 = vpop.permute.xlu0 %510
  %v512 = vlaneseq
  %v513 = vshrl.u32 %v512, 7
  %v514 = vadd.s32 %v513, 8
  %515 = vset.pattern.permute.xlu0 %v514
  %516 = vperm.xlu0 %515, %v505
  %v517 = vpop.permute.xlu0 %516
  %v518 = vperm.slane %v12, 6
  %v519 = vlaneseq
  %v520 = vshrl.u32 %v519, 7
  %522 = vset.pattern.permute.xlu0 %v520
  %523 = vperm.xlu0 %522, %v518
  %v524 = vpop.permute.xlu0 %523
  %v525 = vlaneseq
  %v526 = vshrl.u32 %v525, 7
  %v527 = vadd.s32 %v526, 8
  %528 = vset.pattern.permute.xlu0 %v527
  %529 = vperm.xlu0 %528, %v518
  %v530 = vpop.permute.xlu0 %529
  %v531 = vperm.slane %v12, 7
  %v532 = vlaneseq
  %v533 = vshrl.u32 %v532, 7
  %535 = vset.pattern.permute.xlu0 %v533
  %536 = vperm.xlu0 %535, %v531
  %v537 = vpop.permute.xlu0 %536
  %v538 = vlaneseq
  %v539 = vshrl.u32 %v538, 7
  %v540 = vadd.s32 %v539, 8
  %541 = vset.pattern.permute.xlu0 %v540
  %542 = vperm.xlu0 %541, %v531
  %v543 = vpop.permute.xlu0 %542
  %v544 = vperm.slane %v13, 0
  %v545 = vlaneseq
  %v546 = vshrl.u32 %v545, 7
  %548 = vset.pattern.permute.xlu0 %v546
  %549 = vperm.xlu0 %548, %v544
  %v550 = vpop.permute.xlu0 %549
  %v551 = vlaneseq
  %v552 = vshrl.u32 %v551, 7
  %v553 = vadd.s32 %v552, 8
  %554 = vset.pattern.permute.xlu0 %v553
  %555 = vperm.xlu0 %554, %v544
  %v556 = vpop.permute.xlu0 %555
  %v557 = vperm.slane %v13, 1
  %v558 = vlaneseq
  %v559 = vshrl.u32 %v558, 7
  %561 = vset.pattern.permute.xlu0 %v559
  %562 = vperm.xlu0 %561, %v557
  %v563 = vpop.permute.xlu0 %562
  %v564 = vlaneseq
  %v565 = vshrl.u32 %v564, 7
  %v566 = vadd.s32 %v565, 8
  %567 = vset.pattern.permute.xlu0 %v566
  %568 = vperm.xlu0 %567, %v557
  %v569 = vpop.permute.xlu0 %568
  %v570 = vperm.slane %v13, 2
  %v571 = vlaneseq
  %v572 = vshrl.u32 %v571, 7
  %574 = vset.pattern.permute.xlu0 %v572
  %575 = vperm.xlu0 %574, %v570
  %v576 = vpop.permute.xlu0 %575
  %v577 = vlaneseq
  %v578 = vshrl.u32 %v577, 7
  %v579 = vadd.s32 %v578, 8
  %580 = vset.pattern.permute.xlu0 %v579
  %581 = vperm.xlu0 %580, %v570
  %v582 = vpop.permute.xlu0 %581
  %v583 = vperm.slane %v13, 3
  %v584 = vlaneseq
  %v585 = vshrl.u32 %v584, 7
  %587 = vset.pattern.permute.xlu0 %v585
  %588 = vperm.xlu0 %587, %v583
  %v589 = vpop.permute.xlu0 %588
  %v590 = vlaneseq
  %v591 = vshrl.u32 %v590, 7
  %v592 = vadd.s32 %v591, 8
  %593 = vset.pattern.permute.xlu0 %v592
  %594 = vperm.xlu0 %593, %v583
  %v595 = vpop.permute.xlu0 %594
  %v596 = vperm.slane %v13, 4
  %v597 = vlaneseq
  %v598 = vshrl.u32 %v597, 7
  %600 = vset.pattern.permute.xlu0 %v598
  %601 = vperm.xlu0 %600, %v596
  %v602 = vpop.permute.xlu0 %601
  %v603 = vlaneseq
  %v604 = vshrl.u32 %v603, 7
  %v605 = vadd.s32 %v604, 8
  %606 = vset.pattern.permute.xlu0 %v605
  %607 = vperm.xlu0 %606, %v596
  %v608 = vpop.permute.xlu0 %607
  %v609 = vperm.slane %v13, 5
  %v610 = vlaneseq
  %v611 = vshrl.u32 %v610, 7
  %613 = vset.pattern.permute.xlu0 %v611
  %614 = vperm.xlu0 %613, %v609
  %v615 = vpop.permute.xlu0 %614
  %v616 = vlaneseq
  %v617 = vshrl.u32 %v616, 7
  %v618 = vadd.s32 %v617, 8
  %619 = vset.pattern.permute.xlu0 %v618
  %620 = vperm.xlu0 %619, %v609
  %v621 = vpop.permute.xlu0 %620
  %v622 = vperm.slane %v13, 6
  %v623 = vlaneseq
  %v624 = vshrl.u32 %v623, 7
  %626 = vset.pattern.permute.xlu0 %v624
  %627 = vperm.xlu0 %626, %v622
  %v628 = vpop.permute.xlu0 %627
  %v629 = vlaneseq
  %v630 = vshrl.u32 %v629, 7
  %v631 = vadd.s32 %v630, 8
  %632 = vset.pattern.permute.xlu0 %v631
  %633 = vperm.xlu0 %632, %v622
  %v634 = vpop.permute.xlu0 %633
  %v635 = vperm.slane %v13, 7
  %v636 = vlaneseq
  %v637 = vshrl.u32 %v636, 7
  %639 = vset.pattern.permute.xlu0 %v637
  %640 = vperm.xlu0 %639, %v635
  %v641 = vpop.permute.xlu0 %640
  %v642 = vlaneseq
  %v643 = vshrl.u32 %v642, 7
  %v644 = vadd.s32 %v643, 8
  %645 = vset.pattern.permute.xlu0 %v644
  %646 = vperm.xlu0 %645, %v635
  %v647 = vpop.permute.xlu0 %646
  %v648 = vperm.slane %v14, 0
  %v649 = vlaneseq
  %v650 = vshrl.u32 %v649, 7
  %652 = vset.pattern.permute.xlu0 %v650
  %653 = vperm.xlu0 %652, %v648
  %v654 = vpop.permute.xlu0 %653
  %v655 = vlaneseq
  %v656 = vshrl.u32 %v655, 7
  %v657 = vadd.s32 %v656, 8
  %658 = vset.pattern.permute.xlu0 %v657
  %659 = vperm.xlu0 %658, %v648
  %v660 = vpop.permute.xlu0 %659
  %v661 = vperm.slane %v14, 1
  %v662 = vlaneseq
  %v663 = vshrl.u32 %v662, 7
  %665 = vset.pattern.permute.xlu0 %v663
  %666 = vperm.xlu0 %665, %v661
  %v667 = vpop.permute.xlu0 %666
  %v668 = vlaneseq
  %v669 = vshrl.u32 %v668, 7
  %v670 = vadd.s32 %v669, 8
  %671 = vset.pattern.permute.xlu0 %v670
  %672 = vperm.xlu0 %671, %v661
  %v673 = vpop.permute.xlu0 %672
  %v674 = vperm.slane %v14, 2
  %v675 = vlaneseq
  %v676 = vshrl.u32 %v675, 7
  %678 = vset.pattern.permute.xlu0 %v676
  %679 = vperm.xlu0 %678, %v674
  %v680 = vpop.permute.xlu0 %679
  %v681 = vlaneseq
  %v682 = vshrl.u32 %v681, 7
  %v683 = vadd.s32 %v682, 8
  %684 = vset.pattern.permute.xlu0 %v683
  %685 = vperm.xlu0 %684, %v674
  %v686 = vpop.permute.xlu0 %685
  %v687 = vperm.slane %v14, 3
  %v688 = vlaneseq
  %v689 = vshrl.u32 %v688, 7
  %691 = vset.pattern.permute.xlu0 %v689
  %692 = vperm.xlu0 %691, %v687
  %v693 = vpop.permute.xlu0 %692
  %v694 = vlaneseq
  %v695 = vshrl.u32 %v694, 7
  %v696 = vadd.s32 %v695, 8
  %697 = vset.pattern.permute.xlu0 %v696
  %698 = vperm.xlu0 %697, %v687
  %v699 = vpop.permute.xlu0 %698
  %v700 = vperm.slane %v14, 4
  %v701 = vlaneseq
  %v702 = vshrl.u32 %v701, 7
  %704 = vset.pattern.permute.xlu0 %v702
  %705 = vperm.xlu0 %704, %v700
  %v706 = vpop.permute.xlu0 %705
  %v707 = vlaneseq
  %v708 = vshrl.u32 %v707, 7
  %v709 = vadd.s32 %v708, 8
  %710 = vset.pattern.permute.xlu0 %v709
  %711 = vperm.xlu0 %710, %v700
  %v712 = vpop.permute.xlu0 %711
  %v713 = vperm.slane %v14, 5
  %v714 = vlaneseq
  %v715 = vshrl.u32 %v714, 7
  %717 = vset.pattern.permute.xlu0 %v715
  %718 = vperm.xlu0 %717, %v713
  %v719 = vpop.permute.xlu0 %718
  %v720 = vlaneseq
  %v721 = vshrl.u32 %v720, 7
  %v722 = vadd.s32 %v721, 8
  %723 = vset.pattern.permute.xlu0 %v722
  %724 = vperm.xlu0 %723, %v713
  %v725 = vpop.permute.xlu0 %724
  %v726 = vperm.slane %v14, 6
  %v727 = vlaneseq
  %v728 = vshrl.u32 %v727, 7
  %730 = vset.pattern.permute.xlu0 %v728
  %731 = vperm.xlu0 %730, %v726
  %v732 = vpop.permute.xlu0 %731
  %v733 = vlaneseq
  %v734 = vshrl.u32 %v733, 7
  %v735 = vadd.s32 %v734, 8
  %736 = vset.pattern.permute.xlu0 %v735
  %737 = vperm.xlu0 %736, %v726
  %v738 = vpop.permute.xlu0 %737
  %v739 = vperm.slane %v14, 7
  %v740 = vlaneseq
  %v741 = vshrl.u32 %v740, 7
  %743 = vset.pattern.permute.xlu0 %v741
  %744 = vperm.xlu0 %743, %v739
  %v745 = vpop.permute.xlu0 %744
  %v746 = vlaneseq
  %v747 = vshrl.u32 %v746, 7
  %v748 = vadd.s32 %v747, 8
  %749 = vset.pattern.permute.xlu0 %v748
  %750 = vperm.xlu0 %749, %v739
  %v751 = vpop.permute.xlu0 %750
  %v752 = vperm.slane %v15, 0
  %v753 = vlaneseq
  %v754 = vshrl.u32 %v753, 7
  %756 = vset.pattern.permute.xlu0 %v754
  %757 = vperm.xlu0 %756, %v752
  %v758 = vpop.permute.xlu0 %757
  %v759 = vlaneseq
  %v760 = vshrl.u32 %v759, 7
  %v761 = vadd.s32 %v760, 8
  %762 = vset.pattern.permute.xlu0 %v761
  %763 = vperm.xlu0 %762, %v752
  %v764 = vpop.permute.xlu0 %763
  %v765 = vperm.slane %v15, 1
  %v766 = vlaneseq
  %v767 = vshrl.u32 %v766, 7
  %769 = vset.pattern.permute.xlu0 %v767
  %770 = vperm.xlu0 %769, %v765
  %v771 = vpop.permute.xlu0 %770
  %v772 = vlaneseq
  %v773 = vshrl.u32 %v772, 7
  %v774 = vadd.s32 %v773, 8
  %775 = vset.pattern.permute.xlu0 %v774
  %776 = vperm.xlu0 %775, %v765
  %v777 = vpop.permute.xlu0 %776
  %v778 = vperm.slane %v15, 2
  %v779 = vlaneseq
  %v780 = vshrl.u32 %v779, 7
  %782 = vset.pattern.permute.xlu0 %v780
  %783 = vperm.xlu0 %782, %v778
  %v784 = vpop.permute.xlu0 %783
  %v785 = vlaneseq
  %v786 = vshrl.u32 %v785, 7
  %v787 = vadd.s32 %v786, 8
  %788 = vset.pattern.permute.xlu0 %v787
  %789 = vperm.xlu0 %788, %v778
  %v790 = vpop.permute.xlu0 %789
  %v791 = vperm.slane %v15, 3
  %v792 = vlaneseq
  %v793 = vshrl.u32 %v792, 7
  %795 = vset.pattern.permute.xlu0 %v793
  %796 = vperm.xlu0 %795, %v791
  %v797 = vpop.permute.xlu0 %796
  %v798 = vlaneseq
  %v799 = vshrl.u32 %v798, 7
  %v800 = vadd.s32 %v799, 8
  %801 = vset.pattern.permute.xlu0 %v800
  %802 = vperm.xlu0 %801, %v791
  %v803 = vpop.permute.xlu0 %802
  %v804 = vperm.slane %v15, 4
  %v805 = vlaneseq
  %v806 = vshrl.u32 %v805, 7
  %808 = vset.pattern.permute.xlu0 %v806
  %809 = vperm.xlu0 %808, %v804
  %v810 = vpop.permute.xlu0 %809
  %v811 = vlaneseq
  %v812 = vshrl.u32 %v811, 7
  %v813 = vadd.s32 %v812, 8
  %814 = vset.pattern.permute.xlu0 %v813
  %815 = vperm.xlu0 %814, %v804
  %v816 = vpop.permute.xlu0 %815
  %v817 = vperm.slane %v15, 5
  %v818 = vlaneseq
  %v819 = vshrl.u32 %v818, 7
  %821 = vset.pattern.permute.xlu0 %v819
  %822 = vperm.xlu0 %821, %v817
  %v823 = vpop.permute.xlu0 %822
  %v824 = vlaneseq
  %v825 = vshrl.u32 %v824, 7
  %v826 = vadd.s32 %v825, 8
  %827 = vset.pattern.permute.xlu0 %v826
  %828 = vperm.xlu0 %827, %v817
  %v829 = vpop.permute.xlu0 %828
  %v830 = vperm.slane %v15, 6
  %v831 = vlaneseq
  %v832 = vshrl.u32 %v831, 7
  %834 = vset.pattern.permute.xlu0 %v832
  %835 = vperm.xlu0 %834, %v830
  %v836 = vpop.permute.xlu0 %835
  %v837 = vlaneseq
  %v838 = vshrl.u32 %v837, 7
  %v839 = vadd.s32 %v838, 8
  %840 = vset.pattern.permute.xlu0 %v839
  %841 = vperm.xlu0 %840, %v830
  %v842 = vpop.permute.xlu0 %841
  %v843 = vperm.slane %v15, 7
  %v844 = vlaneseq
  %v845 = vshrl.u32 %v844, 7
  %847 = vset.pattern.permute.xlu0 %v845
  %848 = vperm.xlu0 %847, %v843
  %v849 = vpop.permute.xlu0 %848
  %v850 = vlaneseq
  %v851 = vshrl.u32 %v850, 7
  %v852 = vadd.s32 %v851, 8
  %853 = vset.pattern.permute.xlu0 %v852
  %854 = vperm.xlu0 %853, %v843
  %v855 = vpop.permute.xlu0 %854
  %v856 = vperm.slane %v16, 0
  %v857 = vlaneseq
  %v858 = vshrl.u32 %v857, 7
  %860 = vset.pattern.permute.xlu0 %v858
  %861 = vperm.xlu0 %860, %v856
  %v862 = vpop.permute.xlu0 %861
  %v863 = vlaneseq
  %v864 = vshrl.u32 %v863, 7
  %v865 = vadd.s32 %v864, 8
  %866 = vset.pattern.permute.xlu0 %v865
  %867 = vperm.xlu0 %866, %v856
  %v868 = vpop.permute.xlu0 %867
  %v869 = vperm.slane %v16, 1
  %v870 = vlaneseq
  %v871 = vshrl.u32 %v870, 7
  %873 = vset.pattern.permute.xlu0 %v871
  %874 = vperm.xlu0 %873, %v869
  %v875 = vpop.permute.xlu0 %874
  %v876 = vlaneseq
  %v877 = vshrl.u32 %v876, 7
  %v878 = vadd.s32 %v877, 8
  %879 = vset.pattern.permute.xlu0 %v878
  %880 = vperm.xlu0 %879, %v869
  %v881 = vpop.permute.xlu0 %880
  %v882 = vperm.slane %v16, 2
  %v883 = vlaneseq
  %v884 = vshrl.u32 %v883, 7
  %886 = vset.pattern.permute.xlu0 %v884
  %887 = vperm.xlu0 %886, %v882
  %v888 = vpop.permute.xlu0 %887
  %v889 = vlaneseq
  %v890 = vshrl.u32 %v889, 7
  %v891 = vadd.s32 %v890, 8
  %892 = vset.pattern.permute.xlu0 %v891
  %893 = vperm.xlu0 %892, %v882
  %v894 = vpop.permute.xlu0 %893
  %v895 = vperm.slane %v16, 3
  %v896 = vlaneseq
  %v897 = vshrl.u32 %v896, 7
  %899 = vset.pattern.permute.xlu0 %v897
  %900 = vperm.xlu0 %899, %v895
  %v901 = vpop.permute.xlu0 %900
  %v902 = vlaneseq
  %v903 = vshrl.u32 %v902, 7
  %v904 = vadd.s32 %v903, 8
  %905 = vset.pattern.permute.xlu0 %v904
  %906 = vperm.xlu0 %905, %v895
  %v907 = vpop.permute.xlu0 %906
  %v908 = vperm.slane %v16, 4
  %v909 = vlaneseq
  %v910 = vshrl.u32 %v909, 7
  %912 = vset.pattern.permute.xlu0 %v910
  %913 = vperm.xlu0 %912, %v908
  %v914 = vpop.permute.xlu0 %913
  %v915 = vlaneseq
  %v916 = vshrl.u32 %v915, 7
  %v917 = vadd.s32 %v916, 8
  %918 = vset.pattern.permute.xlu0 %v917
  %919 = vperm.xlu0 %918, %v908
  %v920 = vpop.permute.xlu0 %919
  %v921 = vperm.slane %v16, 5
  %v922 = vlaneseq
  %v923 = vshrl.u32 %v922, 7
  %925 = vset.pattern.permute.xlu0 %v923
  %926 = vperm.xlu0 %925, %v921
  %v927 = vpop.permute.xlu0 %926
  %v928 = vlaneseq
  %v929 = vshrl.u32 %v928, 7
  %v930 = vadd.s32 %v929, 8
  %931 = vset.pattern.permute.xlu0 %v930
  %932 = vperm.xlu0 %931, %v921
  %v933 = vpop.permute.xlu0 %932
  %v934 = vperm.slane %v16, 6
  %v935 = vlaneseq
  %v936 = vshrl.u32 %v935, 7
  %938 = vset.pattern.permute.xlu0 %v936
  %939 = vperm.xlu0 %938, %v934
  %v940 = vpop.permute.xlu0 %939
  %v941 = vlaneseq
  %v942 = vshrl.u32 %v941, 7
  %v943 = vadd.s32 %v942, 8
  %944 = vset.pattern.permute.xlu0 %v943
  %945 = vperm.xlu0 %944, %v934
  %v946 = vpop.permute.xlu0 %945
  %v947 = vperm.slane %v16, 7
  %v948 = vlaneseq
  %v949 = vshrl.u32 %v948, 7
  %951 = vset.pattern.permute.xlu0 %v949
  %952 = vperm.xlu0 %951, %v947
  %v953 = vpop.permute.xlu0 %952
  %v954 = vlaneseq
  %v955 = vshrl.u32 %v954, 7
  %v956 = vadd.s32 %v955, 8
  %957 = vset.pattern.permute.xlu0 %v956
  %958 = vperm.xlu0 %957, %v947
  %v959 = vpop.permute.xlu0 %958
  %v960 = vperm.slane %v17, 0
  %v961 = vlaneseq
  %v962 = vshrl.u32 %v961, 7
  %964 = vset.pattern.permute.xlu0 %v962
  %965 = vperm.xlu0 %964, %v960
  %v966 = vpop.permute.xlu0 %965
  %v967 = vlaneseq
  %v968 = vshrl.u32 %v967, 7
  %v969 = vadd.s32 %v968, 8
  %970 = vset.pattern.permute.xlu0 %v969
  %971 = vperm.xlu0 %970, %v960
  %v972 = vpop.permute.xlu0 %971
  %v973 = vperm.slane %v17, 1
  %v974 = vlaneseq
  %v975 = vshrl.u32 %v974, 7
  %977 = vset.pattern.permute.xlu0 %v975
  %978 = vperm.xlu0 %977, %v973
  %v979 = vpop.permute.xlu0 %978
  %v980 = vlaneseq
  %v981 = vshrl.u32 %v980, 7
  %v982 = vadd.s32 %v981, 8
  %983 = vset.pattern.permute.xlu0 %v982
  %984 = vperm.xlu0 %983, %v973
  %v985 = vpop.permute.xlu0 %984
  %v986 = vperm.slane %v17, 2
  %v987 = vlaneseq
  %v988 = vshrl.u32 %v987, 7
  %990 = vset.pattern.permute.xlu0 %v988
  %991 = vperm.xlu0 %990, %v986
  %v992 = vpop.permute.xlu0 %991
  %v993 = vlaneseq
  %v994 = vshrl.u32 %v993, 7
  %v995 = vadd.s32 %v994, 8
  %996 = vset.pattern.permute.xlu0 %v995
  %997 = vperm.xlu0 %996, %v986
  %v998 = vpop.permute.xlu0 %997
  %v999 = vperm.slane %v17, 3
  %v1000 = vlaneseq
  %v1001 = vshrl.u32 %v1000, 7
  %1003 = vset.pattern.permute.xlu0 %v1001
  %1004 = vperm.xlu0 %1003, %v999
  %v1005 = vpop.permute.xlu0 %1004
  %v1006 = vlaneseq
  %v1007 = vshrl.u32 %v1006, 7
  %v1008 = vadd.s32 %v1007, 8
  %1009 = vset.pattern.permute.xlu0 %v1008
  %1010 = vperm.xlu0 %1009, %v999
  %v1011 = vpop.permute.xlu0 %1010
  %v1012 = vperm.slane %v17, 4
  %v1013 = vlaneseq
  %v1014 = vshrl.u32 %v1013, 7
  %1016 = vset.pattern.permute.xlu0 %v1014
  %1017 = vperm.xlu0 %1016, %v1012
  %v1018 = vpop.permute.xlu0 %1017
  %v1019 = vlaneseq
  %v1020 = vshrl.u32 %v1019, 7
  %v1021 = vadd.s32 %v1020, 8
  %1022 = vset.pattern.permute.xlu0 %v1021
  %1023 = vperm.xlu0 %1022, %v1012
  %v1024 = vpop.permute.xlu0 %1023
  %v1025 = vperm.slane %v17, 5
  %v1026 = vlaneseq
  %v1027 = vshrl.u32 %v1026, 7
  %1029 = vset.pattern.permute.xlu0 %v1027
  %1030 = vperm.xlu0 %1029, %v1025
  %v1031 = vpop.permute.xlu0 %1030
  %v1032 = vlaneseq
  %v1033 = vshrl.u32 %v1032, 7
  %v1034 = vadd.s32 %v1033, 8
  %1035 = vset.pattern.permute.xlu0 %v1034
  %1036 = vperm.xlu0 %1035, %v1025
  %v1037 = vpop.permute.xlu0 %1036
  %v1038 = vperm.slane %v17, 6
  %v1039 = vlaneseq
  %v1040 = vshrl.u32 %v1039, 7
  %1042 = vset.pattern.permute.xlu0 %v1040
  %1043 = vperm.xlu0 %1042, %v1038
  %v1044 = vpop.permute.xlu0 %1043
  %v1045 = vlaneseq
  %v1046 = vshrl.u32 %v1045, 7
  %v1047 = vadd.s32 %v1046, 8
  %1048 = vset.pattern.permute.xlu0 %v1047
  %1049 = vperm.xlu0 %1048, %v1038
  %v1050 = vpop.permute.xlu0 %1049
  %v1051 = vperm.slane %v17, 7
  %v1052 = vlaneseq
  %v1053 = vshrl.u32 %v1052, 7
  %1055 = vset.pattern.permute.xlu0 %v1053
  %1056 = vperm.xlu0 %1055, %v1051
  %v1057 = vpop.permute.xlu0 %1056
  %v1058 = vlaneseq
  %v1059 = vshrl.u32 %v1058, 7
  %v1060 = vadd.s32 %v1059, 8
  %1061 = vset.pattern.permute.xlu0 %v1060
  %1062 = vperm.xlu0 %1061, %v1051
  %v1063 = vpop.permute.xlu0 %1062
  %v1064 = vperm.slane %v18, 0
  %v1065 = vlaneseq
  %v1066 = vshrl.u32 %v1065, 7
  %1068 = vset.pattern.permute.xlu0 %v1066
  %1069 = vperm.xlu0 %1068, %v1064
  %v1070 = vpop.permute.xlu0 %1069
  %v1071 = vlaneseq
  %v1072 = vshrl.u32 %v1071, 7
  %v1073 = vadd.s32 %v1072, 8
  %1074 = vset.pattern.permute.xlu0 %v1073
  %1075 = vperm.xlu0 %1074, %v1064
  %v1076 = vpop.permute.xlu0 %1075
  %v1077 = vperm.slane %v18, 1
  %v1078 = vlaneseq
  %v1079 = vshrl.u32 %v1078, 7
  %1081 = vset.pattern.permute.xlu0 %v1079
  %1082 = vperm.xlu0 %1081, %v1077
  %v1083 = vpop.permute.xlu0 %1082
  %v1084 = vlaneseq
  %v1085 = vshrl.u32 %v1084, 7
  %v1086 = vadd.s32 %v1085, 8
  %1087 = vset.pattern.permute.xlu0 %v1086
  %1088 = vperm.xlu0 %1087, %v1077
  %v1089 = vpop.permute.xlu0 %1088
  %v1090 = vperm.slane %v18, 2
  %v1091 = vlaneseq
  %v1092 = vshrl.u32 %v1091, 7
  %1094 = vset.pattern.permute.xlu0 %v1092
  %1095 = vperm.xlu0 %1094, %v1090
  %v1096 = vpop.permute.xlu0 %1095
  %v1097 = vlaneseq
  %v1098 = vshrl.u32 %v1097, 7
  %v1099 = vadd.s32 %v1098, 8
  %1100 = vset.pattern.permute.xlu0 %v1099
  %1101 = vperm.xlu0 %1100, %v1090
  %v1102 = vpop.permute.xlu0 %1101
  %v1103 = vperm.slane %v18, 3
  %v1104 = vlaneseq
  %v1105 = vshrl.u32 %v1104, 7
  %1107 = vset.pattern.permute.xlu0 %v1105
  %1108 = vperm.xlu0 %1107, %v1103
  %v1109 = vpop.permute.xlu0 %1108
  %v1110 = vlaneseq
  %v1111 = vshrl.u32 %v1110, 7
  %v1112 = vadd.s32 %v1111, 8
  %1113 = vset.pattern.permute.xlu0 %v1112
  %1114 = vperm.xlu0 %1113, %v1103
  %v1115 = vpop.permute.xlu0 %1114
  %v1116 = vperm.slane %v18, 4
  %v1117 = vlaneseq
  %v1118 = vshrl.u32 %v1117, 7
  %1120 = vset.pattern.permute.xlu0 %v1118
  %1121 = vperm.xlu0 %1120, %v1116
  %v1122 = vpop.permute.xlu0 %1121
  %v1123 = vlaneseq
  %v1124 = vshrl.u32 %v1123, 7
  %v1125 = vadd.s32 %v1124, 8
  %1126 = vset.pattern.permute.xlu0 %v1125
  %1127 = vperm.xlu0 %1126, %v1116
  %v1128 = vpop.permute.xlu0 %1127
  %v1129 = vperm.slane %v18, 5
  %v1130 = vlaneseq
  %v1131 = vshrl.u32 %v1130, 7
  %1133 = vset.pattern.permute.xlu0 %v1131
  %1134 = vperm.xlu0 %1133, %v1129
  %v1135 = vpop.permute.xlu0 %1134
  %v1136 = vlaneseq
  %v1137 = vshrl.u32 %v1136, 7
  %v1138 = vadd.s32 %v1137, 8
  %1139 = vset.pattern.permute.xlu0 %v1138
  %1140 = vperm.xlu0 %1139, %v1129
  %v1141 = vpop.permute.xlu0 %1140
  %v1142 = vperm.slane %v18, 6
  %v1143 = vlaneseq
  %v1144 = vshrl.u32 %v1143, 7
  %1146 = vset.pattern.permute.xlu0 %v1144
  %1147 = vperm.xlu0 %1146, %v1142
  %v1148 = vpop.permute.xlu0 %1147
  %v1149 = vlaneseq
  %v1150 = vshrl.u32 %v1149, 7
  %v1151 = vadd.s32 %v1150, 8
  %1152 = vset.pattern.permute.xlu0 %v1151
  %1153 = vperm.xlu0 %1152, %v1142
  %v1154 = vpop.permute.xlu0 %1153
  %v1155 = vperm.slane %v18, 7
  %v1156 = vlaneseq
  %v1157 = vshrl.u32 %v1156, 7
  %1159 = vset.pattern.permute.xlu0 %v1157
  %1160 = vperm.xlu0 %1159, %v1155
  %v1161 = vpop.permute.xlu0 %1160
  %v1162 = vlaneseq
  %v1163 = vshrl.u32 %v1162, 7
  %v1164 = vadd.s32 %v1163, 8
  %1165 = vset.pattern.permute.xlu0 %v1164
  %1166 = vperm.xlu0 %1165, %v1155
  %v1167 = vpop.permute.xlu0 %1166
  %v1168 = vperm.slane %v19, 0
  %v1169 = vlaneseq
  %v1170 = vshrl.u32 %v1169, 7
  %1172 = vset.pattern.permute.xlu0 %v1170
  %1173 = vperm.xlu0 %1172, %v1168
  %v1174 = vpop.permute.xlu0 %1173
  %v1175 = vlaneseq
  %v1176 = vshrl.u32 %v1175, 7
  %v1177 = vadd.s32 %v1176, 8
  %1178 = vset.pattern.permute.xlu0 %v1177
  %1179 = vperm.xlu0 %1178, %v1168
  %v1180 = vpop.permute.xlu0 %1179
  %v1181 = vperm.slane %v19, 1
  %v1182 = vlaneseq
  %v1183 = vshrl.u32 %v1182, 7
  %1185 = vset.pattern.permute.xlu0 %v1183
  %1186 = vperm.xlu0 %1185, %v1181
  %v1187 = vpop.permute.xlu0 %1186
  %v1188 = vlaneseq
  %v1189 = vshrl.u32 %v1188, 7
  %v1190 = vadd.s32 %v1189, 8
  %1191 = vset.pattern.permute.xlu0 %v1190
  %1192 = vperm.xlu0 %1191, %v1181
  %v1193 = vpop.permute.xlu0 %1192
  %v1194 = vperm.slane %v19, 2
  %v1195 = vlaneseq
  %v1196 = vshrl.u32 %v1195, 7
  %1198 = vset.pattern.permute.xlu0 %v1196
  %1199 = vperm.xlu0 %1198, %v1194
  %v1200 = vpop.permute.xlu0 %1199
  %v1201 = vlaneseq
  %v1202 = vshrl.u32 %v1201, 7
  %v1203 = vadd.s32 %v1202, 8
  %1204 = vset.pattern.permute.xlu0 %v1203
  %1205 = vperm.xlu0 %1204, %v1194
  %v1206 = vpop.permute.xlu0 %1205
  %v1207 = vperm.slane %v19, 3
  %v1208 = vlaneseq
  %v1209 = vshrl.u32 %v1208, 7
  %1211 = vset.pattern.permute.xlu0 %v1209
  %1212 = vperm.xlu0 %1211, %v1207
  %v1213 = vpop.permute.xlu0 %1212
  %v1214 = vlaneseq
  %v1215 = vshrl.u32 %v1214, 7
  %v1216 = vadd.s32 %v1215, 8
  %1217 = vset.pattern.permute.xlu0 %v1216
  %1218 = vperm.xlu0 %1217, %v1207
  %v1219 = vpop.permute.xlu0 %1218
  %v1220 = vperm.slane %v19, 4
  %v1221 = vlaneseq
  %v1222 = vshrl.u32 %v1221, 7
  %1224 = vset.pattern.permute.xlu0 %v1222
  %1225 = vperm.xlu0 %1224, %v1220
  %v1226 = vpop.permute.xlu0 %1225
  %v1227 = vlaneseq
  %v1228 = vshrl.u32 %v1227, 7
  %v1229 = vadd.s32 %v1228, 8
  %1230 = vset.pattern.permute.xlu0 %v1229
  %1231 = vperm.xlu0 %1230, %v1220
  %v1232 = vpop.permute.xlu0 %1231
  %v1233 = vperm.slane %v19, 5
  %v1234 = vlaneseq
  %v1235 = vshrl.u32 %v1234, 7
  %1237 = vset.pattern.permute.xlu0 %v1235
  %1238 = vperm.xlu0 %1237, %v1233
  %v1239 = vpop.permute.xlu0 %1238
  %v1240 = vlaneseq
  %v1241 = vshrl.u32 %v1240, 7
  %v1242 = vadd.s32 %v1241, 8
  %1243 = vset.pattern.permute.xlu0 %v1242
  %1244 = vperm.xlu0 %1243, %v1233
  %v1245 = vpop.permute.xlu0 %1244
  %v1246 = vperm.slane %v19, 6
  %v1247 = vlaneseq
  %v1248 = vshrl.u32 %v1247, 7
  %1250 = vset.pattern.permute.xlu0 %v1248
  %1251 = vperm.xlu0 %1250, %v1246
  %v1252 = vpop.permute.xlu0 %1251
  %v1253 = vlaneseq
  %v1254 = vshrl.u32 %v1253, 7
  %v1255 = vadd.s32 %v1254, 8
  %1256 = vset.pattern.permute.xlu0 %v1255
  %1257 = vperm.xlu0 %1256, %v1246
  %v1258 = vpop.permute.xlu0 %1257
  %v1259 = vperm.slane %v19, 7
  %v1260 = vlaneseq
  %v1261 = vshrl.u32 %v1260, 7
  %1263 = vset.pattern.permute.xlu0 %v1261
  %1264 = vperm.xlu0 %1263, %v1259
  %v1265 = vpop.permute.xlu0 %1264
  %v1266 = vlaneseq
  %v1267 = vshrl.u32 %v1266, 7
  %v1268 = vadd.s32 %v1267, 8
  %1269 = vset.pattern.permute.xlu0 %v1268
  %1270 = vperm.xlu0 %1269, %v1259
  %v1271 = vpop.permute.xlu0 %1270
  %v1272 = vperm.slane %v20, 0
  %v1273 = vlaneseq
  %v1274 = vshrl.u32 %v1273, 7
  %1276 = vset.pattern.permute.xlu0 %v1274
  %1277 = vperm.xlu0 %1276, %v1272
  %v1278 = vpop.permute.xlu0 %1277
  %v1279 = vlaneseq
  %v1280 = vshrl.u32 %v1279, 7
  %v1281 = vadd.s32 %v1280, 8
  %1282 = vset.pattern.permute.xlu0 %v1281
  %1283 = vperm.xlu0 %1282, %v1272
  %v1284 = vpop.permute.xlu0 %1283
  %v1285 = vperm.slane %v20, 1
  %v1286 = vlaneseq
  %v1287 = vshrl.u32 %v1286, 7
  %1289 = vset.pattern.permute.xlu0 %v1287
  %1290 = vperm.xlu0 %1289, %v1285
  %v1291 = vpop.permute.xlu0 %1290
  %v1292 = vlaneseq
  %v1293 = vshrl.u32 %v1292, 7
  %v1294 = vadd.s32 %v1293, 8
  %1295 = vset.pattern.permute.xlu0 %v1294
  %1296 = vperm.xlu0 %1295, %v1285
  %v1297 = vpop.permute.xlu0 %1296
  %v1298 = vperm.slane %v20, 2
  %v1299 = vlaneseq
  %v1300 = vshrl.u32 %v1299, 7
  %1302 = vset.pattern.permute.xlu0 %v1300
  %1303 = vperm.xlu0 %1302, %v1298
  %v1304 = vpop.permute.xlu0 %1303
  %v1305 = vlaneseq
  %v1306 = vshrl.u32 %v1305, 7
  %v1307 = vadd.s32 %v1306, 8
  %1308 = vset.pattern.permute.xlu0 %v1307
  %1309 = vperm.xlu0 %1308, %v1298
  %v1310 = vpop.permute.xlu0 %1309
  %v1311 = vperm.slane %v20, 3
  %v1312 = vlaneseq
  %v1313 = vshrl.u32 %v1312, 7
  %1315 = vset.pattern.permute.xlu0 %v1313
  %1316 = vperm.xlu0 %1315, %v1311
  %v1317 = vpop.permute.xlu0 %1316
  %v1318 = vlaneseq
  %v1319 = vshrl.u32 %v1318, 7
  %v1320 = vadd.s32 %v1319, 8
  %1321 = vset.pattern.permute.xlu0 %v1320
  %1322 = vperm.xlu0 %1321, %v1311
  %v1323 = vpop.permute.xlu0 %1322
  %v1324 = vperm.slane %v20, 4
  %v1325 = vlaneseq
  %v1326 = vshrl.u32 %v1325, 7
  %1328 = vset.pattern.permute.xlu0 %v1326
  %1329 = vperm.xlu0 %1328, %v1324
  %v1330 = vpop.permute.xlu0 %1329
  %v1331 = vlaneseq
  %v1332 = vshrl.u32 %v1331, 7
  %v1333 = vadd.s32 %v1332, 8
  %1334 = vset.pattern.permute.xlu0 %v1333
  %1335 = vperm.xlu0 %1334, %v1324
  %v1336 = vpop.permute.xlu0 %1335
  %v1337 = vperm.slane %v20, 5
  %v1338 = vlaneseq
  %v1339 = vshrl.u32 %v1338, 7
  %1341 = vset.pattern.permute.xlu0 %v1339
  %1342 = vperm.xlu0 %1341, %v1337
  %v1343 = vpop.permute.xlu0 %1342
  %v1344 = vlaneseq
  %v1345 = vshrl.u32 %v1344, 7
  %v1346 = vadd.s32 %v1345, 8
  %1347 = vset.pattern.permute.xlu0 %v1346
  %1348 = vperm.xlu0 %1347, %v1337
  %v1349 = vpop.permute.xlu0 %1348
  %v1350 = vperm.slane %v20, 6
  %v1351 = vlaneseq
  %v1352 = vshrl.u32 %v1351, 7
  %1354 = vset.pattern.permute.xlu0 %v1352
  %1355 = vperm.xlu0 %1354, %v1350
  %v1356 = vpop.permute.xlu0 %1355
  %v1357 = vlaneseq
  %v1358 = vshrl.u32 %v1357, 7
  %v1359 = vadd.s32 %v1358, 8
  %1360 = vset.pattern.permute.xlu0 %v1359
  %1361 = vperm.xlu0 %1360, %v1350
  %v1362 = vpop.permute.xlu0 %1361
  %v1363 = vperm.slane %v20, 7
  %v1364 = vlaneseq
  %v1365 = vshrl.u32 %v1364, 7
  %1367 = vset.pattern.permute.xlu0 %v1365
  %1368 = vperm.xlu0 %1367, %v1363
  %v1369 = vpop.permute.xlu0 %1368
  %v1370 = vlaneseq
  %v1371 = vshrl.u32 %v1370, 7
  %v1372 = vadd.s32 %v1371, 8
  %1373 = vset.pattern.permute.xlu0 %v1372
  %1374 = vperm.xlu0 %1373, %v1363
  %v1375 = vpop.permute.xlu0 %1374
  %v1376 = vperm.slane %v21, 0
  %v1377 = vlaneseq
  %v1378 = vshrl.u32 %v1377, 7
  %1380 = vset.pattern.permute.xlu0 %v1378
  %1381 = vperm.xlu0 %1380, %v1376
  %v1382 = vpop.permute.xlu0 %1381
  %v1383 = vlaneseq
  %v1384 = vshrl.u32 %v1383, 7
  %v1385 = vadd.s32 %v1384, 8
  %1386 = vset.pattern.permute.xlu0 %v1385
  %1387 = vperm.xlu0 %1386, %v1376
  %v1388 = vpop.permute.xlu0 %1387
  %v1389 = vperm.slane %v21, 1
  %v1390 = vlaneseq
  %v1391 = vshrl.u32 %v1390, 7
  %1393 = vset.pattern.permute.xlu0 %v1391
  %1394 = vperm.xlu0 %1393, %v1389
  %v1395 = vpop.permute.xlu0 %1394
  %v1396 = vlaneseq
  %v1397 = vshrl.u32 %v1396, 7
  %v1398 = vadd.s32 %v1397, 8
  %1399 = vset.pattern.permute.xlu0 %v1398
  %1400 = vperm.xlu0 %1399, %v1389
  %v1401 = vpop.permute.xlu0 %1400
  %v1402 = vperm.slane %v21, 2
  %v1403 = vlaneseq
  %v1404 = vshrl.u32 %v1403, 7
  %1406 = vset.pattern.permute.xlu0 %v1404
  %1407 = vperm.xlu0 %1406, %v1402
  %v1408 = vpop.permute.xlu0 %1407
  %v1409 = vlaneseq
  %v1410 = vshrl.u32 %v1409, 7
  %v1411 = vadd.s32 %v1410, 8
  %1412 = vset.pattern.permute.xlu0 %v1411
  %1413 = vperm.xlu0 %1412, %v1402
  %v1414 = vpop.permute.xlu0 %1413
  %v1415 = vperm.slane %v21, 3
  %v1416 = vlaneseq
  %v1417 = vshrl.u32 %v1416, 7
  %1419 = vset.pattern.permute.xlu0 %v1417
  %1420 = vperm.xlu0 %1419, %v1415
  %v1421 = vpop.permute.xlu0 %1420
  %v1422 = vlaneseq
  %v1423 = vshrl.u32 %v1422, 7
  %v1424 = vadd.s32 %v1423, 8
  %1425 = vset.pattern.permute.xlu0 %v1424
  %1426 = vperm.xlu0 %1425, %v1415
  %v1427 = vpop.permute.xlu0 %1426
  %v1428 = vperm.slane %v21, 4
  %v1429 = vlaneseq
  %v1430 = vshrl.u32 %v1429, 7
  %1432 = vset.pattern.permute.xlu0 %v1430
  %1433 = vperm.xlu0 %1432, %v1428
  %v1434 = vpop.permute.xlu0 %1433
  %v1435 = vlaneseq
  %v1436 = vshrl.u32 %v1435, 7
  %v1437 = vadd.s32 %v1436, 8
  %1438 = vset.pattern.permute.xlu0 %v1437
  %1439 = vperm.xlu0 %1438, %v1428
  %v1440 = vpop.permute.xlu0 %1439
  %v1441 = vperm.slane %v21, 5
  %v1442 = vlaneseq
  %v1443 = vshrl.u32 %v1442, 7
  %1445 = vset.pattern.permute.xlu0 %v1443
  %1446 = vperm.xlu0 %1445, %v1441
  %v1447 = vpop.permute.xlu0 %1446
  %v1448 = vlaneseq
  %v1449 = vshrl.u32 %v1448, 7
  %v1450 = vadd.s32 %v1449, 8
  %1451 = vset.pattern.permute.xlu0 %v1450
  %1452 = vperm.xlu0 %1451, %v1441
  %v1453 = vpop.permute.xlu0 %1452
  %v1454 = vperm.slane %v21, 6
  %v1455 = vlaneseq
  %v1456 = vshrl.u32 %v1455, 7
  %1458 = vset.pattern.permute.xlu0 %v1456
  %1459 = vperm.xlu0 %1458, %v1454
  %v1460 = vpop.permute.xlu0 %1459
  %v1461 = vlaneseq
  %v1462 = vshrl.u32 %v1461, 7
  %v1463 = vadd.s32 %v1462, 8
  %1464 = vset.pattern.permute.xlu0 %v1463
  %1465 = vperm.xlu0 %1464, %v1454
  %v1466 = vpop.permute.xlu0 %1465
  %v1467 = vperm.slane %v21, 7
  %v1468 = vlaneseq
  %v1469 = vshrl.u32 %v1468, 7
  %1471 = vset.pattern.permute.xlu0 %v1469
  %1472 = vperm.xlu0 %1471, %v1467
  %v1473 = vpop.permute.xlu0 %1472
  %v1474 = vlaneseq
  %v1475 = vshrl.u32 %v1474, 7
  %v1476 = vadd.s32 %v1475, 8
  %1477 = vset.pattern.permute.xlu0 %v1476
  %1478 = vperm.xlu0 %1477, %v1467
  %v1479 = vpop.permute.xlu0 %1478
  %v1480 = vperm.slane %v22, 0
  %v1481 = vlaneseq
  %v1482 = vshrl.u32 %v1481, 7
  %1484 = vset.pattern.permute.xlu0 %v1482
  %1485 = vperm.xlu0 %1484, %v1480
  %v1486 = vpop.permute.xlu0 %1485
  %v1487 = vlaneseq
  %v1488 = vshrl.u32 %v1487, 7
  %v1489 = vadd.s32 %v1488, 8
  %1490 = vset.pattern.permute.xlu0 %v1489
  %1491 = vperm.xlu0 %1490, %v1480
  %v1492 = vpop.permute.xlu0 %1491
  %v1493 = vperm.slane %v22, 1
  %v1494 = vlaneseq
  %v1495 = vshrl.u32 %v1494, 7
  %1497 = vset.pattern.permute.xlu0 %v1495
  %1498 = vperm.xlu0 %1497, %v1493
  %v1499 = vpop.permute.xlu0 %1498
  %v1500 = vlaneseq
  %v1501 = vshrl.u32 %v1500, 7
  %v1502 = vadd.s32 %v1501, 8
  %1503 = vset.pattern.permute.xlu0 %v1502
  %1504 = vperm.xlu0 %1503, %v1493
  %v1505 = vpop.permute.xlu0 %1504
  %v1506 = vperm.slane %v22, 2
  %v1507 = vlaneseq
  %v1508 = vshrl.u32 %v1507, 7
  %1510 = vset.pattern.permute.xlu0 %v1508
  %1511 = vperm.xlu0 %1510, %v1506
  %v1512 = vpop.permute.xlu0 %1511
  %v1513 = vlaneseq
  %v1514 = vshrl.u32 %v1513, 7
  %v1515 = vadd.s32 %v1514, 8
  %1516 = vset.pattern.permute.xlu0 %v1515
  %1517 = vperm.xlu0 %1516, %v1506
  %v1518 = vpop.permute.xlu0 %1517
  %v1519 = vperm.slane %v22, 3
  %v1520 = vlaneseq
  %v1521 = vshrl.u32 %v1520, 7
  %1523 = vset.pattern.permute.xlu0 %v1521
  %1524 = vperm.xlu0 %1523, %v1519
  %v1525 = vpop.permute.xlu0 %1524
  %v1526 = vlaneseq
  %v1527 = vshrl.u32 %v1526, 7
  %v1528 = vadd.s32 %v1527, 8
  %1529 = vset.pattern.permute.xlu0 %v1528
  %1530 = vperm.xlu0 %1529, %v1519
  %v1531 = vpop.permute.xlu0 %1530
  %v1532 = vperm.slane %v22, 4
  %v1533 = vlaneseq
  %v1534 = vshrl.u32 %v1533, 7
  %1536 = vset.pattern.permute.xlu0 %v1534
  %1537 = vperm.xlu0 %1536, %v1532
  %v1538 = vpop.permute.xlu0 %1537
  %v1539 = vlaneseq
  %v1540 = vshrl.u32 %v1539, 7
  %v1541 = vadd.s32 %v1540, 8
  %1542 = vset.pattern.permute.xlu0 %v1541
  %1543 = vperm.xlu0 %1542, %v1532
  %v1544 = vpop.permute.xlu0 %1543
  %v1545 = vperm.slane %v22, 5
  %v1546 = vlaneseq
  %v1547 = vshrl.u32 %v1546, 7
  %1549 = vset.pattern.permute.xlu0 %v1547
  %1550 = vperm.xlu0 %1549, %v1545
  %v1551 = vpop.permute.xlu0 %1550
  %v1552 = vlaneseq
  %v1553 = vshrl.u32 %v1552, 7
  %v1554 = vadd.s32 %v1553, 8
  %1555 = vset.pattern.permute.xlu0 %v1554
  %1556 = vperm.xlu0 %1555, %v1545
  %v1557 = vpop.permute.xlu0 %1556
  %v1558 = vperm.slane %v22, 6
  %v1559 = vlaneseq
  %v1560 = vshrl.u32 %v1559, 7
  %1562 = vset.pattern.permute.xlu0 %v1560
  %1563 = vperm.xlu0 %1562, %v1558
  %v1564 = vpop.permute.xlu0 %1563
  %v1565 = vlaneseq
  %v1566 = vshrl.u32 %v1565, 7
  %v1567 = vadd.s32 %v1566, 8
  %1568 = vset.pattern.permute.xlu0 %v1567
  %1569 = vperm.xlu0 %1568, %v1558
  %v1570 = vpop.permute.xlu0 %1569
  %v1571 = vperm.slane %v22, 7
  %v1572 = vlaneseq
  %v1573 = vshrl.u32 %v1572, 7
  %1575 = vset.pattern.permute.xlu0 %v1573
  %1576 = vperm.xlu0 %1575, %v1571
  %v1577 = vpop.permute.xlu0 %1576
  %v1578 = vlaneseq
  %v1579 = vshrl.u32 %v1578, 7
  %v1580 = vadd.s32 %v1579, 8
  %1581 = vset.pattern.permute.xlu0 %v1580
  %1582 = vperm.xlu0 %1581, %v1571
  %v1583 = vpop.permute.xlu0 %1582
  %v1584 = vperm.slane %v23, 0
  %v1585 = vlaneseq
  %v1586 = vshrl.u32 %v1585, 7
  %1588 = vset.pattern.permute.xlu0 %v1586
  %1589 = vperm.xlu0 %1588, %v1584
  %v1590 = vpop.permute.xlu0 %1589
  %v1591 = vlaneseq
  %v1592 = vshrl.u32 %v1591, 7
  %v1593 = vadd.s32 %v1592, 8
  %1594 = vset.pattern.permute.xlu0 %v1593
  %1595 = vperm.xlu0 %1594, %v1584
  %v1596 = vpop.permute.xlu0 %1595
  %v1597 = vperm.slane %v23, 1
  %v1598 = vlaneseq
  %v1599 = vshrl.u32 %v1598, 7
  %1601 = vset.pattern.permute.xlu0 %v1599
  %1602 = vperm.xlu0 %1601, %v1597
  %v1603 = vpop.permute.xlu0 %1602
  %v1604 = vlaneseq
  %v1605 = vshrl.u32 %v1604, 7
  %v1606 = vadd.s32 %v1605, 8
  %1607 = vset.pattern.permute.xlu0 %v1606
  %1608 = vperm.xlu0 %1607, %v1597
  %v1609 = vpop.permute.xlu0 %1608
  %v1610 = vperm.slane %v23, 2
  %v1611 = vlaneseq
  %v1612 = vshrl.u32 %v1611, 7
  %1614 = vset.pattern.permute.xlu0 %v1612
  %1615 = vperm.xlu0 %1614, %v1610
  %v1616 = vpop.permute.xlu0 %1615
  %v1617 = vlaneseq
  %v1618 = vshrl.u32 %v1617, 7
  %v1619 = vadd.s32 %v1618, 8
  %1620 = vset.pattern.permute.xlu0 %v1619
  %1621 = vperm.xlu0 %1620, %v1610
  %v1622 = vpop.permute.xlu0 %1621
  %v1623 = vperm.slane %v23, 3
  %v1624 = vlaneseq
  %v1625 = vshrl.u32 %v1624, 7
  %1627 = vset.pattern.permute.xlu0 %v1625
  %1628 = vperm.xlu0 %1627, %v1623
  %v1629 = vpop.permute.xlu0 %1628
  %v1630 = vlaneseq
  %v1631 = vshrl.u32 %v1630, 7
  %v1632 = vadd.s32 %v1631, 8
  %1633 = vset.pattern.permute.xlu0 %v1632
  %1634 = vperm.xlu0 %1633, %v1623
  %v1635 = vpop.permute.xlu0 %1634
  %v1636 = vperm.slane %v23, 4
  %v1637 = vlaneseq
  %v1638 = vshrl.u32 %v1637, 7
  %1640 = vset.pattern.permute.xlu0 %v1638
  %1641 = vperm.xlu0 %1640, %v1636
  %v1642 = vpop.permute.xlu0 %1641
  %v1643 = vlaneseq
  %v1644 = vshrl.u32 %v1643, 7
  %v1645 = vadd.s32 %v1644, 8
  %1646 = vset.pattern.permute.xlu0 %v1645
  %1647 = vperm.xlu0 %1646, %v1636
  %v1648 = vpop.permute.xlu0 %1647
  %v1649 = vperm.slane %v23, 5
  %v1650 = vlaneseq
  %v1651 = vshrl.u32 %v1650, 7
  %1653 = vset.pattern.permute.xlu0 %v1651
  %1654 = vperm.xlu0 %1653, %v1649
  %v1655 = vpop.permute.xlu0 %1654
  %v1656 = vlaneseq
  %v1657 = vshrl.u32 %v1656, 7
  %v1658 = vadd.s32 %v1657, 8
  %1659 = vset.pattern.permute.xlu0 %v1658
  %1660 = vperm.xlu0 %1659, %v1649
  %v1661 = vpop.permute.xlu0 %1660
  %v1662 = vperm.slane %v23, 6
  %v1663 = vlaneseq
  %v1664 = vshrl.u32 %v1663, 7
  %1666 = vset.pattern.permute.xlu0 %v1664
  %1667 = vperm.xlu0 %1666, %v1662
  %v1668 = vpop.permute.xlu0 %1667
  %v1669 = vlaneseq
  %v1670 = vshrl.u32 %v1669, 7
  %v1671 = vadd.s32 %v1670, 8
  %1672 = vset.pattern.permute.xlu0 %v1671
  %1673 = vperm.xlu0 %1672, %v1662
  %v1674 = vpop.permute.xlu0 %1673
  %v1675 = vperm.slane %v23, 7
  %v1676 = vlaneseq
  %v1677 = vshrl.u32 %v1676, 7
  %1679 = vset.pattern.permute.xlu0 %v1677
  %1680 = vperm.xlu0 %1679, %v1675
  %v1681 = vpop.permute.xlu0 %1680
  %v1682 = vlaneseq
  %v1683 = vshrl.u32 %v1682, 7
  %v1684 = vadd.s32 %v1683, 8
  %1685 = vset.pattern.permute.xlu0 %v1684
  %1686 = vperm.xlu0 %1685, %v1675
  %v1687 = vpop.permute.xlu0 %1686
  %v1688 = vrot.slane %v56, 4
  %vm1689 = vcmask 1047556
  %v1690 = vsel %vm1689, %v1688, %v30
  %v1691 = vrot.slane %v30, 4
  %v1692 = vsel %vm1689, %v56, %v1691
  %v1694 = vunpack.c.l.s4 1983009808
  %v1695 = vunpack.c.0.s8 %v1694
  %v1696 = vperm.slane %v1690, %v1695
  %v1698 = vunpack.c.l.s4 1983009808
  %v1699 = vunpack.c.0.s8 %v1698
  %v1700 = vperm.slane %v1692, %v1699
  %v1701 = vrot.slane %v69, 4
  %v1702 = vsel %vm1689, %v1701, %v43
  %v1703 = vrot.slane %v43, 4
  %v1704 = vsel %vm1689, %v69, %v1703
  %v1706 = vunpack.c.l.s4 1983009808
  %v1707 = vunpack.c.0.s8 %v1706
  %v1708 = vperm.slane %v1702, %v1707
  %v1710 = vunpack.c.l.s4 1983009808
  %v1711 = vunpack.c.0.s8 %v1710
  %v1712 = vperm.slane %v1704, %v1711
  %v1713 = vrot.slane %v108, 4
  %v1714 = vsel %vm1689, %v1713, %v82
  %v1715 = vrot.slane %v82, 4
  %v1716 = vsel %vm1689, %v108, %v1715
  %v1718 = vunpack.c.l.s4 1983009808
  %v1719 = vunpack.c.0.s8 %v1718
  %v1720 = vperm.slane %v1714, %v1719
  %v1722 = vunpack.c.l.s4 1983009808
  %v1723 = vunpack.c.0.s8 %v1722
  %v1724 = vperm.slane %v1716, %v1723
  %v1725 = vrot.slane %v121, 4
  %v1726 = vsel %vm1689, %v1725, %v95
  %v1727 = vrot.slane %v95, 4
  %v1728 = vsel %vm1689, %v121, %v1727
  %v1730 = vunpack.c.l.s4 1983009808
  %v1731 = vunpack.c.0.s8 %v1730
  %v1732 = vperm.slane %v1726, %v1731
  %v1734 = vunpack.c.l.s4 1983009808
  %v1735 = vunpack.c.0.s8 %v1734
  %v1736 = vperm.slane %v1728, %v1735
  %v1737 = vrot.slane %v1708, 4
  %v1738 = vsel %vm1689, %v1737, %v1696
  %v1739 = vrot.slane %v1696, 4
  %v1740 = vsel %vm1689, %v1708, %v1739
  %v1742 = vunpack.c.l.s4 1934713408
  %v1743 = vunpack.c.0.s8 %v1742
  %v1744 = vperm.slane %v1738, %v1743
  %v1746 = vunpack.c.l.s4 1934713408
  %v1747 = vunpack.c.0.s8 %v1746
  %v1748 = vperm.slane %v1740, %v1747
  %v1749 = vrot.slane %v1712, 4
  %v1750 = vsel %vm1689, %v1749, %v1700
  %v1751 = vrot.slane %v1700, 4
  %v1752 = vsel %vm1689, %v1712, %v1751
  %v1754 = vunpack.c.l.s4 1934713408
  %v1755 = vunpack.c.0.s8 %v1754
  %v1756 = vperm.slane %v1750, %v1755
  %v1758 = vunpack.c.l.s4 1934713408
  %v1759 = vunpack.c.0.s8 %v1758
  %v1760 = vperm.slane %v1752, %v1759
  %v1761 = vrot.slane %v1732, 4
  %v1762 = vsel %vm1689, %v1761, %v1720
  %v1763 = vrot.slane %v1720, 4
  %v1764 = vsel %vm1689, %v1732, %v1763
  %v1766 = vunpack.c.l.s4 1934713408
  %v1767 = vunpack.c.0.s8 %v1766
  %v1768 = vperm.slane %v1762, %v1767
  %v1770 = vunpack.c.l.s4 1934713408
  %v1771 = vunpack.c.0.s8 %v1770
  %v1772 = vperm.slane %v1764, %v1771
  %v1773 = vrot.slane %v1736, 4
  %v1774 = vsel %vm1689, %v1773, %v1724
  %v1775 = vrot.slane %v1724, 4
  %v1776 = vsel %vm1689, %v1736, %v1775
  %v1778 = vunpack.c.l.s4 1934713408
  %v1779 = vunpack.c.0.s8 %v1778
  %v1780 = vperm.slane %v1774, %v1779
  %v1782 = vunpack.c.l.s4 1934713408
  %v1783 = vunpack.c.0.s8 %v1782
  %v1784 = vperm.slane %v1776, %v1783
  %v1785 = vrot.slane %v1768, 4
  %v1786 = vsel %vm1689, %v1785, %v1744
  %v1787 = vrot.slane %v1744, 4
  %v1788 = vsel %vm1689, %v1768, %v1787
  %v1789 = vrot.slane %v1772, 4
  %v1790 = vsel %vm1689, %v1789, %v1748
  %v1791 = vrot.slane %v1748, 4
  %v1792 = vsel %vm1689, %v1772, %v1791
  %v1793 = vrot.slane %v1780, 4
  %v1794 = vsel %vm1689, %v1793, %v1756
  %v1795 = vrot.slane %v1756, 4
  %v1796 = vsel %vm1689, %v1780, %v1795
  %v1797 = vrot.slane %v1784, 4
  %v1798 = vsel %vm1689, %v1797, %v1760
  %v1799 = vrot.slane %v1760, 4
  %v1800 = vsel %vm1689, %v1784, %v1799
  %v1801 = vrot.slane %v160, 4
  %v1802 = vsel %vm1689, %v1801, %v134
  %v1803 = vrot.slane %v134, 4
  %v1804 = vsel %vm1689, %v160, %v1803
  %v1806 = vunpack.c.l.s4 1983009808
  %v1807 = vunpack.c.0.s8 %v1806
  %v1808 = vperm.slane %v1802, %v1807
  %v1810 = vunpack.c.l.s4 1983009808
  %v1811 = vunpack.c.0.s8 %v1810
  %v1812 = vperm.slane %v1804, %v1811
  %v1813 = vrot.slane %v173, 4
  %v1814 = vsel %vm1689, %v1813, %v147
  %v1815 = vrot.slane %v147, 4
  %v1816 = vsel %vm1689, %v173, %v1815
  %v1818 = vunpack.c.l.s4 1983009808
  %v1819 = vunpack.c.0.s8 %v1818
  %v1820 = vperm.slane %v1814, %v1819
  %v1822 = vunpack.c.l.s4 1983009808
  %v1823 = vunpack.c.0.s8 %v1822
  %v1824 = vperm.slane %v1816, %v1823
  %v1825 = vrot.slane %v212, 4
  %v1826 = vsel %vm1689, %v1825, %v186
  %v1827 = vrot.slane %v186, 4
  %v1828 = vsel %vm1689, %v212, %v1827
  %v1830 = vunpack.c.l.s4 1983009808
  %v1831 = vunpack.c.0.s8 %v1830
  %v1832 = vperm.slane %v1826, %v1831
  %v1834 = vunpack.c.l.s4 1983009808
  %v1835 = vunpack.c.0.s8 %v1834
  %v1836 = vperm.slane %v1828, %v1835
  %v1837 = vrot.slane %v225, 4
  %v1838 = vsel %vm1689, %v1837, %v199
  %v1839 = vrot.slane %v199, 4
  %v1840 = vsel %vm1689, %v225, %v1839
  %v1842 = vunpack.c.l.s4 1983009808
  %v1843 = vunpack.c.0.s8 %v1842
  %v1844 = vperm.slane %v1838, %v1843
  %v1846 = vunpack.c.l.s4 1983009808
  %v1847 = vunpack.c.0.s8 %v1846
  %v1848 = vperm.slane %v1840, %v1847
  %v1849 = vrot.slane %v1820, 4
  %v1850 = vsel %vm1689, %v1849, %v1808
  %v1851 = vrot.slane %v1808, 4
  %v1852 = vsel %vm1689, %v1820, %v1851
  %v1854 = vunpack.c.l.s4 1934713408
  %v1855 = vunpack.c.0.s8 %v1854
  %v1856 = vperm.slane %v1850, %v1855
  %v1858 = vunpack.c.l.s4 1934713408
  %v1859 = vunpack.c.0.s8 %v1858
  %v1860 = vperm.slane %v1852, %v1859
  %v1861 = vrot.slane %v1824, 4
  %v1862 = vsel %vm1689, %v1861, %v1812
  %v1863 = vrot.slane %v1812, 4
  %v1864 = vsel %vm1689, %v1824, %v1863
  %v1866 = vunpack.c.l.s4 1934713408
  %v1867 = vunpack.c.0.s8 %v1866
  %v1868 = vperm.slane %v1862, %v1867
  %v1870 = vunpack.c.l.s4 1934713408
  %v1871 = vunpack.c.0.s8 %v1870
  %v1872 = vperm.slane %v1864, %v1871
  %v1873 = vrot.slane %v1844, 4
  %v1874 = vsel %vm1689, %v1873, %v1832
  %v1875 = vrot.slane %v1832, 4
  %v1876 = vsel %vm1689, %v1844, %v1875
  %v1878 = vunpack.c.l.s4 1934713408
  %v1879 = vunpack.c.0.s8 %v1878
  %v1880 = vperm.slane %v1874, %v1879
  %v1882 = vunpack.c.l.s4 1934713408
  %v1883 = vunpack.c.0.s8 %v1882
  %v1884 = vperm.slane %v1876, %v1883
  %v1885 = vrot.slane %v1848, 4
  %v1886 = vsel %vm1689, %v1885, %v1836
  %v1887 = vrot.slane %v1836, 4
  %v1888 = vsel %vm1689, %v1848, %v1887
  %v1890 = vunpack.c.l.s4 1934713408
  %v1891 = vunpack.c.0.s8 %v1890
  %v1892 = vperm.slane %v1886, %v1891
  %v1894 = vunpack.c.l.s4 1934713408
  %v1895 = vunpack.c.0.s8 %v1894
  %v1896 = vperm.slane %v1888, %v1895
  %v1897 = vrot.slane %v1880, 4
  %v1898 = vsel %vm1689, %v1897, %v1856
  %v1899 = vrot.slane %v1856, 4
  %v1900 = vsel %vm1689, %v1880, %v1899
  %v1901 = vrot.slane %v1884, 4
  %v1902 = vsel %vm1689, %v1901, %v1860
  %v1903 = vrot.slane %v1860, 4
  %v1904 = vsel %vm1689, %v1884, %v1903
  %v1905 = vrot.slane %v1892, 4
  %v1906 = vsel %vm1689, %v1905, %v1868
  %v1907 = vrot.slane %v1868, 4
  %v1908 = vsel %vm1689, %v1892, %v1907
  %v1909 = vrot.slane %v1896, 4
  %v1910 = vsel %vm1689, %v1909, %v1872
  %v1911 = vrot.slane %v1872, 4
  %v1912 = vsel %vm1689, %v1896, %v1911
  %v1913 = vrot.slane %v264, 4
  %v1914 = vsel %vm1689, %v1913, %v238
  %v1915 = vrot.slane %v238, 4
  %v1916 = vsel %vm1689, %v264, %v1915
  %v1918 = vunpack.c.l.s4 1983009808
  %v1919 = vunpack.c.0.s8 %v1918
  %v1920 = vperm.slane %v1914, %v1919
  %v1922 = vunpack.c.l.s4 1983009808
  %v1923 = vunpack.c.0.s8 %v1922
  %v1924 = vperm.slane %v1916, %v1923
  %v1925 = vrot.slane %v277, 4
  %v1926 = vsel %vm1689, %v1925, %v251
  %v1927 = vrot.slane %v251, 4
  %v1928 = vsel %vm1689, %v277, %v1927
  %v1930 = vunpack.c.l.s4 1983009808
  %v1931 = vunpack.c.0.s8 %v1930
  %v1932 = vperm.slane %v1926, %v1931
  %v1934 = vunpack.c.l.s4 1983009808
  %v1935 = vunpack.c.0.s8 %v1934
  %v1936 = vperm.slane %v1928, %v1935
  %v1937 = vrot.slane %v316, 4
  %v1938 = vsel %vm1689, %v1937, %v290
  %v1939 = vrot.slane %v290, 4
  %v1940 = vsel %vm1689, %v316, %v1939
  %v1942 = vunpack.c.l.s4 1983009808
  %v1943 = vunpack.c.0.s8 %v1942
  %v1944 = vperm.slane %v1938, %v1943
  %v1946 = vunpack.c.l.s4 1983009808
  %v1947 = vunpack.c.0.s8 %v1946
  %v1948 = vperm.slane %v1940, %v1947
  %v1949 = vrot.slane %v329, 4
  %v1950 = vsel %vm1689, %v1949, %v303
  %v1951 = vrot.slane %v303, 4
  %v1952 = vsel %vm1689, %v329, %v1951
  %v1954 = vunpack.c.l.s4 1983009808
  %v1955 = vunpack.c.0.s8 %v1954
  %v1956 = vperm.slane %v1950, %v1955
  %v1958 = vunpack.c.l.s4 1983009808
  %v1959 = vunpack.c.0.s8 %v1958
  %v1960 = vperm.slane %v1952, %v1959
  %v1961 = vrot.slane %v1932, 4
  %v1962 = vsel %vm1689, %v1961, %v1920
  %v1963 = vrot.slane %v1920, 4
  %v1964 = vsel %vm1689, %v1932, %v1963
  %v1966 = vunpack.c.l.s4 1934713408
  %v1967 = vunpack.c.0.s8 %v1966
  %v1968 = vperm.slane %v1962, %v1967
  %v1970 = vunpack.c.l.s4 1934713408
  %v1971 = vunpack.c.0.s8 %v1970
  %v1972 = vperm.slane %v1964, %v1971
  %v1973 = vrot.slane %v1936, 4
  %v1974 = vsel %vm1689, %v1973, %v1924
  %v1975 = vrot.slane %v1924, 4
  %v1976 = vsel %vm1689, %v1936, %v1975
  %v1978 = vunpack.c.l.s4 1934713408
  %v1979 = vunpack.c.0.s8 %v1978
  %v1980 = vperm.slane %v1974, %v1979
  %v1982 = vunpack.c.l.s4 1934713408
  %v1983 = vunpack.c.0.s8 %v1982
  %v1984 = vperm.slane %v1976, %v1983
  %v1985 = vrot.slane %v1956, 4
  %v1986 = vsel %vm1689, %v1985, %v1944
  %v1987 = vrot.slane %v1944, 4
  %v1988 = vsel %vm1689, %v1956, %v1987
  %v1990 = vunpack.c.l.s4 1934713408
  %v1991 = vunpack.c.0.s8 %v1990
  %v1992 = vperm.slane %v1986, %v1991
  %v1994 = vunpack.c.l.s4 1934713408
  %v1995 = vunpack.c.0.s8 %v1994
  %v1996 = vperm.slane %v1988, %v1995
  %v1997 = vrot.slane %v1960, 4
  %v1998 = vsel %vm1689, %v1997, %v1948
  %v1999 = vrot.slane %v1948, 4
  %v2000 = vsel %vm1689, %v1960, %v1999
  %v2002 = vunpack.c.l.s4 1934713408
  %v2003 = vunpack.c.0.s8 %v2002
  %v2004 = vperm.slane %v1998, %v2003
  %v2006 = vunpack.c.l.s4 1934713408
  %v2007 = vunpack.c.0.s8 %v2006
  %v2008 = vperm.slane %v2000, %v2007
  %v2009 = vrot.slane %v1992, 4
  %v2010 = vsel %vm1689, %v2009, %v1968
  %v2011 = vrot.slane %v1968, 4
  %v2012 = vsel %vm1689, %v1992, %v2011
  %v2013 = vrot.slane %v1996, 4
  %v2014 = vsel %vm1689, %v2013, %v1972
  %v2015 = vrot.slane %v1972, 4
  %v2016 = vsel %vm1689, %v1996, %v2015
  %v2017 = vrot.slane %v2004, 4
  %v2018 = vsel %vm1689, %v2017, %v1980
  %v2019 = vrot.slane %v1980, 4
  %v2020 = vsel %vm1689, %v2004, %v2019
  %v2021 = vrot.slane %v2008, 4
  %v2022 = vsel %vm1689, %v2021, %v1984
  %v2023 = vrot.slane %v1984, 4
  %v2024 = vsel %vm1689, %v2008, %v2023
  %v2025 = vrot.slane %v368, 4
  %v2026 = vsel %vm1689, %v2025, %v342
  %v2027 = vrot.slane %v342, 4
  %v2028 = vsel %vm1689, %v368, %v2027
  %v2030 = vunpack.c.l.s4 1983009808
  %v2031 = vunpack.c.0.s8 %v2030
  %v2032 = vperm.slane %v2026, %v2031
  %v2034 = vunpack.c.l.s4 1983009808
  %v2035 = vunpack.c.0.s8 %v2034
  %v2036 = vperm.slane %v2028, %v2035
  %v2037 = vrot.slane %v381, 4
  %v2038 = vsel %vm1689, %v2037, %v355
  %v2039 = vrot.slane %v355, 4
  %v2040 = vsel %vm1689, %v381, %v2039
  %v2042 = vunpack.c.l.s4 1983009808
  %v2043 = vunpack.c.0.s8 %v2042
  %v2044 = vperm.slane %v2038, %v2043
  %v2046 = vunpack.c.l.s4 1983009808
  %v2047 = vunpack.c.0.s8 %v2046
  %v2048 = vperm.slane %v2040, %v2047
  %v2049 = vrot.slane %v420, 4
  %v2050 = vsel %vm1689, %v2049, %v394
  %v2051 = vrot.slane %v394, 4
  %v2052 = vsel %vm1689, %v420, %v2051
  %v2054 = vunpack.c.l.s4 1983009808
  %v2055 = vunpack.c.0.s8 %v2054
  %v2056 = vperm.slane %v2050, %v2055
  %v2058 = vunpack.c.l.s4 1983009808
  %v2059 = vunpack.c.0.s8 %v2058
  %v2060 = vperm.slane %v2052, %v2059
  %v2061 = vrot.slane %v433, 4
  %v2062 = vsel %vm1689, %v2061, %v407
  %v2063 = vrot.slane %v407, 4
  %v2064 = vsel %vm1689, %v433, %v2063
  %v2066 = vunpack.c.l.s4 1983009808
  %v2067 = vunpack.c.0.s8 %v2066
  %v2068 = vperm.slane %v2062, %v2067
  %v2070 = vunpack.c.l.s4 1983009808
  %v2071 = vunpack.c.0.s8 %v2070
  %v2072 = vperm.slane %v2064, %v2071
  %v2073 = vrot.slane %v2044, 4
  %v2074 = vsel %vm1689, %v2073, %v2032
  %v2075 = vrot.slane %v2032, 4
  %v2076 = vsel %vm1689, %v2044, %v2075
  %v2078 = vunpack.c.l.s4 1934713408
  %v2079 = vunpack.c.0.s8 %v2078
  %v2080 = vperm.slane %v2074, %v2079
  %v2082 = vunpack.c.l.s4 1934713408
  %v2083 = vunpack.c.0.s8 %v2082
  %v2084 = vperm.slane %v2076, %v2083
  %v2085 = vrot.slane %v2048, 4
  %v2086 = vsel %vm1689, %v2085, %v2036
  %v2087 = vrot.slane %v2036, 4
  %v2088 = vsel %vm1689, %v2048, %v2087
  %v2090 = vunpack.c.l.s4 1934713408
  %v2091 = vunpack.c.0.s8 %v2090
  %v2092 = vperm.slane %v2086, %v2091
  %v2094 = vunpack.c.l.s4 1934713408
  %v2095 = vunpack.c.0.s8 %v2094
  %v2096 = vperm.slane %v2088, %v2095
  %v2097 = vrot.slane %v2068, 4
  %v2098 = vsel %vm1689, %v2097, %v2056
  %v2099 = vrot.slane %v2056, 4
  %v2100 = vsel %vm1689, %v2068, %v2099
  %v2102 = vunpack.c.l.s4 1934713408
  %v2103 = vunpack.c.0.s8 %v2102
  %v2104 = vperm.slane %v2098, %v2103
  %v2106 = vunpack.c.l.s4 1934713408
  %v2107 = vunpack.c.0.s8 %v2106
  %v2108 = vperm.slane %v2100, %v2107
  %v2109 = vrot.slane %v2072, 4
  %v2110 = vsel %vm1689, %v2109, %v2060
  %v2111 = vrot.slane %v2060, 4
  %v2112 = vsel %vm1689, %v2072, %v2111
  %v2114 = vunpack.c.l.s4 1934713408
  %v2115 = vunpack.c.0.s8 %v2114
  %v2116 = vperm.slane %v2110, %v2115
  %v2118 = vunpack.c.l.s4 1934713408
  %v2119 = vunpack.c.0.s8 %v2118
  %v2120 = vperm.slane %v2112, %v2119
  %v2121 = vrot.slane %v2104, 4
  %v2122 = vsel %vm1689, %v2121, %v2080
  %v2123 = vrot.slane %v2080, 4
  %v2124 = vsel %vm1689, %v2104, %v2123
  %v2125 = vrot.slane %v2108, 4
  %v2126 = vsel %vm1689, %v2125, %v2084
  %v2127 = vrot.slane %v2084, 4
  %v2128 = vsel %vm1689, %v2108, %v2127
  %v2129 = vrot.slane %v2116, 4
  %v2130 = vsel %vm1689, %v2129, %v2092
  %v2131 = vrot.slane %v2092, 4
  %v2132 = vsel %vm1689, %v2116, %v2131
  %v2133 = vrot.slane %v2120, 4
  %v2134 = vsel %vm1689, %v2133, %v2096
  %v2135 = vrot.slane %v2096, 4
  %v2136 = vsel %vm1689, %v2120, %v2135
  %v2137 = vrot.slane %v472, 4
  %v2138 = vsel %vm1689, %v2137, %v446
  %v2139 = vrot.slane %v446, 4
  %v2140 = vsel %vm1689, %v472, %v2139
  %v2142 = vunpack.c.l.s4 1983009808
  %v2143 = vunpack.c.0.s8 %v2142
  %v2144 = vperm.slane %v2138, %v2143
  %v2146 = vunpack.c.l.s4 1983009808
  %v2147 = vunpack.c.0.s8 %v2146
  %v2148 = vperm.slane %v2140, %v2147
  %v2149 = vrot.slane %v485, 4
  %v2150 = vsel %vm1689, %v2149, %v459
  %v2151 = vrot.slane %v459, 4
  %v2152 = vsel %vm1689, %v485, %v2151
  %v2154 = vunpack.c.l.s4 1983009808
  %v2155 = vunpack.c.0.s8 %v2154
  %v2156 = vperm.slane %v2150, %v2155
  %v2158 = vunpack.c.l.s4 1983009808
  %v2159 = vunpack.c.0.s8 %v2158
  %v2160 = vperm.slane %v2152, %v2159
  %v2161 = vrot.slane %v524, 4
  %v2162 = vsel %vm1689, %v2161, %v498
  %v2163 = vrot.slane %v498, 4
  %v2164 = vsel %vm1689, %v524, %v2163
  %v2166 = vunpack.c.l.s4 1983009808
  %v2167 = vunpack.c.0.s8 %v2166
  %v2168 = vperm.slane %v2162, %v2167
  %v2170 = vunpack.c.l.s4 1983009808
  %v2171 = vunpack.c.0.s8 %v2170
  %v2172 = vperm.slane %v2164, %v2171
  %v2173 = vrot.slane %v537, 4
  %v2174 = vsel %vm1689, %v2173, %v511
  %v2175 = vrot.slane %v511, 4
  %v2176 = vsel %vm1689, %v537, %v2175
  %v2178 = vunpack.c.l.s4 1983009808
  %v2179 = vunpack.c.0.s8 %v2178
  %v2180 = vperm.slane %v2174, %v2179
  %v2182 = vunpack.c.l.s4 1983009808
  %v2183 = vunpack.c.0.s8 %v2182
  %v2184 = vperm.slane %v2176, %v2183
  %v2185 = vrot.slane %v2156, 4
  %v2186 = vsel %vm1689, %v2185, %v2144
  %v2187 = vrot.slane %v2144, 4
  %v2188 = vsel %vm1689, %v2156, %v2187
  %v2190 = vunpack.c.l.s4 1934713408
  %v2191 = vunpack.c.0.s8 %v2190
  %v2192 = vperm.slane %v2186, %v2191
  %v2194 = vunpack.c.l.s4 1934713408
  %v2195 = vunpack.c.0.s8 %v2194
  %v2196 = vperm.slane %v2188, %v2195
  %v2197 = vrot.slane %v2160, 4
  %v2198 = vsel %vm1689, %v2197, %v2148
  %v2199 = vrot.slane %v2148, 4
  %v2200 = vsel %vm1689, %v2160, %v2199
  %v2202 = vunpack.c.l.s4 1934713408
  %v2203 = vunpack.c.0.s8 %v2202
  %v2204 = vperm.slane %v2198, %v2203
  %v2206 = vunpack.c.l.s4 1934713408
  %v2207 = vunpack.c.0.s8 %v2206
  %v2208 = vperm.slane %v2200, %v2207
  %v2209 = vrot.slane %v2180, 4
  %v2210 = vsel %vm1689, %v2209, %v2168
  %v2211 = vrot.slane %v2168, 4
  %v2212 = vsel %vm1689, %v2180, %v2211
  %v2214 = vunpack.c.l.s4 1934713408
  %v2215 = vunpack.c.0.s8 %v2214
  %v2216 = vperm.slane %v2210, %v2215
  %v2218 = vunpack.c.l.s4 1934713408
  %v2219 = vunpack.c.0.s8 %v2218
  %v2220 = vperm.slane %v2212, %v2219
  %v2221 = vrot.slane %v2184, 4
  %v2222 = vsel %vm1689, %v2221, %v2172
  %v2223 = vrot.slane %v2172, 4
  %v2224 = vsel %vm1689, %v2184, %v2223
  %v2226 = vunpack.c.l.s4 1934713408
  %v2227 = vunpack.c.0.s8 %v2226
  %v2228 = vperm.slane %v2222, %v2227
  %v2230 = vunpack.c.l.s4 1934713408
  %v2231 = vunpack.c.0.s8 %v2230
  %v2232 = vperm.slane %v2224, %v2231
  %v2233 = vrot.slane %v2216, 4
  %v2234 = vsel %vm1689, %v2233, %v2192
  %v2235 = vrot.slane %v2192, 4
  %v2236 = vsel %vm1689, %v2216, %v2235
  %v2237 = vrot.slane %v2220, 4
  %v2238 = vsel %vm1689, %v2237, %v2196
  %v2239 = vrot.slane %v2196, 4
  %v2240 = vsel %vm1689, %v2220, %v2239
  %v2241 = vrot.slane %v2228, 4
  %v2242 = vsel %vm1689, %v2241, %v2204
  %v2243 = vrot.slane %v2204, 4
  %v2244 = vsel %vm1689, %v2228, %v2243
  %v2245 = vrot.slane %v2232, 4
  %v2246 = vsel %vm1689, %v2245, %v2208
  %v2247 = vrot.slane %v2208, 4
  %v2248 = vsel %vm1689, %v2232, %v2247
  %v2249 = vrot.slane %v576, 4
  %v2250 = vsel %vm1689, %v2249, %v550
  %v2251 = vrot.slane %v550, 4
  %v2252 = vsel %vm1689, %v576, %v2251
  %v2254 = vunpack.c.l.s4 1983009808
  %v2255 = vunpack.c.0.s8 %v2254
  %v2256 = vperm.slane %v2250, %v2255
  %v2258 = vunpack.c.l.s4 1983009808
  %v2259 = vunpack.c.0.s8 %v2258
  %v2260 = vperm.slane %v2252, %v2259
  %v2261 = vrot.slane %v589, 4
  %v2262 = vsel %vm1689, %v2261, %v563
  %v2263 = vrot.slane %v563, 4
  %v2264 = vsel %vm1689, %v589, %v2263
  %v2266 = vunpack.c.l.s4 1983009808
  %v2267 = vunpack.c.0.s8 %v2266
  %v2268 = vperm.slane %v2262, %v2267
  %v2270 = vunpack.c.l.s4 1983009808
  %v2271 = vunpack.c.0.s8 %v2270
  %v2272 = vperm.slane %v2264, %v2271
  %v2273 = vrot.slane %v628, 4
  %v2274 = vsel %vm1689, %v2273, %v602
  %v2275 = vrot.slane %v602, 4
  %v2276 = vsel %vm1689, %v628, %v2275
  %v2278 = vunpack.c.l.s4 1983009808
  %v2279 = vunpack.c.0.s8 %v2278
  %v2280 = vperm.slane %v2274, %v2279
  %v2282 = vunpack.c.l.s4 1983009808
  %v2283 = vunpack.c.0.s8 %v2282
  %v2284 = vperm.slane %v2276, %v2283
  %v2285 = vrot.slane %v641, 4
  %v2286 = vsel %vm1689, %v2285, %v615
  %v2287 = vrot.slane %v615, 4
  %v2288 = vsel %vm1689, %v641, %v2287
  %v2290 = vunpack.c.l.s4 1983009808
  %v2291 = vunpack.c.0.s8 %v2290
  %v2292 = vperm.slane %v2286, %v2291
  %v2294 = vunpack.c.l.s4 1983009808
  %v2295 = vunpack.c.0.s8 %v2294
  %v2296 = vperm.slane %v2288, %v2295
  %v2297 = vrot.slane %v2268, 4
  %v2298 = vsel %vm1689, %v2297, %v2256
  %v2299 = vrot.slane %v2256, 4
  %v2300 = vsel %vm1689, %v2268, %v2299
  %v2302 = vunpack.c.l.s4 1934713408
  %v2303 = vunpack.c.0.s8 %v2302
  %v2304 = vperm.slane %v2298, %v2303
  %v2306 = vunpack.c.l.s4 1934713408
  %v2307 = vunpack.c.0.s8 %v2306
  %v2308 = vperm.slane %v2300, %v2307
  %v2309 = vrot.slane %v2272, 4
  %v2310 = vsel %vm1689, %v2309, %v2260
  %v2311 = vrot.slane %v2260, 4
  %v2312 = vsel %vm1689, %v2272, %v2311
  %v2314 = vunpack.c.l.s4 1934713408
  %v2315 = vunpack.c.0.s8 %v2314
  %v2316 = vperm.slane %v2310, %v2315
  %v2318 = vunpack.c.l.s4 1934713408
  %v2319 = vunpack.c.0.s8 %v2318
  %v2320 = vperm.slane %v2312, %v2319
  %v2321 = vrot.slane %v2292, 4
  %v2322 = vsel %vm1689, %v2321, %v2280
  %v2323 = vrot.slane %v2280, 4
  %v2324 = vsel %vm1689, %v2292, %v2323
  %v2326 = vunpack.c.l.s4 1934713408
  %v2327 = vunpack.c.0.s8 %v2326
  %v2328 = vperm.slane %v2322, %v2327
  %v2330 = vunpack.c.l.s4 1934713408
  %v2331 = vunpack.c.0.s8 %v2330
  %v2332 = vperm.slane %v2324, %v2331
  %v2333 = vrot.slane %v2296, 4
  %v2334 = vsel %vm1689, %v2333, %v2284
  %v2335 = vrot.slane %v2284, 4
  %v2336 = vsel %vm1689, %v2296, %v2335
  %v2338 = vunpack.c.l.s4 1934713408
  %v2339 = vunpack.c.0.s8 %v2338
  %v2340 = vperm.slane %v2334, %v2339
  %v2342 = vunpack.c.l.s4 1934713408
  %v2343 = vunpack.c.0.s8 %v2342
  %v2344 = vperm.slane %v2336, %v2343
  %v2345 = vrot.slane %v2328, 4
  %v2346 = vsel %vm1689, %v2345, %v2304
  %v2347 = vrot.slane %v2304, 4
  %v2348 = vsel %vm1689, %v2328, %v2347
  %v2349 = vrot.slane %v2332, 4
  %v2350 = vsel %vm1689, %v2349, %v2308
  %v2351 = vrot.slane %v2308, 4
  %v2352 = vsel %vm1689, %v2332, %v2351
  %v2353 = vrot.slane %v2340, 4
  %v2354 = vsel %vm1689, %v2353, %v2316
  %v2355 = vrot.slane %v2316, 4
  %v2356 = vsel %vm1689, %v2340, %v2355
  %v2357 = vrot.slane %v2344, 4
  %v2358 = vsel %vm1689, %v2357, %v2320
  %v2359 = vrot.slane %v2320, 4
  %v2360 = vsel %vm1689, %v2344, %v2359
  %v2361 = vrot.slane %v680, 4
  %v2362 = vsel %vm1689, %v2361, %v654
  %v2363 = vrot.slane %v654, 4
  %v2364 = vsel %vm1689, %v680, %v2363
  %v2366 = vunpack.c.l.s4 1983009808
  %v2367 = vunpack.c.0.s8 %v2366
  %v2368 = vperm.slane %v2362, %v2367
  %v2370 = vunpack.c.l.s4 1983009808
  %v2371 = vunpack.c.0.s8 %v2370
  %v2372 = vperm.slane %v2364, %v2371
  %v2373 = vrot.slane %v693, 4
  %v2374 = vsel %vm1689, %v2373, %v667
  %v2375 = vrot.slane %v667, 4
  %v2376 = vsel %vm1689, %v693, %v2375
  %v2378 = vunpack.c.l.s4 1983009808
  %v2379 = vunpack.c.0.s8 %v2378
  %v2380 = vperm.slane %v2374, %v2379
  %v2382 = vunpack.c.l.s4 1983009808
  %v2383 = vunpack.c.0.s8 %v2382
  %v2384 = vperm.slane %v2376, %v2383
  %v2385 = vrot.slane %v732, 4
  %v2386 = vsel %vm1689, %v2385, %v706
  %v2387 = vrot.slane %v706, 4
  %v2388 = vsel %vm1689, %v732, %v2387
  %v2390 = vunpack.c.l.s4 1983009808
  %v2391 = vunpack.c.0.s8 %v2390
  %v2392 = vperm.slane %v2386, %v2391
  %v2394 = vunpack.c.l.s4 1983009808
  %v2395 = vunpack.c.0.s8 %v2394
  %v2396 = vperm.slane %v2388, %v2395
  %v2397 = vrot.slane %v745, 4
  %v2398 = vsel %vm1689, %v2397, %v719
  %v2399 = vrot.slane %v719, 4
  %v2400 = vsel %vm1689, %v745, %v2399
  %v2402 = vunpack.c.l.s4 1983009808
  %v2403 = vunpack.c.0.s8 %v2402
  %v2404 = vperm.slane %v2398, %v2403
  %v2406 = vunpack.c.l.s4 1983009808
  %v2407 = vunpack.c.0.s8 %v2406
  %v2408 = vperm.slane %v2400, %v2407
  %v2409 = vrot.slane %v2380, 4
  %v2410 = vsel %vm1689, %v2409, %v2368
  %v2411 = vrot.slane %v2368, 4
  %v2412 = vsel %vm1689, %v2380, %v2411
  %v2414 = vunpack.c.l.s4 1934713408
  %v2415 = vunpack.c.0.s8 %v2414
  %v2416 = vperm.slane %v2410, %v2415
  %v2418 = vunpack.c.l.s4 1934713408
  %v2419 = vunpack.c.0.s8 %v2418
  %v2420 = vperm.slane %v2412, %v2419
  %v2421 = vrot.slane %v2384, 4
  %v2422 = vsel %vm1689, %v2421, %v2372
  %v2423 = vrot.slane %v2372, 4
  %v2424 = vsel %vm1689, %v2384, %v2423
  %v2426 = vunpack.c.l.s4 1934713408
  %v2427 = vunpack.c.0.s8 %v2426
  %v2428 = vperm.slane %v2422, %v2427
  %v2430 = vunpack.c.l.s4 1934713408
  %v2431 = vunpack.c.0.s8 %v2430
  %v2432 = vperm.slane %v2424, %v2431
  %v2433 = vrot.slane %v2404, 4
  %v2434 = vsel %vm1689, %v2433, %v2392
  %v2435 = vrot.slane %v2392, 4
  %v2436 = vsel %vm1689, %v2404, %v2435
  %v2438 = vunpack.c.l.s4 1934713408
  %v2439 = vunpack.c.0.s8 %v2438
  %v2440 = vperm.slane %v2434, %v2439
  %v2442 = vunpack.c.l.s4 1934713408
  %v2443 = vunpack.c.0.s8 %v2442
  %v2444 = vperm.slane %v2436, %v2443
  %v2445 = vrot.slane %v2408, 4
  %v2446 = vsel %vm1689, %v2445, %v2396
  %v2447 = vrot.slane %v2396, 4
  %v2448 = vsel %vm1689, %v2408, %v2447
  %v2450 = vunpack.c.l.s4 1934713408
  %v2451 = vunpack.c.0.s8 %v2450
  %v2452 = vperm.slane %v2446, %v2451
  %v2454 = vunpack.c.l.s4 1934713408
  %v2455 = vunpack.c.0.s8 %v2454
  %v2456 = vperm.slane %v2448, %v2455
  %v2457 = vrot.slane %v2440, 4
  %v2458 = vsel %vm1689, %v2457, %v2416
  %v2459 = vrot.slane %v2416, 4
  %v2460 = vsel %vm1689, %v2440, %v2459
  %v2461 = vrot.slane %v2444, 4
  %v2462 = vsel %vm1689, %v2461, %v2420
  %v2463 = vrot.slane %v2420, 4
  %v2464 = vsel %vm1689, %v2444, %v2463
  %v2465 = vrot.slane %v2452, 4
  %v2466 = vsel %vm1689, %v2465, %v2428
  %v2467 = vrot.slane %v2428, 4
  %v2468 = vsel %vm1689, %v2452, %v2467
  %v2469 = vrot.slane %v2456, 4
  %v2470 = vsel %vm1689, %v2469, %v2432
  %v2471 = vrot.slane %v2432, 4
  %v2472 = vsel %vm1689, %v2456, %v2471
  %v2473 = vrot.slane %v784, 4
  %v2474 = vsel %vm1689, %v2473, %v758
  %v2475 = vrot.slane %v758, 4
  %v2476 = vsel %vm1689, %v784, %v2475
  %v2478 = vunpack.c.l.s4 1983009808
  %v2479 = vunpack.c.0.s8 %v2478
  %v2480 = vperm.slane %v2474, %v2479
  %v2482 = vunpack.c.l.s4 1983009808
  %v2483 = vunpack.c.0.s8 %v2482
  %v2484 = vperm.slane %v2476, %v2483
  %v2485 = vrot.slane %v797, 4
  %v2486 = vsel %vm1689, %v2485, %v771
  %v2487 = vrot.slane %v771, 4
  %v2488 = vsel %vm1689, %v797, %v2487
  %v2490 = vunpack.c.l.s4 1983009808
  %v2491 = vunpack.c.0.s8 %v2490
  %v2492 = vperm.slane %v2486, %v2491
  %v2494 = vunpack.c.l.s4 1983009808
  %v2495 = vunpack.c.0.s8 %v2494
  %v2496 = vperm.slane %v2488, %v2495
  %v2497 = vrot.slane %v836, 4
  %v2498 = vsel %vm1689, %v2497, %v810
  %v2499 = vrot.slane %v810, 4
  %v2500 = vsel %vm1689, %v836, %v2499
  %v2502 = vunpack.c.l.s4 1983009808
  %v2503 = vunpack.c.0.s8 %v2502
  %v2504 = vperm.slane %v2498, %v2503
  %v2506 = vunpack.c.l.s4 1983009808
  %v2507 = vunpack.c.0.s8 %v2506
  %v2508 = vperm.slane %v2500, %v2507
  %v2509 = vrot.slane %v849, 4
  %v2510 = vsel %vm1689, %v2509, %v823
  %v2511 = vrot.slane %v823, 4
  %v2512 = vsel %vm1689, %v849, %v2511
  %v2514 = vunpack.c.l.s4 1983009808
  %v2515 = vunpack.c.0.s8 %v2514
  %v2516 = vperm.slane %v2510, %v2515
  %v2518 = vunpack.c.l.s4 1983009808
  %v2519 = vunpack.c.0.s8 %v2518
  %v2520 = vperm.slane %v2512, %v2519
  %v2521 = vrot.slane %v2492, 4
  %v2522 = vsel %vm1689, %v2521, %v2480
  %v2523 = vrot.slane %v2480, 4
  %v2524 = vsel %vm1689, %v2492, %v2523
  %v2526 = vunpack.c.l.s4 1934713408
  %v2527 = vunpack.c.0.s8 %v2526
  %v2528 = vperm.slane %v2522, %v2527
  %v2530 = vunpack.c.l.s4 1934713408
  %v2531 = vunpack.c.0.s8 %v2530
  %v2532 = vperm.slane %v2524, %v2531
  %v2533 = vrot.slane %v2496, 4
  %v2534 = vsel %vm1689, %v2533, %v2484
  %v2535 = vrot.slane %v2484, 4
  %v2536 = vsel %vm1689, %v2496, %v2535
  %v2538 = vunpack.c.l.s4 1934713408
  %v2539 = vunpack.c.0.s8 %v2538
  %v2540 = vperm.slane %v2534, %v2539
  %v2542 = vunpack.c.l.s4 1934713408
  %v2543 = vunpack.c.0.s8 %v2542
  %v2544 = vperm.slane %v2536, %v2543
  %v2545 = vrot.slane %v2516, 4
  %v2546 = vsel %vm1689, %v2545, %v2504
  %v2547 = vrot.slane %v2504, 4
  %v2548 = vsel %vm1689, %v2516, %v2547
  %v2550 = vunpack.c.l.s4 1934713408
  %v2551 = vunpack.c.0.s8 %v2550
  %v2552 = vperm.slane %v2546, %v2551
  %v2554 = vunpack.c.l.s4 1934713408
  %v2555 = vunpack.c.0.s8 %v2554
  %v2556 = vperm.slane %v2548, %v2555
  %v2557 = vrot.slane %v2520, 4
  %v2558 = vsel %vm1689, %v2557, %v2508
  %v2559 = vrot.slane %v2508, 4
  %v2560 = vsel %vm1689, %v2520, %v2559
  %v2562 = vunpack.c.l.s4 1934713408
  %v2563 = vunpack.c.0.s8 %v2562
  %v2564 = vperm.slane %v2558, %v2563
  %v2566 = vunpack.c.l.s4 1934713408
  %v2567 = vunpack.c.0.s8 %v2566
  %v2568 = vperm.slane %v2560, %v2567
  %v2569 = vrot.slane %v2552, 4
  %v2570 = vsel %vm1689, %v2569, %v2528
  %v2571 = vrot.slane %v2528, 4
  %v2572 = vsel %vm1689, %v2552, %v2571
  %v2573 = vrot.slane %v2556, 4
  %v2574 = vsel %vm1689, %v2573, %v2532
  %v2575 = vrot.slane %v2532, 4
  %v2576 = vsel %vm1689, %v2556, %v2575
  %v2577 = vrot.slane %v2564, 4
  %v2578 = vsel %vm1689, %v2577, %v2540
  %v2579 = vrot.slane %v2540, 4
  %v2580 = vsel %vm1689, %v2564, %v2579
  %v2581 = vrot.slane %v2568, 4
  %v2582 = vsel %vm1689, %v2581, %v2544
  %v2583 = vrot.slane %v2544, 4
  %v2584 = vsel %vm1689, %v2568, %v2583
  %v2585 = vrot.slane %v888, 4
  %v2586 = vsel %vm1689, %v2585, %v862
  %v2587 = vrot.slane %v862, 4
  %v2588 = vsel %vm1689, %v888, %v2587
  %v2590 = vunpack.c.l.s4 1983009808
  %v2591 = vunpack.c.0.s8 %v2590
  %v2592 = vperm.slane %v2586, %v2591
  %v2594 = vunpack.c.l.s4 1983009808
  %v2595 = vunpack.c.0.s8 %v2594
  %v2596 = vperm.slane %v2588, %v2595
  %v2597 = vrot.slane %v901, 4
  %v2598 = vsel %vm1689, %v2597, %v875
  %v2599 = vrot.slane %v875, 4
  %v2600 = vsel %vm1689, %v901, %v2599
  %v2602 = vunpack.c.l.s4 1983009808
  %v2603 = vunpack.c.0.s8 %v2602
  %v2604 = vperm.slane %v2598, %v2603
  %v2606 = vunpack.c.l.s4 1983009808
  %v2607 = vunpack.c.0.s8 %v2606
  %v2608 = vperm.slane %v2600, %v2607
  %v2609 = vrot.slane %v940, 4
  %v2610 = vsel %vm1689, %v2609, %v914
  %v2611 = vrot.slane %v914, 4
  %v2612 = vsel %vm1689, %v940, %v2611
  %v2614 = vunpack.c.l.s4 1983009808
  %v2615 = vunpack.c.0.s8 %v2614
  %v2616 = vperm.slane %v2610, %v2615
  %v2618 = vunpack.c.l.s4 1983009808
  %v2619 = vunpack.c.0.s8 %v2618
  %v2620 = vperm.slane %v2612, %v2619
  %v2621 = vrot.slane %v953, 4
  %v2622 = vsel %vm1689, %v2621, %v927
  %v2623 = vrot.slane %v927, 4
  %v2624 = vsel %vm1689, %v953, %v2623
  %v2626 = vunpack.c.l.s4 1983009808
  %v2627 = vunpack.c.0.s8 %v2626
  %v2628 = vperm.slane %v2622, %v2627
  %v2630 = vunpack.c.l.s4 1983009808
  %v2631 = vunpack.c.0.s8 %v2630
  %v2632 = vperm.slane %v2624, %v2631
  %v2633 = vrot.slane %v2604, 4
  %v2634 = vsel %vm1689, %v2633, %v2592
  %v2635 = vrot.slane %v2592, 4
  %v2636 = vsel %vm1689, %v2604, %v2635
  %v2638 = vunpack.c.l.s4 1934713408
  %v2639 = vunpack.c.0.s8 %v2638
  %v2640 = vperm.slane %v2634, %v2639
  %v2642 = vunpack.c.l.s4 1934713408
  %v2643 = vunpack.c.0.s8 %v2642
  %v2644 = vperm.slane %v2636, %v2643
  %v2645 = vrot.slane %v2608, 4
  %v2646 = vsel %vm1689, %v2645, %v2596
  %v2647 = vrot.slane %v2596, 4
  %v2648 = vsel %vm1689, %v2608, %v2647
  %v2650 = vunpack.c.l.s4 1934713408
  %v2651 = vunpack.c.0.s8 %v2650
  %v2652 = vperm.slane %v2646, %v2651
  %v2654 = vunpack.c.l.s4 1934713408
  %v2655 = vunpack.c.0.s8 %v2654
  %v2656 = vperm.slane %v2648, %v2655
  %v2657 = vrot.slane %v2628, 4
  %v2658 = vsel %vm1689, %v2657, %v2616
  %v2659 = vrot.slane %v2616, 4
  %v2660 = vsel %vm1689, %v2628, %v2659
  %v2662 = vunpack.c.l.s4 1934713408
  %v2663 = vunpack.c.0.s8 %v2662
  %v2664 = vperm.slane %v2658, %v2663
  %v2666 = vunpack.c.l.s4 1934713408
  %v2667 = vunpack.c.0.s8 %v2666
  %v2668 = vperm.slane %v2660, %v2667
  %v2669 = vrot.slane %v2632, 4
  %v2670 = vsel %vm1689, %v2669, %v2620
  %v2671 = vrot.slane %v2620, 4
  %v2672 = vsel %vm1689, %v2632, %v2671
  %v2674 = vunpack.c.l.s4 1934713408
  %v2675 = vunpack.c.0.s8 %v2674
  %v2676 = vperm.slane %v2670, %v2675
  %v2678 = vunpack.c.l.s4 1934713408
  %v2679 = vunpack.c.0.s8 %v2678
  %v2680 = vperm.slane %v2672, %v2679
  %v2681 = vrot.slane %v2664, 4
  %v2682 = vsel %vm1689, %v2681, %v2640
  %v2683 = vrot.slane %v2640, 4
  %v2684 = vsel %vm1689, %v2664, %v2683
  %v2685 = vrot.slane %v2668, 4
  %v2686 = vsel %vm1689, %v2685, %v2644
  %v2687 = vrot.slane %v2644, 4
  %v2688 = vsel %vm1689, %v2668, %v2687
  %v2689 = vrot.slane %v2676, 4
  %v2690 = vsel %vm1689, %v2689, %v2652
  %v2691 = vrot.slane %v2652, 4
  %v2692 = vsel %vm1689, %v2676, %v2691
  %v2693 = vrot.slane %v2680, 4
  %v2694 = vsel %vm1689, %v2693, %v2656
  %v2695 = vrot.slane %v2656, 4
  %v2696 = vsel %vm1689, %v2680, %v2695
  %v2697 = vrot.slane %v992, 4
  %v2698 = vsel %vm1689, %v2697, %v966
  %v2699 = vrot.slane %v966, 4
  %v2700 = vsel %vm1689, %v992, %v2699
  %v2702 = vunpack.c.l.s4 1983009808
  %v2703 = vunpack.c.0.s8 %v2702
  %v2704 = vperm.slane %v2698, %v2703
  %v2706 = vunpack.c.l.s4 1983009808
  %v2707 = vunpack.c.0.s8 %v2706
  %v2708 = vperm.slane %v2700, %v2707
  %v2709 = vrot.slane %v1005, 4
  %v2710 = vsel %vm1689, %v2709, %v979
  %v2711 = vrot.slane %v979, 4
  %v2712 = vsel %vm1689, %v1005, %v2711
  %v2714 = vunpack.c.l.s4 1983009808
  %v2715 = vunpack.c.0.s8 %v2714
  %v2716 = vperm.slane %v2710, %v2715
  %v2718 = vunpack.c.l.s4 1983009808
  %v2719 = vunpack.c.0.s8 %v2718
  %v2720 = vperm.slane %v2712, %v2719
  %v2721 = vrot.slane %v1044, 4
  %v2722 = vsel %vm1689, %v2721, %v1018
  %v2723 = vrot.slane %v1018, 4
  %v2724 = vsel %vm1689, %v1044, %v2723
  %v2726 = vunpack.c.l.s4 1983009808
  %v2727 = vunpack.c.0.s8 %v2726
  %v2728 = vperm.slane %v2722, %v2727
  %v2730 = vunpack.c.l.s4 1983009808
  %v2731 = vunpack.c.0.s8 %v2730
  %v2732 = vperm.slane %v2724, %v2731
  %v2733 = vrot.slane %v1057, 4
  %v2734 = vsel %vm1689, %v2733, %v1031
  %v2735 = vrot.slane %v1031, 4
  %v2736 = vsel %vm1689, %v1057, %v2735
  %v2738 = vunpack.c.l.s4 1983009808
  %v2739 = vunpack.c.0.s8 %v2738
  %v2740 = vperm.slane %v2734, %v2739
  %v2742 = vunpack.c.l.s4 1983009808
  %v2743 = vunpack.c.0.s8 %v2742
  %v2744 = vperm.slane %v2736, %v2743
  %v2745 = vrot.slane %v2716, 4
  %v2746 = vsel %vm1689, %v2745, %v2704
  %v2747 = vrot.slane %v2704, 4
  %v2748 = vsel %vm1689, %v2716, %v2747
  %v2750 = vunpack.c.l.s4 1934713408
  %v2751 = vunpack.c.0.s8 %v2750
  %v2752 = vperm.slane %v2746, %v2751
  %v2754 = vunpack.c.l.s4 1934713408
  %v2755 = vunpack.c.0.s8 %v2754
  %v2756 = vperm.slane %v2748, %v2755
  %v2757 = vrot.slane %v2720, 4
  %v2758 = vsel %vm1689, %v2757, %v2708
  %v2759 = vrot.slane %v2708, 4
  %v2760 = vsel %vm1689, %v2720, %v2759
  %v2762 = vunpack.c.l.s4 1934713408
  %v2763 = vunpack.c.0.s8 %v2762
  %v2764 = vperm.slane %v2758, %v2763
  %v2766 = vunpack.c.l.s4 1934713408
  %v2767 = vunpack.c.0.s8 %v2766
  %v2768 = vperm.slane %v2760, %v2767
  %v2769 = vrot.slane %v2740, 4
  %v2770 = vsel %vm1689, %v2769, %v2728
  %v2771 = vrot.slane %v2728, 4
  %v2772 = vsel %vm1689, %v2740, %v2771
  %v2774 = vunpack.c.l.s4 1934713408
  %v2775 = vunpack.c.0.s8 %v2774
  %v2776 = vperm.slane %v2770, %v2775
  %v2778 = vunpack.c.l.s4 1934713408
  %v2779 = vunpack.c.0.s8 %v2778
  %v2780 = vperm.slane %v2772, %v2779
  %v2781 = vrot.slane %v2744, 4
  %v2782 = vsel %vm1689, %v2781, %v2732
  %v2783 = vrot.slane %v2732, 4
  %v2784 = vsel %vm1689, %v2744, %v2783
  %v2786 = vunpack.c.l.s4 1934713408
  %v2787 = vunpack.c.0.s8 %v2786
  %v2788 = vperm.slane %v2782, %v2787
  %v2790 = vunpack.c.l.s4 1934713408
  %v2791 = vunpack.c.0.s8 %v2790
  %v2792 = vperm.slane %v2784, %v2791
  %v2793 = vrot.slane %v2776, 4
  %v2794 = vsel %vm1689, %v2793, %v2752
  %v2795 = vrot.slane %v2752, 4
  %v2796 = vsel %vm1689, %v2776, %v2795
  %v2797 = vrot.slane %v2780, 4
  %v2798 = vsel %vm1689, %v2797, %v2756
  %v2799 = vrot.slane %v2756, 4
  %v2800 = vsel %vm1689, %v2780, %v2799
  %v2801 = vrot.slane %v2788, 4
  %v2802 = vsel %vm1689, %v2801, %v2764
  %v2803 = vrot.slane %v2764, 4
  %v2804 = vsel %vm1689, %v2788, %v2803
  %v2805 = vrot.slane %v2792, 4
  %v2806 = vsel %vm1689, %v2805, %v2768
  %v2807 = vrot.slane %v2768, 4
  %v2808 = vsel %vm1689, %v2792, %v2807
  %v2809 = vrot.slane %v1096, 4
  %v2810 = vsel %vm1689, %v2809, %v1070
  %v2811 = vrot.slane %v1070, 4
  %v2812 = vsel %vm1689, %v1096, %v2811
  %v2814 = vunpack.c.l.s4 1983009808
  %v2815 = vunpack.c.0.s8 %v2814
  %v2816 = vperm.slane %v2810, %v2815
  %v2818 = vunpack.c.l.s4 1983009808
  %v2819 = vunpack.c.0.s8 %v2818
  %v2820 = vperm.slane %v2812, %v2819
  %v2821 = vrot.slane %v1109, 4
  %v2822 = vsel %vm1689, %v2821, %v1083
  %v2823 = vrot.slane %v1083, 4
  %v2824 = vsel %vm1689, %v1109, %v2823
  %v2826 = vunpack.c.l.s4 1983009808
  %v2827 = vunpack.c.0.s8 %v2826
  %v2828 = vperm.slane %v2822, %v2827
  %v2830 = vunpack.c.l.s4 1983009808
  %v2831 = vunpack.c.0.s8 %v2830
  %v2832 = vperm.slane %v2824, %v2831
  %v2833 = vrot.slane %v1148, 4
  %v2834 = vsel %vm1689, %v2833, %v1122
  %v2835 = vrot.slane %v1122, 4
  %v2836 = vsel %vm1689, %v1148, %v2835
  %v2838 = vunpack.c.l.s4 1983009808
  %v2839 = vunpack.c.0.s8 %v2838
  %v2840 = vperm.slane %v2834, %v2839
  %v2842 = vunpack.c.l.s4 1983009808
  %v2843 = vunpack.c.0.s8 %v2842
  %v2844 = vperm.slane %v2836, %v2843
  %v2845 = vrot.slane %v1161, 4
  %v2846 = vsel %vm1689, %v2845, %v1135
  %v2847 = vrot.slane %v1135, 4
  %v2848 = vsel %vm1689, %v1161, %v2847
  %v2850 = vunpack.c.l.s4 1983009808
  %v2851 = vunpack.c.0.s8 %v2850
  %v2852 = vperm.slane %v2846, %v2851
  %v2854 = vunpack.c.l.s4 1983009808
  %v2855 = vunpack.c.0.s8 %v2854
  %v2856 = vperm.slane %v2848, %v2855
  %v2857 = vrot.slane %v2828, 4
  %v2858 = vsel %vm1689, %v2857, %v2816
  %v2859 = vrot.slane %v2816, 4
  %v2860 = vsel %vm1689, %v2828, %v2859
  %v2862 = vunpack.c.l.s4 1934713408
  %v2863 = vunpack.c.0.s8 %v2862
  %v2864 = vperm.slane %v2858, %v2863
  %v2866 = vunpack.c.l.s4 1934713408
  %v2867 = vunpack.c.0.s8 %v2866
  %v2868 = vperm.slane %v2860, %v2867
  %v2869 = vrot.slane %v2832, 4
  %v2870 = vsel %vm1689, %v2869, %v2820
  %v2871 = vrot.slane %v2820, 4
  %v2872 = vsel %vm1689, %v2832, %v2871
  %v2874 = vunpack.c.l.s4 1934713408
  %v2875 = vunpack.c.0.s8 %v2874
  %v2876 = vperm.slane %v2870, %v2875
  %v2878 = vunpack.c.l.s4 1934713408
  %v2879 = vunpack.c.0.s8 %v2878
  %v2880 = vperm.slane %v2872, %v2879
  %v2881 = vrot.slane %v2852, 4
  %v2882 = vsel %vm1689, %v2881, %v2840
  %v2883 = vrot.slane %v2840, 4
  %v2884 = vsel %vm1689, %v2852, %v2883
  %v2886 = vunpack.c.l.s4 1934713408
  %v2887 = vunpack.c.0.s8 %v2886
  %v2888 = vperm.slane %v2882, %v2887
  %v2890 = vunpack.c.l.s4 1934713408
  %v2891 = vunpack.c.0.s8 %v2890
  %v2892 = vperm.slane %v2884, %v2891
  %v2893 = vrot.slane %v2856, 4
  %v2894 = vsel %vm1689, %v2893, %v2844
  %v2895 = vrot.slane %v2844, 4
  %v2896 = vsel %vm1689, %v2856, %v2895
  %v2898 = vunpack.c.l.s4 1934713408
  %v2899 = vunpack.c.0.s8 %v2898
  %v2900 = vperm.slane %v2894, %v2899
  %v2902 = vunpack.c.l.s4 1934713408
  %v2903 = vunpack.c.0.s8 %v2902
  %v2904 = vperm.slane %v2896, %v2903
  %v2905 = vrot.slane %v2888, 4
  %v2906 = vsel %vm1689, %v2905, %v2864
  %v2907 = vrot.slane %v2864, 4
  %v2908 = vsel %vm1689, %v2888, %v2907
  %v2909 = vrot.slane %v2892, 4
  %v2910 = vsel %vm1689, %v2909, %v2868
  %v2911 = vrot.slane %v2868, 4
  %v2912 = vsel %vm1689, %v2892, %v2911
  %v2913 = vrot.slane %v2900, 4
  %v2914 = vsel %vm1689, %v2913, %v2876
  %v2915 = vrot.slane %v2876, 4
  %v2916 = vsel %vm1689, %v2900, %v2915
  %v2917 = vrot.slane %v2904, 4
  %v2918 = vsel %vm1689, %v2917, %v2880
  %v2919 = vrot.slane %v2880, 4
  %v2920 = vsel %vm1689, %v2904, %v2919
  %v2921 = vrot.slane %v1200, 4
  %v2922 = vsel %vm1689, %v2921, %v1174
  %v2923 = vrot.slane %v1174, 4
  %v2924 = vsel %vm1689, %v1200, %v2923
  %v2926 = vunpack.c.l.s4 1983009808
  %v2927 = vunpack.c.0.s8 %v2926
  %v2928 = vperm.slane %v2922, %v2927
  %v2930 = vunpack.c.l.s4 1983009808
  %v2931 = vunpack.c.0.s8 %v2930
  %v2932 = vperm.slane %v2924, %v2931
  %v2933 = vrot.slane %v1213, 4
  %v2934 = vsel %vm1689, %v2933, %v1187
  %v2935 = vrot.slane %v1187, 4
  %v2936 = vsel %vm1689, %v1213, %v2935
  %v2938 = vunpack.c.l.s4 1983009808
  %v2939 = vunpack.c.0.s8 %v2938
  %v2940 = vperm.slane %v2934, %v2939
  %v2942 = vunpack.c.l.s4 1983009808
  %v2943 = vunpack.c.0.s8 %v2942
  %v2944 = vperm.slane %v2936, %v2943
  %v2945 = vrot.slane %v1252, 4
  %v2946 = vsel %vm1689, %v2945, %v1226
  %v2947 = vrot.slane %v1226, 4
  %v2948 = vsel %vm1689, %v1252, %v2947
  %v2950 = vunpack.c.l.s4 1983009808
  %v2951 = vunpack.c.0.s8 %v2950
  %v2952 = vperm.slane %v2946, %v2951
  %v2954 = vunpack.c.l.s4 1983009808
  %v2955 = vunpack.c.0.s8 %v2954
  %v2956 = vperm.slane %v2948, %v2955
  %v2957 = vrot.slane %v1265, 4
  %v2958 = vsel %vm1689, %v2957, %v1239
  %v2959 = vrot.slane %v1239, 4
  %v2960 = vsel %vm1689, %v1265, %v2959
  %v2962 = vunpack.c.l.s4 1983009808
  %v2963 = vunpack.c.0.s8 %v2962
  %v2964 = vperm.slane %v2958, %v2963
  %v2966 = vunpack.c.l.s4 1983009808
  %v2967 = vunpack.c.0.s8 %v2966
  %v2968 = vperm.slane %v2960, %v2967
  %v2969 = vrot.slane %v2940, 4
  %v2970 = vsel %vm1689, %v2969, %v2928
  %v2971 = vrot.slane %v2928, 4
  %v2972 = vsel %vm1689, %v2940, %v2971
  %v2974 = vunpack.c.l.s4 1934713408
  %v2975 = vunpack.c.0.s8 %v2974
  %v2976 = vperm.slane %v2970, %v2975
  %v2978 = vunpack.c.l.s4 1934713408
  %v2979 = vunpack.c.0.s8 %v2978
  %v2980 = vperm.slane %v2972, %v2979
  %v2981 = vrot.slane %v2944, 4
  %v2982 = vsel %vm1689, %v2981, %v2932
  %v2983 = vrot.slane %v2932, 4
  %v2984 = vsel %vm1689, %v2944, %v2983
  %v2986 = vunpack.c.l.s4 1934713408
  %v2987 = vunpack.c.0.s8 %v2986
  %v2988 = vperm.slane %v2982, %v2987
  %v2990 = vunpack.c.l.s4 1934713408
  %v2991 = vunpack.c.0.s8 %v2990
  %v2992 = vperm.slane %v2984, %v2991
  %v2993 = vrot.slane %v2964, 4
  %v2994 = vsel %vm1689, %v2993, %v2952
  %v2995 = vrot.slane %v2952, 4
  %v2996 = vsel %vm1689, %v2964, %v2995
  %v2998 = vunpack.c.l.s4 1934713408
  %v2999 = vunpack.c.0.s8 %v2998
  %v3000 = vperm.slane %v2994, %v2999
  %v3002 = vunpack.c.l.s4 1934713408
  %v3003 = vunpack.c.0.s8 %v3002
  %v3004 = vperm.slane %v2996, %v3003
  %v3005 = vrot.slane %v2968, 4
  %v3006 = vsel %vm1689, %v3005, %v2956
  %v3007 = vrot.slane %v2956, 4
  %v3008 = vsel %vm1689, %v2968, %v3007
  %v3010 = vunpack.c.l.s4 1934713408
  %v3011 = vunpack.c.0.s8 %v3010
  %v3012 = vperm.slane %v3006, %v3011
  %v3014 = vunpack.c.l.s4 1934713408
  %v3015 = vunpack.c.0.s8 %v3014
  %v3016 = vperm.slane %v3008, %v3015
  %v3017 = vrot.slane %v3000, 4
  %v3018 = vsel %vm1689, %v3017, %v2976
  %v3019 = vrot.slane %v2976, 4
  %v3020 = vsel %vm1689, %v3000, %v3019
  %v3021 = vrot.slane %v3004, 4
  %v3022 = vsel %vm1689, %v3021, %v2980
  %v3023 = vrot.slane %v2980, 4
  %v3024 = vsel %vm1689, %v3004, %v3023
  %v3025 = vrot.slane %v3012, 4
  %v3026 = vsel %vm1689, %v3025, %v2988
  %v3027 = vrot.slane %v2988, 4
  %v3028 = vsel %vm1689, %v3012, %v3027
  %v3029 = vrot.slane %v3016, 4
  %v3030 = vsel %vm1689, %v3029, %v2992
  %v3031 = vrot.slane %v2992, 4
  %v3032 = vsel %vm1689, %v3016, %v3031
  %v3033 = vrot.slane %v1304, 4
  %v3034 = vsel %vm1689, %v3033, %v1278
  %v3035 = vrot.slane %v1278, 4
  %v3036 = vsel %vm1689, %v1304, %v3035
  %v3038 = vunpack.c.l.s4 1983009808
  %v3039 = vunpack.c.0.s8 %v3038
  %v3040 = vperm.slane %v3034, %v3039
  %v3042 = vunpack.c.l.s4 1983009808
  %v3043 = vunpack.c.0.s8 %v3042
  %v3044 = vperm.slane %v3036, %v3043
  %v3045 = vrot.slane %v1317, 4
  %v3046 = vsel %vm1689, %v3045, %v1291
  %v3047 = vrot.slane %v1291, 4
  %v3048 = vsel %vm1689, %v1317, %v3047
  %v3050 = vunpack.c.l.s4 1983009808
  %v3051 = vunpack.c.0.s8 %v3050
  %v3052 = vperm.slane %v3046, %v3051
  %v3054 = vunpack.c.l.s4 1983009808
  %v3055 = vunpack.c.0.s8 %v3054
  %v3056 = vperm.slane %v3048, %v3055
  %v3057 = vrot.slane %v1356, 4
  %v3058 = vsel %vm1689, %v3057, %v1330
  %v3059 = vrot.slane %v1330, 4
  %v3060 = vsel %vm1689, %v1356, %v3059
  %v3062 = vunpack.c.l.s4 1983009808
  %v3063 = vunpack.c.0.s8 %v3062
  %v3064 = vperm.slane %v3058, %v3063
  %v3066 = vunpack.c.l.s4 1983009808
  %v3067 = vunpack.c.0.s8 %v3066
  %v3068 = vperm.slane %v3060, %v3067
  %v3069 = vrot.slane %v1369, 4
  %v3070 = vsel %vm1689, %v3069, %v1343
  %v3071 = vrot.slane %v1343, 4
  %v3072 = vsel %vm1689, %v1369, %v3071
  %v3074 = vunpack.c.l.s4 1983009808
  %v3075 = vunpack.c.0.s8 %v3074
  %v3076 = vperm.slane %v3070, %v3075
  %v3078 = vunpack.c.l.s4 1983009808
  %v3079 = vunpack.c.0.s8 %v3078
  %v3080 = vperm.slane %v3072, %v3079
  %v3081 = vrot.slane %v3052, 4
  %v3082 = vsel %vm1689, %v3081, %v3040
  %v3083 = vrot.slane %v3040, 4
  %v3084 = vsel %vm1689, %v3052, %v3083
  %v3086 = vunpack.c.l.s4 1934713408
  %v3087 = vunpack.c.0.s8 %v3086
  %v3088 = vperm.slane %v3082, %v3087
  %v3090 = vunpack.c.l.s4 1934713408
  %v3091 = vunpack.c.0.s8 %v3090
  %v3092 = vperm.slane %v3084, %v3091
  %v3093 = vrot.slane %v3056, 4
  %v3094 = vsel %vm1689, %v3093, %v3044
  %v3095 = vrot.slane %v3044, 4
  %v3096 = vsel %vm1689, %v3056, %v3095
  %v3098 = vunpack.c.l.s4 1934713408
  %v3099 = vunpack.c.0.s8 %v3098
  %v3100 = vperm.slane %v3094, %v3099
  %v3102 = vunpack.c.l.s4 1934713408
  %v3103 = vunpack.c.0.s8 %v3102
  %v3104 = vperm.slane %v3096, %v3103
  %v3105 = vrot.slane %v3076, 4
  %v3106 = vsel %vm1689, %v3105, %v3064
  %v3107 = vrot.slane %v3064, 4
  %v3108 = vsel %vm1689, %v3076, %v3107
  %v3110 = vunpack.c.l.s4 1934713408
  %v3111 = vunpack.c.0.s8 %v3110
  %v3112 = vperm.slane %v3106, %v3111
  %v3114 = vunpack.c.l.s4 1934713408
  %v3115 = vunpack.c.0.s8 %v3114
  %v3116 = vperm.slane %v3108, %v3115
  %v3117 = vrot.slane %v3080, 4
  %v3118 = vsel %vm1689, %v3117, %v3068
  %v3119 = vrot.slane %v3068, 4
  %v3120 = vsel %vm1689, %v3080, %v3119
  %v3122 = vunpack.c.l.s4 1934713408
  %v3123 = vunpack.c.0.s8 %v3122
  %v3124 = vperm.slane %v3118, %v3123
  %v3126 = vunpack.c.l.s4 1934713408
  %v3127 = vunpack.c.0.s8 %v3126
  %v3128 = vperm.slane %v3120, %v3127
  %v3129 = vrot.slane %v3112, 4
  %v3130 = vsel %vm1689, %v3129, %v3088
  %v3131 = vrot.slane %v3088, 4
  %v3132 = vsel %vm1689, %v3112, %v3131
  %v3133 = vrot.slane %v3116, 4
  %v3134 = vsel %vm1689, %v3133, %v3092
  %v3135 = vrot.slane %v3092, 4
  %v3136 = vsel %vm1689, %v3116, %v3135
  %v3137 = vrot.slane %v3124, 4
  %v3138 = vsel %vm1689, %v3137, %v3100
  %v3139 = vrot.slane %v3100, 4
  %v3140 = vsel %vm1689, %v3124, %v3139
  %v3141 = vrot.slane %v3128, 4
  %v3142 = vsel %vm1689, %v3141, %v3104
  %v3143 = vrot.slane %v3104, 4
  %v3144 = vsel %vm1689, %v3128, %v3143
  %v3145 = vrot.slane %v1408, 4
  %v3146 = vsel %vm1689, %v3145, %v1382
  %v3147 = vrot.slane %v1382, 4
  %v3148 = vsel %vm1689, %v1408, %v3147
  %v3150 = vunpack.c.l.s4 1983009808
  %v3151 = vunpack.c.0.s8 %v3150
  %v3152 = vperm.slane %v3146, %v3151
  %v3154 = vunpack.c.l.s4 1983009808
  %v3155 = vunpack.c.0.s8 %v3154
  %v3156 = vperm.slane %v3148, %v3155
  %v3157 = vrot.slane %v1421, 4
  %v3158 = vsel %vm1689, %v3157, %v1395
  %v3159 = vrot.slane %v1395, 4
  %v3160 = vsel %vm1689, %v1421, %v3159
  %v3162 = vunpack.c.l.s4 1983009808
  %v3163 = vunpack.c.0.s8 %v3162
  %v3164 = vperm.slane %v3158, %v3163
  %v3166 = vunpack.c.l.s4 1983009808
  %v3167 = vunpack.c.0.s8 %v3166
  %v3168 = vperm.slane %v3160, %v3167
  %v3169 = vrot.slane %v1460, 4
  %v3170 = vsel %vm1689, %v3169, %v1434
  %v3171 = vrot.slane %v1434, 4
  %v3172 = vsel %vm1689, %v1460, %v3171
  %v3174 = vunpack.c.l.s4 1983009808
  %v3175 = vunpack.c.0.s8 %v3174
  %v3176 = vperm.slane %v3170, %v3175
  %v3178 = vunpack.c.l.s4 1983009808
  %v3179 = vunpack.c.0.s8 %v3178
  %v3180 = vperm.slane %v3172, %v3179
  %v3181 = vrot.slane %v1473, 4
  %v3182 = vsel %vm1689, %v3181, %v1447
  %v3183 = vrot.slane %v1447, 4
  %v3184 = vsel %vm1689, %v1473, %v3183
  %v3186 = vunpack.c.l.s4 1983009808
  %v3187 = vunpack.c.0.s8 %v3186
  %v3188 = vperm.slane %v3182, %v3187
  %v3190 = vunpack.c.l.s4 1983009808
  %v3191 = vunpack.c.0.s8 %v3190
  %v3192 = vperm.slane %v3184, %v3191
  %v3193 = vrot.slane %v3164, 4
  %v3194 = vsel %vm1689, %v3193, %v3152
  %v3195 = vrot.slane %v3152, 4
  %v3196 = vsel %vm1689, %v3164, %v3195
  %v3198 = vunpack.c.l.s4 1934713408
  %v3199 = vunpack.c.0.s8 %v3198
  %v3200 = vperm.slane %v3194, %v3199
  %v3202 = vunpack.c.l.s4 1934713408
  %v3203 = vunpack.c.0.s8 %v3202
  %v3204 = vperm.slane %v3196, %v3203
  %v3205 = vrot.slane %v3168, 4
  %v3206 = vsel %vm1689, %v3205, %v3156
  %v3207 = vrot.slane %v3156, 4
  %v3208 = vsel %vm1689, %v3168, %v3207
  %v3210 = vunpack.c.l.s4 1934713408
  %v3211 = vunpack.c.0.s8 %v3210
  %v3212 = vperm.slane %v3206, %v3211
  %v3214 = vunpack.c.l.s4 1934713408
  %v3215 = vunpack.c.0.s8 %v3214
  %v3216 = vperm.slane %v3208, %v3215
  %v3217 = vrot.slane %v3188, 4
  %v3218 = vsel %vm1689, %v3217, %v3176
  %v3219 = vrot.slane %v3176, 4
  %v3220 = vsel %vm1689, %v3188, %v3219
  %v3222 = vunpack.c.l.s4 1934713408
  %v3223 = vunpack.c.0.s8 %v3222
  %v3224 = vperm.slane %v3218, %v3223
  %v3226 = vunpack.c.l.s4 1934713408
  %v3227 = vunpack.c.0.s8 %v3226
  %v3228 = vperm.slane %v3220, %v3227
  %v3229 = vrot.slane %v3192, 4
  %v3230 = vsel %vm1689, %v3229, %v3180
  %v3231 = vrot.slane %v3180, 4
  %v3232 = vsel %vm1689, %v3192, %v3231
  %v3234 = vunpack.c.l.s4 1934713408
  %v3235 = vunpack.c.0.s8 %v3234
  %v3236 = vperm.slane %v3230, %v3235
  %v3238 = vunpack.c.l.s4 1934713408
  %v3239 = vunpack.c.0.s8 %v3238
  %v3240 = vperm.slane %v3232, %v3239
  %v3241 = vrot.slane %v3224, 4
  %v3242 = vsel %vm1689, %v3241, %v3200
  %v3243 = vrot.slane %v3200, 4
  %v3244 = vsel %vm1689, %v3224, %v3243
  %v3245 = vrot.slane %v3228, 4
  %v3246 = vsel %vm1689, %v3245, %v3204
  %v3247 = vrot.slane %v3204, 4
  %v3248 = vsel %vm1689, %v3228, %v3247
  %v3249 = vrot.slane %v3236, 4
  %v3250 = vsel %vm1689, %v3249, %v3212
  %v3251 = vrot.slane %v3212, 4
  %v3252 = vsel %vm1689, %v3236, %v3251
  %v3253 = vrot.slane %v3240, 4
  %v3254 = vsel %vm1689, %v3253, %v3216
  %v3255 = vrot.slane %v3216, 4
  %v3256 = vsel %vm1689, %v3240, %v3255
  %v3257 = vrot.slane %v1512, 4
  %v3258 = vsel %vm1689, %v3257, %v1486
  %v3259 = vrot.slane %v1486, 4
  %v3260 = vsel %vm1689, %v1512, %v3259
  %v3262 = vunpack.c.l.s4 1983009808
  %v3263 = vunpack.c.0.s8 %v3262
  %v3264 = vperm.slane %v3258, %v3263
  %v3266 = vunpack.c.l.s4 1983009808
  %v3267 = vunpack.c.0.s8 %v3266
  %v3268 = vperm.slane %v3260, %v3267
  %v3269 = vrot.slane %v1525, 4
  %v3270 = vsel %vm1689, %v3269, %v1499
  %v3271 = vrot.slane %v1499, 4
  %v3272 = vsel %vm1689, %v1525, %v3271
  %v3274 = vunpack.c.l.s4 1983009808
  %v3275 = vunpack.c.0.s8 %v3274
  %v3276 = vperm.slane %v3270, %v3275
  %v3278 = vunpack.c.l.s4 1983009808
  %v3279 = vunpack.c.0.s8 %v3278
  %v3280 = vperm.slane %v3272, %v3279
  %v3281 = vrot.slane %v1564, 4
  %v3282 = vsel %vm1689, %v3281, %v1538
  %v3283 = vrot.slane %v1538, 4
  %v3284 = vsel %vm1689, %v1564, %v3283
  %v3286 = vunpack.c.l.s4 1983009808
  %v3287 = vunpack.c.0.s8 %v3286
  %v3288 = vperm.slane %v3282, %v3287
  %v3290 = vunpack.c.l.s4 1983009808
  %v3291 = vunpack.c.0.s8 %v3290
  %v3292 = vperm.slane %v3284, %v3291
  %v3293 = vrot.slane %v1577, 4
  %v3294 = vsel %vm1689, %v3293, %v1551
  %v3295 = vrot.slane %v1551, 4
  %v3296 = vsel %vm1689, %v1577, %v3295
  %v3298 = vunpack.c.l.s4 1983009808
  %v3299 = vunpack.c.0.s8 %v3298
  %v3300 = vperm.slane %v3294, %v3299
  %v3302 = vunpack.c.l.s4 1983009808
  %v3303 = vunpack.c.0.s8 %v3302
  %v3304 = vperm.slane %v3296, %v3303
  %v3305 = vrot.slane %v3276, 4
  %v3306 = vsel %vm1689, %v3305, %v3264
  %v3307 = vrot.slane %v3264, 4
  %v3308 = vsel %vm1689, %v3276, %v3307
  %v3310 = vunpack.c.l.s4 1934713408
  %v3311 = vunpack.c.0.s8 %v3310
  %v3312 = vperm.slane %v3306, %v3311
  %v3314 = vunpack.c.l.s4 1934713408
  %v3315 = vunpack.c.0.s8 %v3314
  %v3316 = vperm.slane %v3308, %v3315
  %v3317 = vrot.slane %v3280, 4
  %v3318 = vsel %vm1689, %v3317, %v3268
  %v3319 = vrot.slane %v3268, 4
  %v3320 = vsel %vm1689, %v3280, %v3319
  %v3322 = vunpack.c.l.s4 1934713408
  %v3323 = vunpack.c.0.s8 %v3322
  %v3324 = vperm.slane %v3318, %v3323
  %v3326 = vunpack.c.l.s4 1934713408
  %v3327 = vunpack.c.0.s8 %v3326
  %v3328 = vperm.slane %v3320, %v3327
  %v3329 = vrot.slane %v3300, 4
  %v3330 = vsel %vm1689, %v3329, %v3288
  %v3331 = vrot.slane %v3288, 4
  %v3332 = vsel %vm1689, %v3300, %v3331
  %v3334 = vunpack.c.l.s4 1934713408
  %v3335 = vunpack.c.0.s8 %v3334
  %v3336 = vperm.slane %v3330, %v3335
  %v3338 = vunpack.c.l.s4 1934713408
  %v3339 = vunpack.c.0.s8 %v3338
  %v3340 = vperm.slane %v3332, %v3339
  %v3341 = vrot.slane %v3304, 4
  %v3342 = vsel %vm1689, %v3341, %v3292
  %v3343 = vrot.slane %v3292, 4
  %v3344 = vsel %vm1689, %v3304, %v3343
  %v3346 = vunpack.c.l.s4 1934713408
  %v3347 = vunpack.c.0.s8 %v3346
  %v3348 = vperm.slane %v3342, %v3347
  %v3350 = vunpack.c.l.s4 1934713408
  %v3351 = vunpack.c.0.s8 %v3350
  %v3352 = vperm.slane %v3344, %v3351
  %v3353 = vrot.slane %v3336, 4
  %v3354 = vsel %vm1689, %v3353, %v3312
  %v3355 = vrot.slane %v3312, 4
  %v3356 = vsel %vm1689, %v3336, %v3355
  %v3357 = vrot.slane %v3340, 4
  %v3358 = vsel %vm1689, %v3357, %v3316
  %v3359 = vrot.slane %v3316, 4
  %v3360 = vsel %vm1689, %v3340, %v3359
  %v3361 = vrot.slane %v3348, 4
  %v3362 = vsel %vm1689, %v3361, %v3324
  %v3363 = vrot.slane %v3324, 4
  %v3364 = vsel %vm1689, %v3348, %v3363
  %v3365 = vrot.slane %v3352, 4
  %v3366 = vsel %vm1689, %v3365, %v3328
  %v3367 = vrot.slane %v3328, 4
  %v3368 = vsel %vm1689, %v3352, %v3367
  %v3369 = vrot.slane %v1616, 4
  %v3370 = vsel %vm1689, %v3369, %v1590
  %v3371 = vrot.slane %v1590, 4
  %v3372 = vsel %vm1689, %v1616, %v3371
  %v3374 = vunpack.c.l.s4 1983009808
  %v3375 = vunpack.c.0.s8 %v3374
  %v3376 = vperm.slane %v3370, %v3375
  %v3378 = vunpack.c.l.s4 1983009808
  %v3379 = vunpack.c.0.s8 %v3378
  %v3380 = vperm.slane %v3372, %v3379
  %v3381 = vrot.slane %v1629, 4
  %v3382 = vsel %vm1689, %v3381, %v1603
  %v3383 = vrot.slane %v1603, 4
  %v3384 = vsel %vm1689, %v1629, %v3383
  %v3386 = vunpack.c.l.s4 1983009808
  %v3387 = vunpack.c.0.s8 %v3386
  %v3388 = vperm.slane %v3382, %v3387
  %v3390 = vunpack.c.l.s4 1983009808
  %v3391 = vunpack.c.0.s8 %v3390
  %v3392 = vperm.slane %v3384, %v3391
  %v3393 = vrot.slane %v1668, 4
  %v3394 = vsel %vm1689, %v3393, %v1642
  %v3395 = vrot.slane %v1642, 4
  %v3396 = vsel %vm1689, %v1668, %v3395
  %v3398 = vunpack.c.l.s4 1983009808
  %v3399 = vunpack.c.0.s8 %v3398
  %v3400 = vperm.slane %v3394, %v3399
  %v3402 = vunpack.c.l.s4 1983009808
  %v3403 = vunpack.c.0.s8 %v3402
  %v3404 = vperm.slane %v3396, %v3403
  %v3405 = vrot.slane %v1681, 4
  %v3406 = vsel %vm1689, %v3405, %v1655
  %v3407 = vrot.slane %v1655, 4
  %v3408 = vsel %vm1689, %v1681, %v3407
  %v3410 = vunpack.c.l.s4 1983009808
  %v3411 = vunpack.c.0.s8 %v3410
  %v3412 = vperm.slane %v3406, %v3411
  %v3414 = vunpack.c.l.s4 1983009808
  %v3415 = vunpack.c.0.s8 %v3414
  %v3416 = vperm.slane %v3408, %v3415
  %v3417 = vrot.slane %v3388, 4
  %v3418 = vsel %vm1689, %v3417, %v3376
  %v3419 = vrot.slane %v3376, 4
  %v3420 = vsel %vm1689, %v3388, %v3419
  %v3422 = vunpack.c.l.s4 1934713408
  %v3423 = vunpack.c.0.s8 %v3422
  %v3424 = vperm.slane %v3418, %v3423
  %v3426 = vunpack.c.l.s4 1934713408
  %v3427 = vunpack.c.0.s8 %v3426
  %v3428 = vperm.slane %v3420, %v3427
  %v3429 = vrot.slane %v3392, 4
  %v3430 = vsel %vm1689, %v3429, %v3380
  %v3431 = vrot.slane %v3380, 4
  %v3432 = vsel %vm1689, %v3392, %v3431
  %v3434 = vunpack.c.l.s4 1934713408
  %v3435 = vunpack.c.0.s8 %v3434
  %v3436 = vperm.slane %v3430, %v3435
  %v3438 = vunpack.c.l.s4 1934713408
  %v3439 = vunpack.c.0.s8 %v3438
  %v3440 = vperm.slane %v3432, %v3439
  %v3441 = vrot.slane %v3412, 4
  %v3442 = vsel %vm1689, %v3441, %v3400
  %v3443 = vrot.slane %v3400, 4
  %v3444 = vsel %vm1689, %v3412, %v3443
  %v3446 = vunpack.c.l.s4 1934713408
  %v3447 = vunpack.c.0.s8 %v3446
  %v3448 = vperm.slane %v3442, %v3447
  %v3450 = vunpack.c.l.s4 1934713408
  %v3451 = vunpack.c.0.s8 %v3450
  %v3452 = vperm.slane %v3444, %v3451
  %v3453 = vrot.slane %v3416, 4
  %v3454 = vsel %vm1689, %v3453, %v3404
  %v3455 = vrot.slane %v3404, 4
  %v3456 = vsel %vm1689, %v3416, %v3455
  %v3458 = vunpack.c.l.s4 1934713408
  %v3459 = vunpack.c.0.s8 %v3458
  %v3460 = vperm.slane %v3454, %v3459
  %v3462 = vunpack.c.l.s4 1934713408
  %v3463 = vunpack.c.0.s8 %v3462
  %v3464 = vperm.slane %v3456, %v3463
  %v3465 = vrot.slane %v3448, 4
  %v3466 = vsel %vm1689, %v3465, %v3424
  %v3467 = vrot.slane %v3424, 4
  %v3468 = vsel %vm1689, %v3448, %v3467
  %v3469 = vrot.slane %v3452, 4
  %v3470 = vsel %vm1689, %v3469, %v3428
  %v3471 = vrot.slane %v3428, 4
  %v3472 = vsel %vm1689, %v3452, %v3471
  %v3473 = vrot.slane %v3460, 4
  %v3474 = vsel %vm1689, %v3473, %v3436
  %v3475 = vrot.slane %v3436, 4
  %v3476 = vsel %vm1689, %v3460, %v3475
  %v3477 = vrot.slane %v3464, 4
  %v3478 = vsel %vm1689, %v3477, %v3440
  %v3479 = vrot.slane %v3440, 4
  %v3480 = vsel %vm1689, %v3464, %v3479
  %v3481 = vrot.slane %v62, 4
  %v3482 = vsel %vm1689, %v3481, %v36
  %v3483 = vrot.slane %v36, 4
  %v3484 = vsel %vm1689, %v62, %v3483
  %v3486 = vunpack.c.l.s4 1983009808
  %v3487 = vunpack.c.0.s8 %v3486
  %v3488 = vperm.slane %v3482, %v3487
  %v3490 = vunpack.c.l.s4 1983009808
  %v3491 = vunpack.c.0.s8 %v3490
  %v3492 = vperm.slane %v3484, %v3491
  %v3493 = vrot.slane %v75, 4
  %v3494 = vsel %vm1689, %v3493, %v49
  %v3495 = vrot.slane %v49, 4
  %v3496 = vsel %vm1689, %v75, %v3495
  %v3498 = vunpack.c.l.s4 1983009808
  %v3499 = vunpack.c.0.s8 %v3498
  %v3500 = vperm.slane %v3494, %v3499
  %v3502 = vunpack.c.l.s4 1983009808
  %v3503 = vunpack.c.0.s8 %v3502
  %v3504 = vperm.slane %v3496, %v3503
  %v3505 = vrot.slane %v114, 4
  %v3506 = vsel %vm1689, %v3505, %v88
  %v3507 = vrot.slane %v88, 4
  %v3508 = vsel %vm1689, %v114, %v3507
  %v3510 = vunpack.c.l.s4 1983009808
  %v3511 = vunpack.c.0.s8 %v3510
  %v3512 = vperm.slane %v3506, %v3511
  %v3514 = vunpack.c.l.s4 1983009808
  %v3515 = vunpack.c.0.s8 %v3514
  %v3516 = vperm.slane %v3508, %v3515
  %v3517 = vrot.slane %v127, 4
  %v3518 = vsel %vm1689, %v3517, %v101
  %v3519 = vrot.slane %v101, 4
  %v3520 = vsel %vm1689, %v127, %v3519
  %v3522 = vunpack.c.l.s4 1983009808
  %v3523 = vunpack.c.0.s8 %v3522
  %v3524 = vperm.slane %v3518, %v3523
  %v3526 = vunpack.c.l.s4 1983009808
  %v3527 = vunpack.c.0.s8 %v3526
  %v3528 = vperm.slane %v3520, %v3527
  %v3529 = vrot.slane %v3500, 4
  %v3530 = vsel %vm1689, %v3529, %v3488
  %v3531 = vrot.slane %v3488, 4
  %v3532 = vsel %vm1689, %v3500, %v3531
  %v3534 = vunpack.c.l.s4 1934713408
  %v3535 = vunpack.c.0.s8 %v3534
  %v3536 = vperm.slane %v3530, %v3535
  %v3538 = vunpack.c.l.s4 1934713408
  %v3539 = vunpack.c.0.s8 %v3538
  %v3540 = vperm.slane %v3532, %v3539
  %v3541 = vrot.slane %v3504, 4
  %v3542 = vsel %vm1689, %v3541, %v3492
  %v3543 = vrot.slane %v3492, 4
  %v3544 = vsel %vm1689, %v3504, %v3543
  %v3546 = vunpack.c.l.s4 1934713408
  %v3547 = vunpack.c.0.s8 %v3546
  %v3548 = vperm.slane %v3542, %v3547
  %v3550 = vunpack.c.l.s4 1934713408
  %v3551 = vunpack.c.0.s8 %v3550
  %v3552 = vperm.slane %v3544, %v3551
  %v3553 = vrot.slane %v3524, 4
  %v3554 = vsel %vm1689, %v3553, %v3512
  %v3555 = vrot.slane %v3512, 4
  %v3556 = vsel %vm1689, %v3524, %v3555
  %v3558 = vunpack.c.l.s4 1934713408
  %v3559 = vunpack.c.0.s8 %v3558
  %v3560 = vperm.slane %v3554, %v3559
  %v3562 = vunpack.c.l.s4 1934713408
  %v3563 = vunpack.c.0.s8 %v3562
  %v3564 = vperm.slane %v3556, %v3563
  %v3565 = vrot.slane %v3528, 4
  %v3566 = vsel %vm1689, %v3565, %v3516
  %v3567 = vrot.slane %v3516, 4
  %v3568 = vsel %vm1689, %v3528, %v3567
  %v3570 = vunpack.c.l.s4 1934713408
  %v3571 = vunpack.c.0.s8 %v3570
  %v3572 = vperm.slane %v3566, %v3571
  %v3574 = vunpack.c.l.s4 1934713408
  %v3575 = vunpack.c.0.s8 %v3574
  %v3576 = vperm.slane %v3568, %v3575
  %v3577 = vrot.slane %v3560, 4
  %v3578 = vsel %vm1689, %v3577, %v3536
  %v3579 = vrot.slane %v3536, 4
  %v3580 = vsel %vm1689, %v3560, %v3579
  %v3581 = vrot.slane %v3564, 4
  %v3582 = vsel %vm1689, %v3581, %v3540
  %v3583 = vrot.slane %v3540, 4
  %v3584 = vsel %vm1689, %v3564, %v3583
  %v3585 = vrot.slane %v3572, 4
  %v3586 = vsel %vm1689, %v3585, %v3548
  %v3587 = vrot.slane %v3548, 4
  %v3588 = vsel %vm1689, %v3572, %v3587
  %v3589 = vrot.slane %v3576, 4
  %v3590 = vsel %vm1689, %v3589, %v3552
  %v3591 = vrot.slane %v3552, 4
  %v3592 = vsel %vm1689, %v3576, %v3591
  %v3593 = vrot.slane %v166, 4
  %v3594 = vsel %vm1689, %v3593, %v140
  %v3595 = vrot.slane %v140, 4
  %v3596 = vsel %vm1689, %v166, %v3595
  %v3598 = vunpack.c.l.s4 1983009808
  %v3599 = vunpack.c.0.s8 %v3598
  %v3600 = vperm.slane %v3594, %v3599
  %v3602 = vunpack.c.l.s4 1983009808
  %v3603 = vunpack.c.0.s8 %v3602
  %v3604 = vperm.slane %v3596, %v3603
  %v3605 = vrot.slane %v179, 4
  %v3606 = vsel %vm1689, %v3605, %v153
  %v3607 = vrot.slane %v153, 4
  %v3608 = vsel %vm1689, %v179, %v3607
  %v3610 = vunpack.c.l.s4 1983009808
  %v3611 = vunpack.c.0.s8 %v3610
  %v3612 = vperm.slane %v3606, %v3611
  %v3614 = vunpack.c.l.s4 1983009808
  %v3615 = vunpack.c.0.s8 %v3614
  %v3616 = vperm.slane %v3608, %v3615
  %v3617 = vrot.slane %v218, 4
  %v3618 = vsel %vm1689, %v3617, %v192
  %v3619 = vrot.slane %v192, 4
  %v3620 = vsel %vm1689, %v218, %v3619
  %v3622 = vunpack.c.l.s4 1983009808
  %v3623 = vunpack.c.0.s8 %v3622
  %v3624 = vperm.slane %v3618, %v3623
  %v3626 = vunpack.c.l.s4 1983009808
  %v3627 = vunpack.c.0.s8 %v3626
  %v3628 = vperm.slane %v3620, %v3627
  %v3629 = vrot.slane %v231, 4
  %v3630 = vsel %vm1689, %v3629, %v205
  %v3631 = vrot.slane %v205, 4
  %v3632 = vsel %vm1689, %v231, %v3631
  %v3634 = vunpack.c.l.s4 1983009808
  %v3635 = vunpack.c.0.s8 %v3634
  %v3636 = vperm.slane %v3630, %v3635
  %v3638 = vunpack.c.l.s4 1983009808
  %v3639 = vunpack.c.0.s8 %v3638
  %v3640 = vperm.slane %v3632, %v3639
  %v3641 = vrot.slane %v3612, 4
  %v3642 = vsel %vm1689, %v3641, %v3600
  %v3643 = vrot.slane %v3600, 4
  %v3644 = vsel %vm1689, %v3612, %v3643
  %v3646 = vunpack.c.l.s4 1934713408
  %v3647 = vunpack.c.0.s8 %v3646
  %v3648 = vperm.slane %v3642, %v3647
  %v3650 = vunpack.c.l.s4 1934713408
  %v3651 = vunpack.c.0.s8 %v3650
  %v3652 = vperm.slane %v3644, %v3651
  %v3653 = vrot.slane %v3616, 4
  %v3654 = vsel %vm1689, %v3653, %v3604
  %v3655 = vrot.slane %v3604, 4
  %v3656 = vsel %vm1689, %v3616, %v3655
  %v3658 = vunpack.c.l.s4 1934713408
  %v3659 = vunpack.c.0.s8 %v3658
  %v3660 = vperm.slane %v3654, %v3659
  %v3662 = vunpack.c.l.s4 1934713408
  %v3663 = vunpack.c.0.s8 %v3662
  %v3664 = vperm.slane %v3656, %v3663
  %v3665 = vrot.slane %v3636, 4
  %v3666 = vsel %vm1689, %v3665, %v3624
  %v3667 = vrot.slane %v3624, 4
  %v3668 = vsel %vm1689, %v3636, %v3667
  %v3670 = vunpack.c.l.s4 1934713408
  %v3671 = vunpack.c.0.s8 %v3670
  %v3672 = vperm.slane %v3666, %v3671
  %v3674 = vunpack.c.l.s4 1934713408
  %v3675 = vunpack.c.0.s8 %v3674
  %v3676 = vperm.slane %v3668, %v3675
  %v3677 = vrot.slane %v3640, 4
  %v3678 = vsel %vm1689, %v3677, %v3628
  %v3679 = vrot.slane %v3628, 4
  %v3680 = vsel %vm1689, %v3640, %v3679
  %v3682 = vunpack.c.l.s4 1934713408
  %v3683 = vunpack.c.0.s8 %v3682
  %v3684 = vperm.slane %v3678, %v3683
  %v3686 = vunpack.c.l.s4 1934713408
  %v3687 = vunpack.c.0.s8 %v3686
  %v3688 = vperm.slane %v3680, %v3687
  %v3689 = vrot.slane %v3672, 4
  %v3690 = vsel %vm1689, %v3689, %v3648
  %v3691 = vrot.slane %v3648, 4
  %v3692 = vsel %vm1689, %v3672, %v3691
  %v3693 = vrot.slane %v3676, 4
  %v3694 = vsel %vm1689, %v3693, %v3652
  %v3695 = vrot.slane %v3652, 4
  %v3696 = vsel %vm1689, %v3676, %v3695
  %v3697 = vrot.slane %v3684, 4
  %v3698 = vsel %vm1689, %v3697, %v3660
  %v3699 = vrot.slane %v3660, 4
  %v3700 = vsel %vm1689, %v3684, %v3699
  %v3701 = vrot.slane %v3688, 4
  %v3702 = vsel %vm1689, %v3701, %v3664
  %v3703 = vrot.slane %v3664, 4
  %v3704 = vsel %vm1689, %v3688, %v3703
  %v3705 = vrot.slane %v270, 4
  %v3706 = vsel %vm1689, %v3705, %v244
  %v3707 = vrot.slane %v244, 4
  %v3708 = vsel %vm1689, %v270, %v3707
  %v3710 = vunpack.c.l.s4 1983009808
  %v3711 = vunpack.c.0.s8 %v3710
  %v3712 = vperm.slane %v3706, %v3711
  %v3714 = vunpack.c.l.s4 1983009808
  %v3715 = vunpack.c.0.s8 %v3714
  %v3716 = vperm.slane %v3708, %v3715
  %v3717 = vrot.slane %v283, 4
  %v3718 = vsel %vm1689, %v3717, %v257
  %v3719 = vrot.slane %v257, 4
  %v3720 = vsel %vm1689, %v283, %v3719
  %v3722 = vunpack.c.l.s4 1983009808
  %v3723 = vunpack.c.0.s8 %v3722
  %v3724 = vperm.slane %v3718, %v3723
  %v3726 = vunpack.c.l.s4 1983009808
  %v3727 = vunpack.c.0.s8 %v3726
  %v3728 = vperm.slane %v3720, %v3727
  %v3729 = vrot.slane %v322, 4
  %v3730 = vsel %vm1689, %v3729, %v296
  %v3731 = vrot.slane %v296, 4
  %v3732 = vsel %vm1689, %v322, %v3731
  %v3734 = vunpack.c.l.s4 1983009808
  %v3735 = vunpack.c.0.s8 %v3734
  %v3736 = vperm.slane %v3730, %v3735
  %v3738 = vunpack.c.l.s4 1983009808
  %v3739 = vunpack.c.0.s8 %v3738
  %v3740 = vperm.slane %v3732, %v3739
  %v3741 = vrot.slane %v335, 4
  %v3742 = vsel %vm1689, %v3741, %v309
  %v3743 = vrot.slane %v309, 4
  %v3744 = vsel %vm1689, %v335, %v3743
  %v3746 = vunpack.c.l.s4 1983009808
  %v3747 = vunpack.c.0.s8 %v3746
  %v3748 = vperm.slane %v3742, %v3747
  %v3750 = vunpack.c.l.s4 1983009808
  %v3751 = vunpack.c.0.s8 %v3750
  %v3752 = vperm.slane %v3744, %v3751
  %v3753 = vrot.slane %v3724, 4
  %v3754 = vsel %vm1689, %v3753, %v3712
  %v3755 = vrot.slane %v3712, 4
  %v3756 = vsel %vm1689, %v3724, %v3755
  %v3758 = vunpack.c.l.s4 1934713408
  %v3759 = vunpack.c.0.s8 %v3758
  %v3760 = vperm.slane %v3754, %v3759
  %v3762 = vunpack.c.l.s4 1934713408
  %v3763 = vunpack.c.0.s8 %v3762
  %v3764 = vperm.slane %v3756, %v3763
  %v3765 = vrot.slane %v3728, 4
  %v3766 = vsel %vm1689, %v3765, %v3716
  %v3767 = vrot.slane %v3716, 4
  %v3768 = vsel %vm1689, %v3728, %v3767
  %v3770 = vunpack.c.l.s4 1934713408
  %v3771 = vunpack.c.0.s8 %v3770
  %v3772 = vperm.slane %v3766, %v3771
  %v3774 = vunpack.c.l.s4 1934713408
  %v3775 = vunpack.c.0.s8 %v3774
  %v3776 = vperm.slane %v3768, %v3775
  %v3777 = vrot.slane %v3748, 4
  %v3778 = vsel %vm1689, %v3777, %v3736
  %v3779 = vrot.slane %v3736, 4
  %v3780 = vsel %vm1689, %v3748, %v3779
  %v3782 = vunpack.c.l.s4 1934713408
  %v3783 = vunpack.c.0.s8 %v3782
  %v3784 = vperm.slane %v3778, %v3783
  %v3786 = vunpack.c.l.s4 1934713408
  %v3787 = vunpack.c.0.s8 %v3786
  %v3788 = vperm.slane %v3780, %v3787
  %v3789 = vrot.slane %v3752, 4
  %v3790 = vsel %vm1689, %v3789, %v3740
  %v3791 = vrot.slane %v3740, 4
  %v3792 = vsel %vm1689, %v3752, %v3791
  %v3794 = vunpack.c.l.s4 1934713408
  %v3795 = vunpack.c.0.s8 %v3794
  %v3796 = vperm.slane %v3790, %v3795
  %v3798 = vunpack.c.l.s4 1934713408
  %v3799 = vunpack.c.0.s8 %v3798
  %v3800 = vperm.slane %v3792, %v3799
  %v3801 = vrot.slane %v3784, 4
  %v3802 = vsel %vm1689, %v3801, %v3760
  %v3803 = vrot.slane %v3760, 4
  %v3804 = vsel %vm1689, %v3784, %v3803
  %v3805 = vrot.slane %v3788, 4
  %v3806 = vsel %vm1689, %v3805, %v3764
  %v3807 = vrot.slane %v3764, 4
  %v3808 = vsel %vm1689, %v3788, %v3807
  %v3809 = vrot.slane %v3796, 4
  %v3810 = vsel %vm1689, %v3809, %v3772
  %v3811 = vrot.slane %v3772, 4
  %v3812 = vsel %vm1689, %v3796, %v3811
  %v3813 = vrot.slane %v3800, 4
  %v3814 = vsel %vm1689, %v3813, %v3776
  %v3815 = vrot.slane %v3776, 4
  %v3816 = vsel %vm1689, %v3800, %v3815
  %v3817 = vrot.slane %v374, 4
  %v3818 = vsel %vm1689, %v3817, %v348
  %v3819 = vrot.slane %v348, 4
  %v3820 = vsel %vm1689, %v374, %v3819
  %v3822 = vunpack.c.l.s4 1983009808
  %v3823 = vunpack.c.0.s8 %v3822
  %v3824 = vperm.slane %v3818, %v3823
  %v3826 = vunpack.c.l.s4 1983009808
  %v3827 = vunpack.c.0.s8 %v3826
  %v3828 = vperm.slane %v3820, %v3827
  %v3829 = vrot.slane %v387, 4
  %v3830 = vsel %vm1689, %v3829, %v361
  %v3831 = vrot.slane %v361, 4
  %v3832 = vsel %vm1689, %v387, %v3831
  %v3834 = vunpack.c.l.s4 1983009808
  %v3835 = vunpack.c.0.s8 %v3834
  %v3836 = vperm.slane %v3830, %v3835
  %v3838 = vunpack.c.l.s4 1983009808
  %v3839 = vunpack.c.0.s8 %v3838
  %v3840 = vperm.slane %v3832, %v3839
  %v3841 = vrot.slane %v426, 4
  %v3842 = vsel %vm1689, %v3841, %v400
  %v3843 = vrot.slane %v400, 4
  %v3844 = vsel %vm1689, %v426, %v3843
  %v3846 = vunpack.c.l.s4 1983009808
  %v3847 = vunpack.c.0.s8 %v3846
  %v3848 = vperm.slane %v3842, %v3847
  %v3850 = vunpack.c.l.s4 1983009808
  %v3851 = vunpack.c.0.s8 %v3850
  %v3852 = vperm.slane %v3844, %v3851
  %v3853 = vrot.slane %v439, 4
  %v3854 = vsel %vm1689, %v3853, %v413
  %v3855 = vrot.slane %v413, 4
  %v3856 = vsel %vm1689, %v439, %v3855
  %v3858 = vunpack.c.l.s4 1983009808
  %v3859 = vunpack.c.0.s8 %v3858
  %v3860 = vperm.slane %v3854, %v3859
  %v3862 = vunpack.c.l.s4 1983009808
  %v3863 = vunpack.c.0.s8 %v3862
  %v3864 = vperm.slane %v3856, %v3863
  %v3865 = vrot.slane %v3836, 4
  %v3866 = vsel %vm1689, %v3865, %v3824
  %v3867 = vrot.slane %v3824, 4
  %v3868 = vsel %vm1689, %v3836, %v3867
  %v3870 = vunpack.c.l.s4 1934713408
  %v3871 = vunpack.c.0.s8 %v3870
  %v3872 = vperm.slane %v3866, %v3871
  %v3874 = vunpack.c.l.s4 1934713408
  %v3875 = vunpack.c.0.s8 %v3874
  %v3876 = vperm.slane %v3868, %v3875
  %v3877 = vrot.slane %v3840, 4
  %v3878 = vsel %vm1689, %v3877, %v3828
  %v3879 = vrot.slane %v3828, 4
  %v3880 = vsel %vm1689, %v3840, %v3879
  %v3882 = vunpack.c.l.s4 1934713408
  %v3883 = vunpack.c.0.s8 %v3882
  %v3884 = vperm.slane %v3878, %v3883
  %v3886 = vunpack.c.l.s4 1934713408
  %v3887 = vunpack.c.0.s8 %v3886
  %v3888 = vperm.slane %v3880, %v3887
  %v3889 = vrot.slane %v3860, 4
  %v3890 = vsel %vm1689, %v3889, %v3848
  %v3891 = vrot.slane %v3848, 4
  %v3892 = vsel %vm1689, %v3860, %v3891
  %v3894 = vunpack.c.l.s4 1934713408
  %v3895 = vunpack.c.0.s8 %v3894
  %v3896 = vperm.slane %v3890, %v3895
  %v3898 = vunpack.c.l.s4 1934713408
  %v3899 = vunpack.c.0.s8 %v3898
  %v3900 = vperm.slane %v3892, %v3899
  %v3901 = vrot.slane %v3864, 4
  %v3902 = vsel %vm1689, %v3901, %v3852
  %v3903 = vrot.slane %v3852, 4
  %v3904 = vsel %vm1689, %v3864, %v3903
  %v3906 = vunpack.c.l.s4 1934713408
  %v3907 = vunpack.c.0.s8 %v3906
  %v3908 = vperm.slane %v3902, %v3907
  %v3910 = vunpack.c.l.s4 1934713408
  %v3911 = vunpack.c.0.s8 %v3910
  %v3912 = vperm.slane %v3904, %v3911
  %v3913 = vrot.slane %v3896, 4
  %v3914 = vsel %vm1689, %v3913, %v3872
  %v3915 = vrot.slane %v3872, 4
  %v3916 = vsel %vm1689, %v3896, %v3915
  %v3917 = vrot.slane %v3900, 4
  %v3918 = vsel %vm1689, %v3917, %v3876
  %v3919 = vrot.slane %v3876, 4
  %v3920 = vsel %vm1689, %v3900, %v3919
  %v3921 = vrot.slane %v3908, 4
  %v3922 = vsel %vm1689, %v3921, %v3884
  %v3923 = vrot.slane %v3884, 4
  %v3924 = vsel %vm1689, %v3908, %v3923
  %v3925 = vrot.slane %v3912, 4
  %v3926 = vsel %vm1689, %v3925, %v3888
  %v3927 = vrot.slane %v3888, 4
  %v3928 = vsel %vm1689, %v3912, %v3927
  %v3929 = vrot.slane %v478, 4
  %v3930 = vsel %vm1689, %v3929, %v452
  %v3931 = vrot.slane %v452, 4
  %v3932 = vsel %vm1689, %v478, %v3931
  %v3934 = vunpack.c.l.s4 1983009808
  %v3935 = vunpack.c.0.s8 %v3934
  %v3936 = vperm.slane %v3930, %v3935
  %v3938 = vunpack.c.l.s4 1983009808
  %v3939 = vunpack.c.0.s8 %v3938
  %v3940 = vperm.slane %v3932, %v3939
  %v3941 = vrot.slane %v491, 4
  %v3942 = vsel %vm1689, %v3941, %v465
  %v3943 = vrot.slane %v465, 4
  %v3944 = vsel %vm1689, %v491, %v3943
  %v3946 = vunpack.c.l.s4 1983009808
  %v3947 = vunpack.c.0.s8 %v3946
  %v3948 = vperm.slane %v3942, %v3947
  %v3950 = vunpack.c.l.s4 1983009808
  %v3951 = vunpack.c.0.s8 %v3950
  %v3952 = vperm.slane %v3944, %v3951
  %v3953 = vrot.slane %v530, 4
  %v3954 = vsel %vm1689, %v3953, %v504
  %v3955 = vrot.slane %v504, 4
  %v3956 = vsel %vm1689, %v530, %v3955
  %v3958 = vunpack.c.l.s4 1983009808
  %v3959 = vunpack.c.0.s8 %v3958
  %v3960 = vperm.slane %v3954, %v3959
  %v3962 = vunpack.c.l.s4 1983009808
  %v3963 = vunpack.c.0.s8 %v3962
  %v3964 = vperm.slane %v3956, %v3963
  %v3965 = vrot.slane %v543, 4
  %v3966 = vsel %vm1689, %v3965, %v517
  %v3967 = vrot.slane %v517, 4
  %v3968 = vsel %vm1689, %v543, %v3967
  %v3970 = vunpack.c.l.s4 1983009808
  %v3971 = vunpack.c.0.s8 %v3970
  %v3972 = vperm.slane %v3966, %v3971
  %v3974 = vunpack.c.l.s4 1983009808
  %v3975 = vunpack.c.0.s8 %v3974
  %v3976 = vperm.slane %v3968, %v3975
  %v3977 = vrot.slane %v3948, 4
  %v3978 = vsel %vm1689, %v3977, %v3936
  %v3979 = vrot.slane %v3936, 4
  %v3980 = vsel %vm1689, %v3948, %v3979
  %v3982 = vunpack.c.l.s4 1934713408
  %v3983 = vunpack.c.0.s8 %v3982
  %v3984 = vperm.slane %v3978, %v3983
  %v3986 = vunpack.c.l.s4 1934713408
  %v3987 = vunpack.c.0.s8 %v3986
  %v3988 = vperm.slane %v3980, %v3987
  %v3989 = vrot.slane %v3952, 4
  %v3990 = vsel %vm1689, %v3989, %v3940
  %v3991 = vrot.slane %v3940, 4
  %v3992 = vsel %vm1689, %v3952, %v3991
  %v3994 = vunpack.c.l.s4 1934713408
  %v3995 = vunpack.c.0.s8 %v3994
  %v3996 = vperm.slane %v3990, %v3995
  %v3998 = vunpack.c.l.s4 1934713408
  %v3999 = vunpack.c.0.s8 %v3998
  %v4000 = vperm.slane %v3992, %v3999
  %v4001 = vrot.slane %v3972, 4
  %v4002 = vsel %vm1689, %v4001, %v3960
  %v4003 = vrot.slane %v3960, 4
  %v4004 = vsel %vm1689, %v3972, %v4003
  %v4006 = vunpack.c.l.s4 1934713408
  %v4007 = vunpack.c.0.s8 %v4006
  %v4008 = vperm.slane %v4002, %v4007
  %v4010 = vunpack.c.l.s4 1934713408
  %v4011 = vunpack.c.0.s8 %v4010
  %v4012 = vperm.slane %v4004, %v4011
  %v4013 = vrot.slane %v3976, 4
  %v4014 = vsel %vm1689, %v4013, %v3964
  %v4015 = vrot.slane %v3964, 4
  %v4016 = vsel %vm1689, %v3976, %v4015
  %v4018 = vunpack.c.l.s4 1934713408
  %v4019 = vunpack.c.0.s8 %v4018
  %v4020 = vperm.slane %v4014, %v4019
  %v4022 = vunpack.c.l.s4 1934713408
  %v4023 = vunpack.c.0.s8 %v4022
  %v4024 = vperm.slane %v4016, %v4023
  %v4025 = vrot.slane %v4008, 4
  %v4026 = vsel %vm1689, %v4025, %v3984
  %v4027 = vrot.slane %v3984, 4
  %v4028 = vsel %vm1689, %v4008, %v4027
  %v4029 = vrot.slane %v4012, 4
  %v4030 = vsel %vm1689, %v4029, %v3988
  %v4031 = vrot.slane %v3988, 4
  %v4032 = vsel %vm1689, %v4012, %v4031
  %v4033 = vrot.slane %v4020, 4
  %v4034 = vsel %vm1689, %v4033, %v3996
  %v4035 = vrot.slane %v3996, 4
  %v4036 = vsel %vm1689, %v4020, %v4035
  %v4037 = vrot.slane %v4024, 4
  %v4038 = vsel %vm1689, %v4037, %v4000
  %v4039 = vrot.slane %v4000, 4
  %v4040 = vsel %vm1689, %v4024, %v4039
  %v4041 = vrot.slane %v582, 4
  %v4042 = vsel %vm1689, %v4041, %v556
  %v4043 = vrot.slane %v556, 4
  %v4044 = vsel %vm1689, %v582, %v4043
  %v4046 = vunpack.c.l.s4 1983009808
  %v4047 = vunpack.c.0.s8 %v4046
  %v4048 = vperm.slane %v4042, %v4047
  %v4050 = vunpack.c.l.s4 1983009808
  %v4051 = vunpack.c.0.s8 %v4050
  %v4052 = vperm.slane %v4044, %v4051
  %v4053 = vrot.slane %v595, 4
  %v4054 = vsel %vm1689, %v4053, %v569
  %v4055 = vrot.slane %v569, 4
  %v4056 = vsel %vm1689, %v595, %v4055
  %v4058 = vunpack.c.l.s4 1983009808
  %v4059 = vunpack.c.0.s8 %v4058
  %v4060 = vperm.slane %v4054, %v4059
  %v4062 = vunpack.c.l.s4 1983009808
  %v4063 = vunpack.c.0.s8 %v4062
  %v4064 = vperm.slane %v4056, %v4063
  %v4065 = vrot.slane %v634, 4
  %v4066 = vsel %vm1689, %v4065, %v608
  %v4067 = vrot.slane %v608, 4
  %v4068 = vsel %vm1689, %v634, %v4067
  %v4070 = vunpack.c.l.s4 1983009808
  %v4071 = vunpack.c.0.s8 %v4070
  %v4072 = vperm.slane %v4066, %v4071
  %v4074 = vunpack.c.l.s4 1983009808
  %v4075 = vunpack.c.0.s8 %v4074
  %v4076 = vperm.slane %v4068, %v4075
  %v4077 = vrot.slane %v647, 4
  %v4078 = vsel %vm1689, %v4077, %v621
  %v4079 = vrot.slane %v621, 4
  %v4080 = vsel %vm1689, %v647, %v4079
  %v4082 = vunpack.c.l.s4 1983009808
  %v4083 = vunpack.c.0.s8 %v4082
  %v4084 = vperm.slane %v4078, %v4083
  %v4086 = vunpack.c.l.s4 1983009808
  %v4087 = vunpack.c.0.s8 %v4086
  %v4088 = vperm.slane %v4080, %v4087
  %v4089 = vrot.slane %v4060, 4
  %v4090 = vsel %vm1689, %v4089, %v4048
  %v4091 = vrot.slane %v4048, 4
  %v4092 = vsel %vm1689, %v4060, %v4091
  %v4094 = vunpack.c.l.s4 1934713408
  %v4095 = vunpack.c.0.s8 %v4094
  %v4096 = vperm.slane %v4090, %v4095
  %v4098 = vunpack.c.l.s4 1934713408
  %v4099 = vunpack.c.0.s8 %v4098
  %v4100 = vperm.slane %v4092, %v4099
  %v4101 = vrot.slane %v4064, 4
  %v4102 = vsel %vm1689, %v4101, %v4052
  %v4103 = vrot.slane %v4052, 4
  %v4104 = vsel %vm1689, %v4064, %v4103
  %v4106 = vunpack.c.l.s4 1934713408
  %v4107 = vunpack.c.0.s8 %v4106
  %v4108 = vperm.slane %v4102, %v4107
  %v4110 = vunpack.c.l.s4 1934713408
  %v4111 = vunpack.c.0.s8 %v4110
  %v4112 = vperm.slane %v4104, %v4111
  %v4113 = vrot.slane %v4084, 4
  %v4114 = vsel %vm1689, %v4113, %v4072
  %v4115 = vrot.slane %v4072, 4
  %v4116 = vsel %vm1689, %v4084, %v4115
  %v4118 = vunpack.c.l.s4 1934713408
  %v4119 = vunpack.c.0.s8 %v4118
  %v4120 = vperm.slane %v4114, %v4119
  %v4122 = vunpack.c.l.s4 1934713408
  %v4123 = vunpack.c.0.s8 %v4122
  %v4124 = vperm.slane %v4116, %v4123
  %v4125 = vrot.slane %v4088, 4
  %v4126 = vsel %vm1689, %v4125, %v4076
  %v4127 = vrot.slane %v4076, 4
  %v4128 = vsel %vm1689, %v4088, %v4127
  %v4130 = vunpack.c.l.s4 1934713408
  %v4131 = vunpack.c.0.s8 %v4130
  %v4132 = vperm.slane %v4126, %v4131
  %v4134 = vunpack.c.l.s4 1934713408
  %v4135 = vunpack.c.0.s8 %v4134
  %v4136 = vperm.slane %v4128, %v4135
  %v4137 = vrot.slane %v4120, 4
  %v4138 = vsel %vm1689, %v4137, %v4096
  %v4139 = vrot.slane %v4096, 4
  %v4140 = vsel %vm1689, %v4120, %v4139
  %v4141 = vrot.slane %v4124, 4
  %v4142 = vsel %vm1689, %v4141, %v4100
  %v4143 = vrot.slane %v4100, 4
  %v4144 = vsel %vm1689, %v4124, %v4143
  %v4145 = vrot.slane %v4132, 4
  %v4146 = vsel %vm1689, %v4145, %v4108
  %v4147 = vrot.slane %v4108, 4
  %v4148 = vsel %vm1689, %v4132, %v4147
  %v4149 = vrot.slane %v4136, 4
  %v4150 = vsel %vm1689, %v4149, %v4112
  %v4151 = vrot.slane %v4112, 4
  %v4152 = vsel %vm1689, %v4136, %v4151
  %v4153 = vrot.slane %v686, 4
  %v4154 = vsel %vm1689, %v4153, %v660
  %v4155 = vrot.slane %v660, 4
  %v4156 = vsel %vm1689, %v686, %v4155
  %v4158 = vunpack.c.l.s4 1983009808
  %v4159 = vunpack.c.0.s8 %v4158
  %v4160 = vperm.slane %v4154, %v4159
  %v4162 = vunpack.c.l.s4 1983009808
  %v4163 = vunpack.c.0.s8 %v4162
  %v4164 = vperm.slane %v4156, %v4163
  %v4165 = vrot.slane %v699, 4
  %v4166 = vsel %vm1689, %v4165, %v673
  %v4167 = vrot.slane %v673, 4
  %v4168 = vsel %vm1689, %v699, %v4167
  %v4170 = vunpack.c.l.s4 1983009808
  %v4171 = vunpack.c.0.s8 %v4170
  %v4172 = vperm.slane %v4166, %v4171
  %v4174 = vunpack.c.l.s4 1983009808
  %v4175 = vunpack.c.0.s8 %v4174
  %v4176 = vperm.slane %v4168, %v4175
  %v4177 = vrot.slane %v738, 4
  %v4178 = vsel %vm1689, %v4177, %v712
  %v4179 = vrot.slane %v712, 4
  %v4180 = vsel %vm1689, %v738, %v4179
  %v4182 = vunpack.c.l.s4 1983009808
  %v4183 = vunpack.c.0.s8 %v4182
  %v4184 = vperm.slane %v4178, %v4183
  %v4186 = vunpack.c.l.s4 1983009808
  %v4187 = vunpack.c.0.s8 %v4186
  %v4188 = vperm.slane %v4180, %v4187
  %v4189 = vrot.slane %v751, 4
  %v4190 = vsel %vm1689, %v4189, %v725
  %v4191 = vrot.slane %v725, 4
  %v4192 = vsel %vm1689, %v751, %v4191
  %v4194 = vunpack.c.l.s4 1983009808
  %v4195 = vunpack.c.0.s8 %v4194
  %v4196 = vperm.slane %v4190, %v4195
  %v4198 = vunpack.c.l.s4 1983009808
  %v4199 = vunpack.c.0.s8 %v4198
  %v4200 = vperm.slane %v4192, %v4199
  %v4201 = vrot.slane %v4172, 4
  %v4202 = vsel %vm1689, %v4201, %v4160
  %v4203 = vrot.slane %v4160, 4
  %v4204 = vsel %vm1689, %v4172, %v4203
  %v4206 = vunpack.c.l.s4 1934713408
  %v4207 = vunpack.c.0.s8 %v4206
  %v4208 = vperm.slane %v4202, %v4207
  %v4210 = vunpack.c.l.s4 1934713408
  %v4211 = vunpack.c.0.s8 %v4210
  %v4212 = vperm.slane %v4204, %v4211
  %v4213 = vrot.slane %v4176, 4
  %v4214 = vsel %vm1689, %v4213, %v4164
  %v4215 = vrot.slane %v4164, 4
  %v4216 = vsel %vm1689, %v4176, %v4215
  %v4218 = vunpack.c.l.s4 1934713408
  %v4219 = vunpack.c.0.s8 %v4218
  %v4220 = vperm.slane %v4214, %v4219
  %v4222 = vunpack.c.l.s4 1934713408
  %v4223 = vunpack.c.0.s8 %v4222
  %v4224 = vperm.slane %v4216, %v4223
  %v4225 = vrot.slane %v4196, 4
  %v4226 = vsel %vm1689, %v4225, %v4184
  %v4227 = vrot.slane %v4184, 4
  %v4228 = vsel %vm1689, %v4196, %v4227
  %v4230 = vunpack.c.l.s4 1934713408
  %v4231 = vunpack.c.0.s8 %v4230
  %v4232 = vperm.slane %v4226, %v4231
  %v4234 = vunpack.c.l.s4 1934713408
  %v4235 = vunpack.c.0.s8 %v4234
  %v4236 = vperm.slane %v4228, %v4235
  %v4237 = vrot.slane %v4200, 4
  %v4238 = vsel %vm1689, %v4237, %v4188
  %v4239 = vrot.slane %v4188, 4
  %v4240 = vsel %vm1689, %v4200, %v4239
  %v4242 = vunpack.c.l.s4 1934713408
  %v4243 = vunpack.c.0.s8 %v4242
  %v4244 = vperm.slane %v4238, %v4243
  %v4246 = vunpack.c.l.s4 1934713408
  %v4247 = vunpack.c.0.s8 %v4246
  %v4248 = vperm.slane %v4240, %v4247
  %v4249 = vrot.slane %v4232, 4
  %v4250 = vsel %vm1689, %v4249, %v4208
  %v4251 = vrot.slane %v4208, 4
  %v4252 = vsel %vm1689, %v4232, %v4251
  %v4253 = vrot.slane %v4236, 4
  %v4254 = vsel %vm1689, %v4253, %v4212
  %v4255 = vrot.slane %v4212, 4
  %v4256 = vsel %vm1689, %v4236, %v4255
  %v4257 = vrot.slane %v4244, 4
  %v4258 = vsel %vm1689, %v4257, %v4220
  %v4259 = vrot.slane %v4220, 4
  %v4260 = vsel %vm1689, %v4244, %v4259
  %v4261 = vrot.slane %v4248, 4
  %v4262 = vsel %vm1689, %v4261, %v4224
  %v4263 = vrot.slane %v4224, 4
  %v4264 = vsel %vm1689, %v4248, %v4263
  %v4265 = vrot.slane %v790, 4
  %v4266 = vsel %vm1689, %v4265, %v764
  %v4267 = vrot.slane %v764, 4
  %v4268 = vsel %vm1689, %v790, %v4267
  %v4270 = vunpack.c.l.s4 1983009808
  %v4271 = vunpack.c.0.s8 %v4270
  %v4272 = vperm.slane %v4266, %v4271
  %v4274 = vunpack.c.l.s4 1983009808
  %v4275 = vunpack.c.0.s8 %v4274
  %v4276 = vperm.slane %v4268, %v4275
  %v4277 = vrot.slane %v803, 4
  %v4278 = vsel %vm1689, %v4277, %v777
  %v4279 = vrot.slane %v777, 4
  %v4280 = vsel %vm1689, %v803, %v4279
  %v4282 = vunpack.c.l.s4 1983009808
  %v4283 = vunpack.c.0.s8 %v4282
  %v4284 = vperm.slane %v4278, %v4283
  %v4286 = vunpack.c.l.s4 1983009808
  %v4287 = vunpack.c.0.s8 %v4286
  %v4288 = vperm.slane %v4280, %v4287
  %v4289 = vrot.slane %v842, 4
  %v4290 = vsel %vm1689, %v4289, %v816
  %v4291 = vrot.slane %v816, 4
  %v4292 = vsel %vm1689, %v842, %v4291
  %v4294 = vunpack.c.l.s4 1983009808
  %v4295 = vunpack.c.0.s8 %v4294
  %v4296 = vperm.slane %v4290, %v4295
  %v4298 = vunpack.c.l.s4 1983009808
  %v4299 = vunpack.c.0.s8 %v4298
  %v4300 = vperm.slane %v4292, %v4299
  %v4301 = vrot.slane %v855, 4
  %v4302 = vsel %vm1689, %v4301, %v829
  %v4303 = vrot.slane %v829, 4
  %v4304 = vsel %vm1689, %v855, %v4303
  %v4306 = vunpack.c.l.s4 1983009808
  %v4307 = vunpack.c.0.s8 %v4306
  %v4308 = vperm.slane %v4302, %v4307
  %v4310 = vunpack.c.l.s4 1983009808
  %v4311 = vunpack.c.0.s8 %v4310
  %v4312 = vperm.slane %v4304, %v4311
  %v4313 = vrot.slane %v4284, 4
  %v4314 = vsel %vm1689, %v4313, %v4272
  %v4315 = vrot.slane %v4272, 4
  %v4316 = vsel %vm1689, %v4284, %v4315
  %v4318 = vunpack.c.l.s4 1934713408
  %v4319 = vunpack.c.0.s8 %v4318
  %v4320 = vperm.slane %v4314, %v4319
  %v4322 = vunpack.c.l.s4 1934713408
  %v4323 = vunpack.c.0.s8 %v4322
  %v4324 = vperm.slane %v4316, %v4323
  %v4325 = vrot.slane %v4288, 4
  %v4326 = vsel %vm1689, %v4325, %v4276
  %v4327 = vrot.slane %v4276, 4
  %v4328 = vsel %vm1689, %v4288, %v4327
  %v4330 = vunpack.c.l.s4 1934713408
  %v4331 = vunpack.c.0.s8 %v4330
  %v4332 = vperm.slane %v4326, %v4331
  %v4334 = vunpack.c.l.s4 1934713408
  %v4335 = vunpack.c.0.s8 %v4334
  %v4336 = vperm.slane %v4328, %v4335
  %v4337 = vrot.slane %v4308, 4
  %v4338 = vsel %vm1689, %v4337, %v4296
  %v4339 = vrot.slane %v4296, 4
  %v4340 = vsel %vm1689, %v4308, %v4339
  %v4342 = vunpack.c.l.s4 1934713408
  %v4343 = vunpack.c.0.s8 %v4342
  %v4344 = vperm.slane %v4338, %v4343
  %v4346 = vunpack.c.l.s4 1934713408
  %v4347 = vunpack.c.0.s8 %v4346
  %v4348 = vperm.slane %v4340, %v4347
  %v4349 = vrot.slane %v4312, 4
  %v4350 = vsel %vm1689, %v4349, %v4300
  %v4351 = vrot.slane %v4300, 4
  %v4352 = vsel %vm1689, %v4312, %v4351
  %v4354 = vunpack.c.l.s4 1934713408
  %v4355 = vunpack.c.0.s8 %v4354
  %v4356 = vperm.slane %v4350, %v4355
  %v4358 = vunpack.c.l.s4 1934713408
  %v4359 = vunpack.c.0.s8 %v4358
  %v4360 = vperm.slane %v4352, %v4359
  %v4361 = vrot.slane %v4344, 4
  %v4362 = vsel %vm1689, %v4361, %v4320
  %v4363 = vrot.slane %v4320, 4
  %v4364 = vsel %vm1689, %v4344, %v4363
  %v4365 = vrot.slane %v4348, 4
  %v4366 = vsel %vm1689, %v4365, %v4324
  %v4367 = vrot.slane %v4324, 4
  %v4368 = vsel %vm1689, %v4348, %v4367
  %v4369 = vrot.slane %v4356, 4
  %v4370 = vsel %vm1689, %v4369, %v4332
  %v4371 = vrot.slane %v4332, 4
  %v4372 = vsel %vm1689, %v4356, %v4371
  %v4373 = vrot.slane %v4360, 4
  %v4374 = vsel %vm1689, %v4373, %v4336
  %v4375 = vrot.slane %v4336, 4
  %v4376 = vsel %vm1689, %v4360, %v4375
  %v4377 = vrot.slane %v894, 4
  %v4378 = vsel %vm1689, %v4377, %v868
  %v4379 = vrot.slane %v868, 4
  %v4380 = vsel %vm1689, %v894, %v4379
  %v4382 = vunpack.c.l.s4 1983009808
  %v4383 = vunpack.c.0.s8 %v4382
  %v4384 = vperm.slane %v4378, %v4383
  %v4386 = vunpack.c.l.s4 1983009808
  %v4387 = vunpack.c.0.s8 %v4386
  %v4388 = vperm.slane %v4380, %v4387
  %v4389 = vrot.slane %v907, 4
  %v4390 = vsel %vm1689, %v4389, %v881
  %v4391 = vrot.slane %v881, 4
  %v4392 = vsel %vm1689, %v907, %v4391
  %v4394 = vunpack.c.l.s4 1983009808
  %v4395 = vunpack.c.0.s8 %v4394
  %v4396 = vperm.slane %v4390, %v4395
  %v4398 = vunpack.c.l.s4 1983009808
  %v4399 = vunpack.c.0.s8 %v4398
  %v4400 = vperm.slane %v4392, %v4399
  %v4401 = vrot.slane %v946, 4
  %v4402 = vsel %vm1689, %v4401, %v920
  %v4403 = vrot.slane %v920, 4
  %v4404 = vsel %vm1689, %v946, %v4403
  %v4406 = vunpack.c.l.s4 1983009808
  %v4407 = vunpack.c.0.s8 %v4406
  %v4408 = vperm.slane %v4402, %v4407
  %v4410 = vunpack.c.l.s4 1983009808
  %v4411 = vunpack.c.0.s8 %v4410
  %v4412 = vperm.slane %v4404, %v4411
  %v4413 = vrot.slane %v959, 4
  %v4414 = vsel %vm1689, %v4413, %v933
  %v4415 = vrot.slane %v933, 4
  %v4416 = vsel %vm1689, %v959, %v4415
  %v4418 = vunpack.c.l.s4 1983009808
  %v4419 = vunpack.c.0.s8 %v4418
  %v4420 = vperm.slane %v4414, %v4419
  %v4422 = vunpack.c.l.s4 1983009808
  %v4423 = vunpack.c.0.s8 %v4422
  %v4424 = vperm.slane %v4416, %v4423
  %v4425 = vrot.slane %v4396, 4
  %v4426 = vsel %vm1689, %v4425, %v4384
  %v4427 = vrot.slane %v4384, 4
  %v4428 = vsel %vm1689, %v4396, %v4427
  %v4430 = vunpack.c.l.s4 1934713408
  %v4431 = vunpack.c.0.s8 %v4430
  %v4432 = vperm.slane %v4426, %v4431
  %v4434 = vunpack.c.l.s4 1934713408
  %v4435 = vunpack.c.0.s8 %v4434
  %v4436 = vperm.slane %v4428, %v4435
  %v4437 = vrot.slane %v4400, 4
  %v4438 = vsel %vm1689, %v4437, %v4388
  %v4439 = vrot.slane %v4388, 4
  %v4440 = vsel %vm1689, %v4400, %v4439
  %v4442 = vunpack.c.l.s4 1934713408
  %v4443 = vunpack.c.0.s8 %v4442
  %v4444 = vperm.slane %v4438, %v4443
  %v4446 = vunpack.c.l.s4 1934713408
  %v4447 = vunpack.c.0.s8 %v4446
  %v4448 = vperm.slane %v4440, %v4447
  %v4449 = vrot.slane %v4420, 4
  %v4450 = vsel %vm1689, %v4449, %v4408
  %v4451 = vrot.slane %v4408, 4
  %v4452 = vsel %vm1689, %v4420, %v4451
  %v4454 = vunpack.c.l.s4 1934713408
  %v4455 = vunpack.c.0.s8 %v4454
  %v4456 = vperm.slane %v4450, %v4455
  %v4458 = vunpack.c.l.s4 1934713408
  %v4459 = vunpack.c.0.s8 %v4458
  %v4460 = vperm.slane %v4452, %v4459
  %v4461 = vrot.slane %v4424, 4
  %v4462 = vsel %vm1689, %v4461, %v4412
  %v4463 = vrot.slane %v4412, 4
  %v4464 = vsel %vm1689, %v4424, %v4463
  %v4466 = vunpack.c.l.s4 1934713408
  %v4467 = vunpack.c.0.s8 %v4466
  %v4468 = vperm.slane %v4462, %v4467
  %v4470 = vunpack.c.l.s4 1934713408
  %v4471 = vunpack.c.0.s8 %v4470
  %v4472 = vperm.slane %v4464, %v4471
  %v4473 = vrot.slane %v4456, 4
  %v4474 = vsel %vm1689, %v4473, %v4432
  %v4475 = vrot.slane %v4432, 4
  %v4476 = vsel %vm1689, %v4456, %v4475
  %v4477 = vrot.slane %v4460, 4
  %v4478 = vsel %vm1689, %v4477, %v4436
  %v4479 = vrot.slane %v4436, 4
  %v4480 = vsel %vm1689, %v4460, %v4479
  %v4481 = vrot.slane %v4468, 4
  %v4482 = vsel %vm1689, %v4481, %v4444
  %v4483 = vrot.slane %v4444, 4
  %v4484 = vsel %vm1689, %v4468, %v4483
  %v4485 = vrot.slane %v4472, 4
  %v4486 = vsel %vm1689, %v4485, %v4448
  %v4487 = vrot.slane %v4448, 4
  %v4488 = vsel %vm1689, %v4472, %v4487
  %v4489 = vrot.slane %v998, 4
  %v4490 = vsel %vm1689, %v4489, %v972
  %v4491 = vrot.slane %v972, 4
  %v4492 = vsel %vm1689, %v998, %v4491
  %v4494 = vunpack.c.l.s4 1983009808
  %v4495 = vunpack.c.0.s8 %v4494
  %v4496 = vperm.slane %v4490, %v4495
  %v4498 = vunpack.c.l.s4 1983009808
  %v4499 = vunpack.c.0.s8 %v4498
  %v4500 = vperm.slane %v4492, %v4499
  %v4501 = vrot.slane %v1011, 4
  %v4502 = vsel %vm1689, %v4501, %v985
  %v4503 = vrot.slane %v985, 4
  %v4504 = vsel %vm1689, %v1011, %v4503
  %v4506 = vunpack.c.l.s4 1983009808
  %v4507 = vunpack.c.0.s8 %v4506
  %v4508 = vperm.slane %v4502, %v4507
  %v4510 = vunpack.c.l.s4 1983009808
  %v4511 = vunpack.c.0.s8 %v4510
  %v4512 = vperm.slane %v4504, %v4511
  %v4513 = vrot.slane %v1050, 4
  %v4514 = vsel %vm1689, %v4513, %v1024
  %v4515 = vrot.slane %v1024, 4
  %v4516 = vsel %vm1689, %v1050, %v4515
  %v4518 = vunpack.c.l.s4 1983009808
  %v4519 = vunpack.c.0.s8 %v4518
  %v4520 = vperm.slane %v4514, %v4519
  %v4522 = vunpack.c.l.s4 1983009808
  %v4523 = vunpack.c.0.s8 %v4522
  %v4524 = vperm.slane %v4516, %v4523
  %v4525 = vrot.slane %v1063, 4
  %v4526 = vsel %vm1689, %v4525, %v1037
  %v4527 = vrot.slane %v1037, 4
  %v4528 = vsel %vm1689, %v1063, %v4527
  %v4530 = vunpack.c.l.s4 1983009808
  %v4531 = vunpack.c.0.s8 %v4530
  %v4532 = vperm.slane %v4526, %v4531
  %v4534 = vunpack.c.l.s4 1983009808
  %v4535 = vunpack.c.0.s8 %v4534
  %v4536 = vperm.slane %v4528, %v4535
  %v4537 = vrot.slane %v4508, 4
  %v4538 = vsel %vm1689, %v4537, %v4496
  %v4539 = vrot.slane %v4496, 4
  %v4540 = vsel %vm1689, %v4508, %v4539
  %v4542 = vunpack.c.l.s4 1934713408
  %v4543 = vunpack.c.0.s8 %v4542
  %v4544 = vperm.slane %v4538, %v4543
  %v4546 = vunpack.c.l.s4 1934713408
  %v4547 = vunpack.c.0.s8 %v4546
  %v4548 = vperm.slane %v4540, %v4547
  %v4549 = vrot.slane %v4512, 4
  %v4550 = vsel %vm1689, %v4549, %v4500
  %v4551 = vrot.slane %v4500, 4
  %v4552 = vsel %vm1689, %v4512, %v4551
  %v4554 = vunpack.c.l.s4 1934713408
  %v4555 = vunpack.c.0.s8 %v4554
  %v4556 = vperm.slane %v4550, %v4555
  %v4558 = vunpack.c.l.s4 1934713408
  %v4559 = vunpack.c.0.s8 %v4558
  %v4560 = vperm.slane %v4552, %v4559
  %v4561 = vrot.slane %v4532, 4
  %v4562 = vsel %vm1689, %v4561, %v4520
  %v4563 = vrot.slane %v4520, 4
  %v4564 = vsel %vm1689, %v4532, %v4563
  %v4566 = vunpack.c.l.s4 1934713408
  %v4567 = vunpack.c.0.s8 %v4566
  %v4568 = vperm.slane %v4562, %v4567
  %v4570 = vunpack.c.l.s4 1934713408
  %v4571 = vunpack.c.0.s8 %v4570
  %v4572 = vperm.slane %v4564, %v4571
  %v4573 = vrot.slane %v4536, 4
  %v4574 = vsel %vm1689, %v4573, %v4524
  %v4575 = vrot.slane %v4524, 4
  %v4576 = vsel %vm1689, %v4536, %v4575
  %v4578 = vunpack.c.l.s4 1934713408
  %v4579 = vunpack.c.0.s8 %v4578
  %v4580 = vperm.slane %v4574, %v4579
  %v4582 = vunpack.c.l.s4 1934713408
  %v4583 = vunpack.c.0.s8 %v4582
  %v4584 = vperm.slane %v4576, %v4583
  %v4585 = vrot.slane %v4568, 4
  %v4586 = vsel %vm1689, %v4585, %v4544
  %v4587 = vrot.slane %v4544, 4
  %v4588 = vsel %vm1689, %v4568, %v4587
  %v4589 = vrot.slane %v4572, 4
  %v4590 = vsel %vm1689, %v4589, %v4548
  %v4591 = vrot.slane %v4548, 4
  %v4592 = vsel %vm1689, %v4572, %v4591
  %v4593 = vrot.slane %v4580, 4
  %v4594 = vsel %vm1689, %v4593, %v4556
  %v4595 = vrot.slane %v4556, 4
  %v4596 = vsel %vm1689, %v4580, %v4595
  %v4597 = vrot.slane %v4584, 4
  %v4598 = vsel %vm1689, %v4597, %v4560
  %v4599 = vrot.slane %v4560, 4
  %v4600 = vsel %vm1689, %v4584, %v4599
  %v4601 = vrot.slane %v1102, 4
  %v4602 = vsel %vm1689, %v4601, %v1076
  %v4603 = vrot.slane %v1076, 4
  %v4604 = vsel %vm1689, %v1102, %v4603
  %v4606 = vunpack.c.l.s4 1983009808
  %v4607 = vunpack.c.0.s8 %v4606
  %v4608 = vperm.slane %v4602, %v4607
  %v4610 = vunpack.c.l.s4 1983009808
  %v4611 = vunpack.c.0.s8 %v4610
  %v4612 = vperm.slane %v4604, %v4611
  %v4613 = vrot.slane %v1115, 4
  %v4614 = vsel %vm1689, %v4613, %v1089
  %v4615 = vrot.slane %v1089, 4
  %v4616 = vsel %vm1689, %v1115, %v4615
  %v4618 = vunpack.c.l.s4 1983009808
  %v4619 = vunpack.c.0.s8 %v4618
  %v4620 = vperm.slane %v4614, %v4619
  %v4622 = vunpack.c.l.s4 1983009808
  %v4623 = vunpack.c.0.s8 %v4622
  %v4624 = vperm.slane %v4616, %v4623
  %v4625 = vrot.slane %v1154, 4
  %v4626 = vsel %vm1689, %v4625, %v1128
  %v4627 = vrot.slane %v1128, 4
  %v4628 = vsel %vm1689, %v1154, %v4627
  %v4630 = vunpack.c.l.s4 1983009808
  %v4631 = vunpack.c.0.s8 %v4630
  %v4632 = vperm.slane %v4626, %v4631
  %v4634 = vunpack.c.l.s4 1983009808
  %v4635 = vunpack.c.0.s8 %v4634
  %v4636 = vperm.slane %v4628, %v4635
  %v4637 = vrot.slane %v1167, 4
  %v4638 = vsel %vm1689, %v4637, %v1141
  %v4639 = vrot.slane %v1141, 4
  %v4640 = vsel %vm1689, %v1167, %v4639
  %v4642 = vunpack.c.l.s4 1983009808
  %v4643 = vunpack.c.0.s8 %v4642
  %v4644 = vperm.slane %v4638, %v4643
  %v4646 = vunpack.c.l.s4 1983009808
  %v4647 = vunpack.c.0.s8 %v4646
  %v4648 = vperm.slane %v4640, %v4647
  %v4649 = vrot.slane %v4620, 4
  %v4650 = vsel %vm1689, %v4649, %v4608
  %v4651 = vrot.slane %v4608, 4
  %v4652 = vsel %vm1689, %v4620, %v4651
  %v4654 = vunpack.c.l.s4 1934713408
  %v4655 = vunpack.c.0.s8 %v4654
  %v4656 = vperm.slane %v4650, %v4655
  %v4658 = vunpack.c.l.s4 1934713408
  %v4659 = vunpack.c.0.s8 %v4658
  %v4660 = vperm.slane %v4652, %v4659
  %v4661 = vrot.slane %v4624, 4
  %v4662 = vsel %vm1689, %v4661, %v4612
  %v4663 = vrot.slane %v4612, 4
  %v4664 = vsel %vm1689, %v4624, %v4663
  %v4666 = vunpack.c.l.s4 1934713408
  %v4667 = vunpack.c.0.s8 %v4666
  %v4668 = vperm.slane %v4662, %v4667
  %v4670 = vunpack.c.l.s4 1934713408
  %v4671 = vunpack.c.0.s8 %v4670
  %v4672 = vperm.slane %v4664, %v4671
  %v4673 = vrot.slane %v4644, 4
  %v4674 = vsel %vm1689, %v4673, %v4632
  %v4675 = vrot.slane %v4632, 4
  %v4676 = vsel %vm1689, %v4644, %v4675
  %v4678 = vunpack.c.l.s4 1934713408
  %v4679 = vunpack.c.0.s8 %v4678
  %v4680 = vperm.slane %v4674, %v4679
  %v4682 = vunpack.c.l.s4 1934713408
  %v4683 = vunpack.c.0.s8 %v4682
  %v4684 = vperm.slane %v4676, %v4683
  %v4685 = vrot.slane %v4648, 4
  %v4686 = vsel %vm1689, %v4685, %v4636
  %v4687 = vrot.slane %v4636, 4
  %v4688 = vsel %vm1689, %v4648, %v4687
  %v4690 = vunpack.c.l.s4 1934713408
  %v4691 = vunpack.c.0.s8 %v4690
  %v4692 = vperm.slane %v4686, %v4691
  %v4694 = vunpack.c.l.s4 1934713408
  %v4695 = vunpack.c.0.s8 %v4694
  %v4696 = vperm.slane %v4688, %v4695
  %v4697 = vrot.slane %v4680, 4
  %v4698 = vsel %vm1689, %v4697, %v4656
  %v4699 = vrot.slane %v4656, 4
  %v4700 = vsel %vm1689, %v4680, %v4699
  %v4701 = vrot.slane %v4684, 4
  %v4702 = vsel %vm1689, %v4701, %v4660
  %v4703 = vrot.slane %v4660, 4
  %v4704 = vsel %vm1689, %v4684, %v4703
  %v4705 = vrot.slane %v4692, 4
  %v4706 = vsel %vm1689, %v4705, %v4668
  %v4707 = vrot.slane %v4668, 4
  %v4708 = vsel %vm1689, %v4692, %v4707
  %v4709 = vrot.slane %v4696, 4
  %v4710 = vsel %vm1689, %v4709, %v4672
  %v4711 = vrot.slane %v4672, 4
  %v4712 = vsel %vm1689, %v4696, %v4711
  %v4713 = vrot.slane %v1206, 4
  %v4714 = vsel %vm1689, %v4713, %v1180
  %v4715 = vrot.slane %v1180, 4
  %v4716 = vsel %vm1689, %v1206, %v4715
  %v4718 = vunpack.c.l.s4 1983009808
  %v4719 = vunpack.c.0.s8 %v4718
  %v4720 = vperm.slane %v4714, %v4719
  %v4722 = vunpack.c.l.s4 1983009808
  %v4723 = vunpack.c.0.s8 %v4722
  %v4724 = vperm.slane %v4716, %v4723
  %v4725 = vrot.slane %v1219, 4
  %v4726 = vsel %vm1689, %v4725, %v1193
  %v4727 = vrot.slane %v1193, 4
  %v4728 = vsel %vm1689, %v1219, %v4727
  %v4730 = vunpack.c.l.s4 1983009808
  %v4731 = vunpack.c.0.s8 %v4730
  %v4732 = vperm.slane %v4726, %v4731
  %v4734 = vunpack.c.l.s4 1983009808
  %v4735 = vunpack.c.0.s8 %v4734
  %v4736 = vperm.slane %v4728, %v4735
  %v4737 = vrot.slane %v1258, 4
  %v4738 = vsel %vm1689, %v4737, %v1232
  %v4739 = vrot.slane %v1232, 4
  %v4740 = vsel %vm1689, %v1258, %v4739
  %v4742 = vunpack.c.l.s4 1983009808
  %v4743 = vunpack.c.0.s8 %v4742
  %v4744 = vperm.slane %v4738, %v4743
  %v4746 = vunpack.c.l.s4 1983009808
  %v4747 = vunpack.c.0.s8 %v4746
  %v4748 = vperm.slane %v4740, %v4747
  %v4749 = vrot.slane %v1271, 4
  %v4750 = vsel %vm1689, %v4749, %v1245
  %v4751 = vrot.slane %v1245, 4
  %v4752 = vsel %vm1689, %v1271, %v4751
  %v4754 = vunpack.c.l.s4 1983009808
  %v4755 = vunpack.c.0.s8 %v4754
  %v4756 = vperm.slane %v4750, %v4755
  %v4758 = vunpack.c.l.s4 1983009808
  %v4759 = vunpack.c.0.s8 %v4758
  %v4760 = vperm.slane %v4752, %v4759
  %v4761 = vrot.slane %v4732, 4
  %v4762 = vsel %vm1689, %v4761, %v4720
  %v4763 = vrot.slane %v4720, 4
  %v4764 = vsel %vm1689, %v4732, %v4763
  %v4766 = vunpack.c.l.s4 1934713408
  %v4767 = vunpack.c.0.s8 %v4766
  %v4768 = vperm.slane %v4762, %v4767
  %v4770 = vunpack.c.l.s4 1934713408
  %v4771 = vunpack.c.0.s8 %v4770
  %v4772 = vperm.slane %v4764, %v4771
  %v4773 = vrot.slane %v4736, 4
  %v4774 = vsel %vm1689, %v4773, %v4724
  %v4775 = vrot.slane %v4724, 4
  %v4776 = vsel %vm1689, %v4736, %v4775
  %v4778 = vunpack.c.l.s4 1934713408
  %v4779 = vunpack.c.0.s8 %v4778
  %v4780 = vperm.slane %v4774, %v4779
  %v4782 = vunpack.c.l.s4 1934713408
  %v4783 = vunpack.c.0.s8 %v4782
  %v4784 = vperm.slane %v4776, %v4783
  %v4785 = vrot.slane %v4756, 4
  %v4786 = vsel %vm1689, %v4785, %v4744
  %v4787 = vrot.slane %v4744, 4
  %v4788 = vsel %vm1689, %v4756, %v4787
  %v4790 = vunpack.c.l.s4 1934713408
  %v4791 = vunpack.c.0.s8 %v4790
  %v4792 = vperm.slane %v4786, %v4791
  %v4794 = vunpack.c.l.s4 1934713408
  %v4795 = vunpack.c.0.s8 %v4794
  %v4796 = vperm.slane %v4788, %v4795
  %v4797 = vrot.slane %v4760, 4
  %v4798 = vsel %vm1689, %v4797, %v4748
  %v4799 = vrot.slane %v4748, 4
  %v4800 = vsel %vm1689, %v4760, %v4799
  %v4802 = vunpack.c.l.s4 1934713408
  %v4803 = vunpack.c.0.s8 %v4802
  %v4804 = vperm.slane %v4798, %v4803
  %v4806 = vunpack.c.l.s4 1934713408
  %v4807 = vunpack.c.0.s8 %v4806
  %v4808 = vperm.slane %v4800, %v4807
  %v4809 = vrot.slane %v4792, 4
  %v4810 = vsel %vm1689, %v4809, %v4768
  %v4811 = vrot.slane %v4768, 4
  %v4812 = vsel %vm1689, %v4792, %v4811
  %v4813 = vrot.slane %v4796, 4
  %v4814 = vsel %vm1689, %v4813, %v4772
  %v4815 = vrot.slane %v4772, 4
  %v4816 = vsel %vm1689, %v4796, %v4815
  %v4817 = vrot.slane %v4804, 4
  %v4818 = vsel %vm1689, %v4817, %v4780
  %v4819 = vrot.slane %v4780, 4
  %v4820 = vsel %vm1689, %v4804, %v4819
  %v4821 = vrot.slane %v4808, 4
  %v4822 = vsel %vm1689, %v4821, %v4784
  %v4823 = vrot.slane %v4784, 4
  %v4824 = vsel %vm1689, %v4808, %v4823
  %v4825 = vrot.slane %v1310, 4
  %v4826 = vsel %vm1689, %v4825, %v1284
  %v4827 = vrot.slane %v1284, 4
  %v4828 = vsel %vm1689, %v1310, %v4827
  %v4830 = vunpack.c.l.s4 1983009808
  %v4831 = vunpack.c.0.s8 %v4830
  %v4832 = vperm.slane %v4826, %v4831
  %v4834 = vunpack.c.l.s4 1983009808
  %v4835 = vunpack.c.0.s8 %v4834
  %v4836 = vperm.slane %v4828, %v4835
  %v4837 = vrot.slane %v1323, 4
  %v4838 = vsel %vm1689, %v4837, %v1297
  %v4839 = vrot.slane %v1297, 4
  %v4840 = vsel %vm1689, %v1323, %v4839
  %v4842 = vunpack.c.l.s4 1983009808
  %v4843 = vunpack.c.0.s8 %v4842
  %v4844 = vperm.slane %v4838, %v4843
  %v4846 = vunpack.c.l.s4 1983009808
  %v4847 = vunpack.c.0.s8 %v4846
  %v4848 = vperm.slane %v4840, %v4847
  %v4849 = vrot.slane %v1362, 4
  %v4850 = vsel %vm1689, %v4849, %v1336
  %v4851 = vrot.slane %v1336, 4
  %v4852 = vsel %vm1689, %v1362, %v4851
  %v4854 = vunpack.c.l.s4 1983009808
  %v4855 = vunpack.c.0.s8 %v4854
  %v4856 = vperm.slane %v4850, %v4855
  %v4858 = vunpack.c.l.s4 1983009808
  %v4859 = vunpack.c.0.s8 %v4858
  %v4860 = vperm.slane %v4852, %v4859
  %v4861 = vrot.slane %v1375, 4
  %v4862 = vsel %vm1689, %v4861, %v1349
  %v4863 = vrot.slane %v1349, 4
  %v4864 = vsel %vm1689, %v1375, %v4863
  %v4866 = vunpack.c.l.s4 1983009808
  %v4867 = vunpack.c.0.s8 %v4866
  %v4868 = vperm.slane %v4862, %v4867
  %v4870 = vunpack.c.l.s4 1983009808
  %v4871 = vunpack.c.0.s8 %v4870
  %v4872 = vperm.slane %v4864, %v4871
  %v4873 = vrot.slane %v4844, 4
  %v4874 = vsel %vm1689, %v4873, %v4832
  %v4875 = vrot.slane %v4832, 4
  %v4876 = vsel %vm1689, %v4844, %v4875
  %v4878 = vunpack.c.l.s4 1934713408
  %v4879 = vunpack.c.0.s8 %v4878
  %v4880 = vperm.slane %v4874, %v4879
  %v4882 = vunpack.c.l.s4 1934713408
  %v4883 = vunpack.c.0.s8 %v4882
  %v4884 = vperm.slane %v4876, %v4883
  %v4885 = vrot.slane %v4848, 4
  %v4886 = vsel %vm1689, %v4885, %v4836
  %v4887 = vrot.slane %v4836, 4
  %v4888 = vsel %vm1689, %v4848, %v4887
  %v4890 = vunpack.c.l.s4 1934713408
  %v4891 = vunpack.c.0.s8 %v4890
  %v4892 = vperm.slane %v4886, %v4891
  %v4894 = vunpack.c.l.s4 1934713408
  %v4895 = vunpack.c.0.s8 %v4894
  %v4896 = vperm.slane %v4888, %v4895
  %v4897 = vrot.slane %v4868, 4
  %v4898 = vsel %vm1689, %v4897, %v4856
  %v4899 = vrot.slane %v4856, 4
  %v4900 = vsel %vm1689, %v4868, %v4899
  %v4902 = vunpack.c.l.s4 1934713408
  %v4903 = vunpack.c.0.s8 %v4902
  %v4904 = vperm.slane %v4898, %v4903
  %v4906 = vunpack.c.l.s4 1934713408
  %v4907 = vunpack.c.0.s8 %v4906
  %v4908 = vperm.slane %v4900, %v4907
  %v4909 = vrot.slane %v4872, 4
  %v4910 = vsel %vm1689, %v4909, %v4860
  %v4911 = vrot.slane %v4860, 4
  %v4912 = vsel %vm1689, %v4872, %v4911
  %v4914 = vunpack.c.l.s4 1934713408
  %v4915 = vunpack.c.0.s8 %v4914
  %v4916 = vperm.slane %v4910, %v4915
  %v4918 = vunpack.c.l.s4 1934713408
  %v4919 = vunpack.c.0.s8 %v4918
  %v4920 = vperm.slane %v4912, %v4919
  %v4921 = vrot.slane %v4904, 4
  %v4922 = vsel %vm1689, %v4921, %v4880
  %v4923 = vrot.slane %v4880, 4
  %v4924 = vsel %vm1689, %v4904, %v4923
  %v4925 = vrot.slane %v4908, 4
  %v4926 = vsel %vm1689, %v4925, %v4884
  %v4927 = vrot.slane %v4884, 4
  %v4928 = vsel %vm1689, %v4908, %v4927
  %v4929 = vrot.slane %v4916, 4
  %v4930 = vsel %vm1689, %v4929, %v4892
  %v4931 = vrot.slane %v4892, 4
  %v4932 = vsel %vm1689, %v4916, %v4931
  %v4933 = vrot.slane %v4920, 4
  %v4934 = vsel %vm1689, %v4933, %v4896
  %v4935 = vrot.slane %v4896, 4
  %v4936 = vsel %vm1689, %v4920, %v4935
  %v4937 = vrot.slane %v1414, 4
  %v4938 = vsel %vm1689, %v4937, %v1388
  %v4939 = vrot.slane %v1388, 4
  %v4940 = vsel %vm1689, %v1414, %v4939
  %v4942 = vunpack.c.l.s4 1983009808
  %v4943 = vunpack.c.0.s8 %v4942
  %v4944 = vperm.slane %v4938, %v4943
  %v4946 = vunpack.c.l.s4 1983009808
  %v4947 = vunpack.c.0.s8 %v4946
  %v4948 = vperm.slane %v4940, %v4947
  %v4949 = vrot.slane %v1427, 4
  %v4950 = vsel %vm1689, %v4949, %v1401
  %v4951 = vrot.slane %v1401, 4
  %v4952 = vsel %vm1689, %v1427, %v4951
  %v4954 = vunpack.c.l.s4 1983009808
  %v4955 = vunpack.c.0.s8 %v4954
  %v4956 = vperm.slane %v4950, %v4955
  %v4958 = vunpack.c.l.s4 1983009808
  %v4959 = vunpack.c.0.s8 %v4958
  %v4960 = vperm.slane %v4952, %v4959
  %v4961 = vrot.slane %v1466, 4
  %v4962 = vsel %vm1689, %v4961, %v1440
  %v4963 = vrot.slane %v1440, 4
  %v4964 = vsel %vm1689, %v1466, %v4963
  %v4966 = vunpack.c.l.s4 1983009808
  %v4967 = vunpack.c.0.s8 %v4966
  %v4968 = vperm.slane %v4962, %v4967
  %v4970 = vunpack.c.l.s4 1983009808
  %v4971 = vunpack.c.0.s8 %v4970
  %v4972 = vperm.slane %v4964, %v4971
  %v4973 = vrot.slane %v1479, 4
  %v4974 = vsel %vm1689, %v4973, %v1453
  %v4975 = vrot.slane %v1453, 4
  %v4976 = vsel %vm1689, %v1479, %v4975
  %v4978 = vunpack.c.l.s4 1983009808
  %v4979 = vunpack.c.0.s8 %v4978
  %v4980 = vperm.slane %v4974, %v4979
  %v4982 = vunpack.c.l.s4 1983009808
  %v4983 = vunpack.c.0.s8 %v4982
  %v4984 = vperm.slane %v4976, %v4983
  %v4985 = vrot.slane %v4956, 4
  %v4986 = vsel %vm1689, %v4985, %v4944
  %v4987 = vrot.slane %v4944, 4
  %v4988 = vsel %vm1689, %v4956, %v4987
  %v4990 = vunpack.c.l.s4 1934713408
  %v4991 = vunpack.c.0.s8 %v4990
  %v4992 = vperm.slane %v4986, %v4991
  %v4994 = vunpack.c.l.s4 1934713408
  %v4995 = vunpack.c.0.s8 %v4994
  %v4996 = vperm.slane %v4988, %v4995
  %v4997 = vrot.slane %v4960, 4
  %v4998 = vsel %vm1689, %v4997, %v4948
  %v4999 = vrot.slane %v4948, 4
  %v5000 = vsel %vm1689, %v4960, %v4999
  %v5002 = vunpack.c.l.s4 1934713408
  %v5003 = vunpack.c.0.s8 %v5002
  %v5004 = vperm.slane %v4998, %v5003
  %v5006 = vunpack.c.l.s4 1934713408
  %v5007 = vunpack.c.0.s8 %v5006
  %v5008 = vperm.slane %v5000, %v5007
  %v5009 = vrot.slane %v4980, 4
  %v5010 = vsel %vm1689, %v5009, %v4968
  %v5011 = vrot.slane %v4968, 4
  %v5012 = vsel %vm1689, %v4980, %v5011
  %v5014 = vunpack.c.l.s4 1934713408
  %v5015 = vunpack.c.0.s8 %v5014
  %v5016 = vperm.slane %v5010, %v5015
  %v5018 = vunpack.c.l.s4 1934713408
  %v5019 = vunpack.c.0.s8 %v5018
  %v5020 = vperm.slane %v5012, %v5019
  %v5021 = vrot.slane %v4984, 4
  %v5022 = vsel %vm1689, %v5021, %v4972
  %v5023 = vrot.slane %v4972, 4
  %v5024 = vsel %vm1689, %v4984, %v5023
  %v5026 = vunpack.c.l.s4 1934713408
  %v5027 = vunpack.c.0.s8 %v5026
  %v5028 = vperm.slane %v5022, %v5027
  %v5030 = vunpack.c.l.s4 1934713408
  %v5031 = vunpack.c.0.s8 %v5030
  %v5032 = vperm.slane %v5024, %v5031
  %v5033 = vrot.slane %v5016, 4
  %v5034 = vsel %vm1689, %v5033, %v4992
  %v5035 = vrot.slane %v4992, 4
  %v5036 = vsel %vm1689, %v5016, %v5035
  %v5037 = vrot.slane %v5020, 4
  %v5038 = vsel %vm1689, %v5037, %v4996
  %v5039 = vrot.slane %v4996, 4
  %v5040 = vsel %vm1689, %v5020, %v5039
  %v5041 = vrot.slane %v5028, 4
  %v5042 = vsel %vm1689, %v5041, %v5004
  %v5043 = vrot.slane %v5004, 4
  %v5044 = vsel %vm1689, %v5028, %v5043
  %v5045 = vrot.slane %v5032, 4
  %v5046 = vsel %vm1689, %v5045, %v5008
  %v5047 = vrot.slane %v5008, 4
  %v5048 = vsel %vm1689, %v5032, %v5047
  %v5049 = vrot.slane %v1518, 4
  %v5050 = vsel %vm1689, %v5049, %v1492
  %v5051 = vrot.slane %v1492, 4
  %v5052 = vsel %vm1689, %v1518, %v5051
  %v5054 = vunpack.c.l.s4 1983009808
  %v5055 = vunpack.c.0.s8 %v5054
  %v5056 = vperm.slane %v5050, %v5055
  %v5058 = vunpack.c.l.s4 1983009808
  %v5059 = vunpack.c.0.s8 %v5058
  %v5060 = vperm.slane %v5052, %v5059
  %v5061 = vrot.slane %v1531, 4
  %v5062 = vsel %vm1689, %v5061, %v1505
  %v5063 = vrot.slane %v1505, 4
  %v5064 = vsel %vm1689, %v1531, %v5063
  %v5066 = vunpack.c.l.s4 1983009808
  %v5067 = vunpack.c.0.s8 %v5066
  %v5068 = vperm.slane %v5062, %v5067
  %v5070 = vunpack.c.l.s4 1983009808
  %v5071 = vunpack.c.0.s8 %v5070
  %v5072 = vperm.slane %v5064, %v5071
  %v5073 = vrot.slane %v1570, 4
  %v5074 = vsel %vm1689, %v5073, %v1544
  %v5075 = vrot.slane %v1544, 4
  %v5076 = vsel %vm1689, %v1570, %v5075
  %v5078 = vunpack.c.l.s4 1983009808
  %v5079 = vunpack.c.0.s8 %v5078
  %v5080 = vperm.slane %v5074, %v5079
  %v5082 = vunpack.c.l.s4 1983009808
  %v5083 = vunpack.c.0.s8 %v5082
  %v5084 = vperm.slane %v5076, %v5083
  %v5085 = vrot.slane %v1583, 4
  %v5086 = vsel %vm1689, %v5085, %v1557
  %v5087 = vrot.slane %v1557, 4
  %v5088 = vsel %vm1689, %v1583, %v5087
  %v5090 = vunpack.c.l.s4 1983009808
  %v5091 = vunpack.c.0.s8 %v5090
  %v5092 = vperm.slane %v5086, %v5091
  %v5094 = vunpack.c.l.s4 1983009808
  %v5095 = vunpack.c.0.s8 %v5094
  %v5096 = vperm.slane %v5088, %v5095
  %v5097 = vrot.slane %v5068, 4
  %v5098 = vsel %vm1689, %v5097, %v5056
  %v5099 = vrot.slane %v5056, 4
  %v5100 = vsel %vm1689, %v5068, %v5099
  %v5102 = vunpack.c.l.s4 1934713408
  %v5103 = vunpack.c.0.s8 %v5102
  %v5104 = vperm.slane %v5098, %v5103
  %v5106 = vunpack.c.l.s4 1934713408
  %v5107 = vunpack.c.0.s8 %v5106
  %v5108 = vperm.slane %v5100, %v5107
  %v5109 = vrot.slane %v5072, 4
  %v5110 = vsel %vm1689, %v5109, %v5060
  %v5111 = vrot.slane %v5060, 4
  %v5112 = vsel %vm1689, %v5072, %v5111
  %v5114 = vunpack.c.l.s4 1934713408
  %v5115 = vunpack.c.0.s8 %v5114
  %v5116 = vperm.slane %v5110, %v5115
  %v5118 = vunpack.c.l.s4 1934713408
  %v5119 = vunpack.c.0.s8 %v5118
  %v5120 = vperm.slane %v5112, %v5119
  %v5121 = vrot.slane %v5092, 4
  %v5122 = vsel %vm1689, %v5121, %v5080
  %v5123 = vrot.slane %v5080, 4
  %v5124 = vsel %vm1689, %v5092, %v5123
  %v5126 = vunpack.c.l.s4 1934713408
  %v5127 = vunpack.c.0.s8 %v5126
  %v5128 = vperm.slane %v5122, %v5127
  %v5130 = vunpack.c.l.s4 1934713408
  %v5131 = vunpack.c.0.s8 %v5130
  %v5132 = vperm.slane %v5124, %v5131
  %v5133 = vrot.slane %v5096, 4
  %v5134 = vsel %vm1689, %v5133, %v5084
  %v5135 = vrot.slane %v5084, 4
  %v5136 = vsel %vm1689, %v5096, %v5135
  %v5138 = vunpack.c.l.s4 1934713408
  %v5139 = vunpack.c.0.s8 %v5138
  %v5140 = vperm.slane %v5134, %v5139
  %v5142 = vunpack.c.l.s4 1934713408
  %v5143 = vunpack.c.0.s8 %v5142
  %v5144 = vperm.slane %v5136, %v5143
  %v5145 = vrot.slane %v5128, 4
  %v5146 = vsel %vm1689, %v5145, %v5104
  %v5147 = vrot.slane %v5104, 4
  %v5148 = vsel %vm1689, %v5128, %v5147
  %v5149 = vrot.slane %v5132, 4
  %v5150 = vsel %vm1689, %v5149, %v5108
  %v5151 = vrot.slane %v5108, 4
  %v5152 = vsel %vm1689, %v5132, %v5151
  %v5153 = vrot.slane %v5140, 4
  %v5154 = vsel %vm1689, %v5153, %v5116
  %v5155 = vrot.slane %v5116, 4
  %v5156 = vsel %vm1689, %v5140, %v5155
  %v5157 = vrot.slane %v5144, 4
  %v5158 = vsel %vm1689, %v5157, %v5120
  %v5159 = vrot.slane %v5120, 4
  %v5160 = vsel %vm1689, %v5144, %v5159
  %v5161 = vrot.slane %v1622, 4
  %v5162 = vsel %vm1689, %v5161, %v1596
  %v5163 = vrot.slane %v1596, 4
  %v5164 = vsel %vm1689, %v1622, %v5163
  %v5166 = vunpack.c.l.s4 1983009808
  %v5167 = vunpack.c.0.s8 %v5166
  %v5168 = vperm.slane %v5162, %v5167
  %v5170 = vunpack.c.l.s4 1983009808
  %v5171 = vunpack.c.0.s8 %v5170
  %v5172 = vperm.slane %v5164, %v5171
  %v5173 = vrot.slane %v1635, 4
  %v5174 = vsel %vm1689, %v5173, %v1609
  %v5175 = vrot.slane %v1609, 4
  %v5176 = vsel %vm1689, %v1635, %v5175
  %v5178 = vunpack.c.l.s4 1983009808
  %v5179 = vunpack.c.0.s8 %v5178
  %v5180 = vperm.slane %v5174, %v5179
  %v5182 = vunpack.c.l.s4 1983009808
  %v5183 = vunpack.c.0.s8 %v5182
  %v5184 = vperm.slane %v5176, %v5183
  %v5185 = vrot.slane %v1674, 4
  %v5186 = vsel %vm1689, %v5185, %v1648
  %v5187 = vrot.slane %v1648, 4
  %v5188 = vsel %vm1689, %v1674, %v5187
  %v5190 = vunpack.c.l.s4 1983009808
  %v5191 = vunpack.c.0.s8 %v5190
  %v5192 = vperm.slane %v5186, %v5191
  %v5194 = vunpack.c.l.s4 1983009808
  %v5195 = vunpack.c.0.s8 %v5194
  %v5196 = vperm.slane %v5188, %v5195
  %v5197 = vrot.slane %v1687, 4
  %v5198 = vsel %vm1689, %v5197, %v1661
  %v5199 = vrot.slane %v1661, 4
  %v5200 = vsel %vm1689, %v1687, %v5199
  %v5202 = vunpack.c.l.s4 1983009808
  %v5203 = vunpack.c.0.s8 %v5202
  %v5204 = vperm.slane %v5198, %v5203
  %v5206 = vunpack.c.l.s4 1983009808
  %v5207 = vunpack.c.0.s8 %v5206
  %v5208 = vperm.slane %v5200, %v5207
  %v5209 = vrot.slane %v5180, 4
  %v5210 = vsel %vm1689, %v5209, %v5168
  %v5211 = vrot.slane %v5168, 4
  %v5212 = vsel %vm1689, %v5180, %v5211
  %v5214 = vunpack.c.l.s4 1934713408
  %v5215 = vunpack.c.0.s8 %v5214
  %v5216 = vperm.slane %v5210, %v5215
  %v5218 = vunpack.c.l.s4 1934713408
  %v5219 = vunpack.c.0.s8 %v5218
  %v5220 = vperm.slane %v5212, %v5219
  %v5221 = vrot.slane %v5184, 4
  %v5222 = vsel %vm1689, %v5221, %v5172
  %v5223 = vrot.slane %v5172, 4
  %v5224 = vsel %vm1689, %v5184, %v5223
  %v5226 = vunpack.c.l.s4 1934713408
  %v5227 = vunpack.c.0.s8 %v5226
  %v5228 = vperm.slane %v5222, %v5227
  %v5230 = vunpack.c.l.s4 1934713408
  %v5231 = vunpack.c.0.s8 %v5230
  %v5232 = vperm.slane %v5224, %v5231
  %v5233 = vrot.slane %v5204, 4
  %v5234 = vsel %vm1689, %v5233, %v5192
  %v5235 = vrot.slane %v5192, 4
  %v5236 = vsel %vm1689, %v5204, %v5235
  %v5238 = vunpack.c.l.s4 1934713408
  %v5239 = vunpack.c.0.s8 %v5238
  %v5240 = vperm.slane %v5234, %v5239
  %v5242 = vunpack.c.l.s4 1934713408
  %v5243 = vunpack.c.0.s8 %v5242
  %v5244 = vperm.slane %v5236, %v5243
  %v5245 = vrot.slane %v5208, 4
  %v5246 = vsel %vm1689, %v5245, %v5196
  %v5247 = vrot.slane %v5196, 4
  %v5248 = vsel %vm1689, %v5208, %v5247
  %v5250 = vunpack.c.l.s4 1934713408
  %v5251 = vunpack.c.0.s8 %v5250
  %v5252 = vperm.slane %v5246, %v5251
  %v5254 = vunpack.c.l.s4 1934713408
  %v5255 = vunpack.c.0.s8 %v5254
  %v5256 = vperm.slane %v5248, %v5255
  %v5257 = vrot.slane %v5240, 4
  %v5258 = vsel %vm1689, %v5257, %v5216
  %v5259 = vrot.slane %v5216, 4
  %v5260 = vsel %vm1689, %v5240, %v5259
  %v5261 = vrot.slane %v5244, 4
  %v5262 = vsel %vm1689, %v5261, %v5220
  %v5263 = vrot.slane %v5220, 4
  %v5264 = vsel %vm1689, %v5244, %v5263
  %v5265 = vrot.slane %v5252, 4
  %v5266 = vsel %vm1689, %v5265, %v5228
  %v5267 = vrot.slane %v5228, 4
  %v5268 = vsel %vm1689, %v5252, %v5267
  %v5269 = vrot.slane %v5256, 4
  %v5270 = vsel %vm1689, %v5269, %v5232
  %v5271 = vrot.slane %v5232, 4
  %v5272 = vsel %vm1689, %v5256, %v5271
  %5289 = vrot.lane.b32.xlu0 %v1788, 2
  %v5290 = vpop.permute.xlu0 %5289
  %5291 = vrot.lane.b32.xlu0 %v1900, 2
  %v5292 = vpop.permute.xlu0 %5291
  %5293 = vrot.lane.b32.xlu0 %v2012, 2
  %v5294 = vpop.permute.xlu0 %5293
  %5295 = vrot.lane.b32.xlu0 %v2124, 2
  %v5296 = vpop.permute.xlu0 %5295
  %5297 = vrot.lane.b32.xlu0 %v2236, 2
  %v5298 = vpop.permute.xlu0 %5297
  %5299 = vrot.lane.b32.xlu0 %v2348, 2
  %v5300 = vpop.permute.xlu0 %5299
  %5301 = vrot.lane.b32.xlu0 %v2460, 2
  %v5302 = vpop.permute.xlu0 %5301
  %5303 = vrot.lane.b32.xlu0 %v2572, 2
  %v5304 = vpop.permute.xlu0 %5303
  %5305 = vrot.lane.b32.xlu0 %v2684, 2
  %v5306 = vpop.permute.xlu0 %5305
  %5307 = vrot.lane.b32.xlu0 %v2796, 2
  %v5308 = vpop.permute.xlu0 %5307
  %5309 = vrot.lane.b32.xlu0 %v2908, 2
  %v5310 = vpop.permute.xlu0 %5309
  %5311 = vrot.lane.b32.xlu0 %v3020, 2
  %v5312 = vpop.permute.xlu0 %5311
  %5313 = vrot.lane.b32.xlu0 %v3132, 2
  %v5314 = vpop.permute.xlu0 %5313
  %5315 = vrot.lane.b32.xlu0 %v3244, 2
  %v5316 = vpop.permute.xlu0 %5315
  %5317 = vrot.lane.b32.xlu0 %v3356, 2
  %v5318 = vpop.permute.xlu0 %5317
  %5319 = vrot.lane.b32.xlu0 %v3468, 2
  %v5320 = vpop.permute.xlu0 %5319
  %5353 = vrot.lane.b32.xlu0 %v1790, 4
  %v5354 = vpop.permute.xlu0 %5353
  %5355 = vrot.lane.b32.xlu0 %v1902, 4
  %v5356 = vpop.permute.xlu0 %5355
  %5357 = vrot.lane.b32.xlu0 %v2014, 4
  %v5358 = vpop.permute.xlu0 %5357
  %5359 = vrot.lane.b32.xlu0 %v2126, 4
  %v5360 = vpop.permute.xlu0 %5359
  %5361 = vrot.lane.b32.xlu0 %v2238, 4
  %v5362 = vpop.permute.xlu0 %5361
  %5363 = vrot.lane.b32.xlu0 %v2350, 4
  %v5364 = vpop.permute.xlu0 %5363
  %5365 = vrot.lane.b32.xlu0 %v2462, 4
  %v5366 = vpop.permute.xlu0 %5365
  %5367 = vrot.lane.b32.xlu0 %v2574, 4
  %v5368 = vpop.permute.xlu0 %5367
  %5369 = vrot.lane.b32.xlu0 %v2686, 4
  %v5370 = vpop.permute.xlu0 %5369
  %5371 = vrot.lane.b32.xlu0 %v2798, 4
  %v5372 = vpop.permute.xlu0 %5371
  %5373 = vrot.lane.b32.xlu0 %v2910, 4
  %v5374 = vpop.permute.xlu0 %5373
  %5375 = vrot.lane.b32.xlu0 %v3022, 4
  %v5376 = vpop.permute.xlu0 %5375
  %5377 = vrot.lane.b32.xlu0 %v3134, 4
  %v5378 = vpop.permute.xlu0 %5377
  %5379 = vrot.lane.b32.xlu0 %v3246, 4
  %v5380 = vpop.permute.xlu0 %5379
  %5381 = vrot.lane.b32.xlu0 %v3358, 4
  %v5382 = vpop.permute.xlu0 %5381
  %5383 = vrot.lane.b32.xlu0 %v3470, 4
  %v5384 = vpop.permute.xlu0 %5383
  %5417 = vrot.lane.b32.xlu0 %v1792, 6
  %v5418 = vpop.permute.xlu0 %5417
  %5419 = vrot.lane.b32.xlu0 %v1904, 6
  %v5420 = vpop.permute.xlu0 %5419
  %5421 = vrot.lane.b32.xlu0 %v2016, 6
  %v5422 = vpop.permute.xlu0 %5421
  %5423 = vrot.lane.b32.xlu0 %v2128, 6
  %v5424 = vpop.permute.xlu0 %5423
  %5425 = vrot.lane.b32.xlu0 %v2240, 6
  %v5426 = vpop.permute.xlu0 %5425
  %5427 = vrot.lane.b32.xlu0 %v2352, 6
  %v5428 = vpop.permute.xlu0 %5427
  %5429 = vrot.lane.b32.xlu0 %v2464, 6
  %v5430 = vpop.permute.xlu0 %5429
  %5431 = vrot.lane.b32.xlu0 %v2576, 6
  %v5432 = vpop.permute.xlu0 %5431
  %5433 = vrot.lane.b32.xlu0 %v2688, 6
  %v5434 = vpop.permute.xlu0 %5433
  %5435 = vrot.lane.b32.xlu0 %v2800, 6
  %v5436 = vpop.permute.xlu0 %5435
  %5437 = vrot.lane.b32.xlu0 %v2912, 6
  %v5438 = vpop.permute.xlu0 %5437
  %5439 = vrot.lane.b32.xlu0 %v3024, 6
  %v5440 = vpop.permute.xlu0 %5439
  %5441 = vrot.lane.b32.xlu0 %v3136, 6
  %v5442 = vpop.permute.xlu0 %5441
  %5443 = vrot.lane.b32.xlu0 %v3248, 6
  %v5444 = vpop.permute.xlu0 %5443
  %5445 = vrot.lane.b32.xlu0 %v3360, 6
  %v5446 = vpop.permute.xlu0 %5445
  %5447 = vrot.lane.b32.xlu0 %v3472, 6
  %v5448 = vpop.permute.xlu0 %5447
  %5481 = vrot.lane.b32.xlu0 %v1794, 8
  %v5482 = vpop.permute.xlu0 %5481
  %5483 = vrot.lane.b32.xlu0 %v1906, 8
  %v5484 = vpop.permute.xlu0 %5483
  %5485 = vrot.lane.b32.xlu0 %v2018, 8
  %v5486 = vpop.permute.xlu0 %5485
  %5487 = vrot.lane.b32.xlu0 %v2130, 8
  %v5488 = vpop.permute.xlu0 %5487
  %5489 = vrot.lane.b32.xlu0 %v2242, 8
  %v5490 = vpop.permute.xlu0 %5489
  %5491 = vrot.lane.b32.xlu0 %v2354, 8
  %v5492 = vpop.permute.xlu0 %5491
  %5493 = vrot.lane.b32.xlu0 %v2466, 8
  %v5494 = vpop.permute.xlu0 %5493
  %5495 = vrot.lane.b32.xlu0 %v2578, 8
  %v5496 = vpop.permute.xlu0 %5495
  %5497 = vrot.lane.b32.xlu0 %v2690, 8
  %v5498 = vpop.permute.xlu0 %5497
  %5499 = vrot.lane.b32.xlu0 %v2802, 8
  %v5500 = vpop.permute.xlu0 %5499
  %5501 = vrot.lane.b32.xlu0 %v2914, 8
  %v5502 = vpop.permute.xlu0 %5501
  %5503 = vrot.lane.b32.xlu0 %v3026, 8
  %v5504 = vpop.permute.xlu0 %5503
  %5505 = vrot.lane.b32.xlu0 %v3138, 8
  %v5506 = vpop.permute.xlu0 %5505
  %5507 = vrot.lane.b32.xlu0 %v3250, 8
  %v5508 = vpop.permute.xlu0 %5507
  %5509 = vrot.lane.b32.xlu0 %v3362, 8
  %v5510 = vpop.permute.xlu0 %5509
  %5511 = vrot.lane.b32.xlu0 %v3474, 8
  %v5512 = vpop.permute.xlu0 %5511
  %5545 = vrot.lane.b32.xlu0 %v1796, 10
  %v5546 = vpop.permute.xlu0 %5545
  %5547 = vrot.lane.b32.xlu0 %v1908, 10
  %v5548 = vpop.permute.xlu0 %5547
  %5549 = vrot.lane.b32.xlu0 %v2020, 10
  %v5550 = vpop.permute.xlu0 %5549
  %5551 = vrot.lane.b32.xlu0 %v2132, 10
  %v5552 = vpop.permute.xlu0 %5551
  %5553 = vrot.lane.b32.xlu0 %v2244, 10
  %v5554 = vpop.permute.xlu0 %5553
  %5555 = vrot.lane.b32.xlu0 %v2356, 10
  %v5556 = vpop.permute.xlu0 %5555
  %5557 = vrot.lane.b32.xlu0 %v2468, 10
  %v5558 = vpop.permute.xlu0 %5557
  %5559 = vrot.lane.b32.xlu0 %v2580, 10
  %v5560 = vpop.permute.xlu0 %5559
  %5561 = vrot.lane.b32.xlu0 %v2692, 10
  %v5562 = vpop.permute.xlu0 %5561
  %5563 = vrot.lane.b32.xlu0 %v2804, 10
  %v5564 = vpop.permute.xlu0 %5563
  %5565 = vrot.lane.b32.xlu0 %v2916, 10
  %v5566 = vpop.permute.xlu0 %5565
  %5567 = vrot.lane.b32.xlu0 %v3028, 10
  %v5568 = vpop.permute.xlu0 %5567
  %5569 = vrot.lane.b32.xlu0 %v3140, 10
  %v5570 = vpop.permute.xlu0 %5569
  %5571 = vrot.lane.b32.xlu0 %v3252, 10
  %v5572 = vpop.permute.xlu0 %5571
  %5573 = vrot.lane.b32.xlu0 %v3364, 10
  %v5574 = vpop.permute.xlu0 %5573
  %5575 = vrot.lane.b32.xlu0 %v3476, 10
  %v5576 = vpop.permute.xlu0 %5575
  %5609 = vrot.lane.b32.xlu0 %v1798, 12
  %v5610 = vpop.permute.xlu0 %5609
  %5611 = vrot.lane.b32.xlu0 %v1910, 12
  %v5612 = vpop.permute.xlu0 %5611
  %5613 = vrot.lane.b32.xlu0 %v2022, 12
  %v5614 = vpop.permute.xlu0 %5613
  %5615 = vrot.lane.b32.xlu0 %v2134, 12
  %v5616 = vpop.permute.xlu0 %5615
  %5617 = vrot.lane.b32.xlu0 %v2246, 12
  %v5618 = vpop.permute.xlu0 %5617
  %5619 = vrot.lane.b32.xlu0 %v2358, 12
  %v5620 = vpop.permute.xlu0 %5619
  %5621 = vrot.lane.b32.xlu0 %v2470, 12
  %v5622 = vpop.permute.xlu0 %5621
  %5623 = vrot.lane.b32.xlu0 %v2582, 12
  %v5624 = vpop.permute.xlu0 %5623
  %5625 = vrot.lane.b32.xlu0 %v2694, 12
  %v5626 = vpop.permute.xlu0 %5625
  %5627 = vrot.lane.b32.xlu0 %v2806, 12
  %v5628 = vpop.permute.xlu0 %5627
  %5629 = vrot.lane.b32.xlu0 %v2918, 12
  %v5630 = vpop.permute.xlu0 %5629
  %5631 = vrot.lane.b32.xlu0 %v3030, 12
  %v5632 = vpop.permute.xlu0 %5631
  %5633 = vrot.lane.b32.xlu0 %v3142, 12
  %v5634 = vpop.permute.xlu0 %5633
  %5635 = vrot.lane.b32.xlu0 %v3254, 12
  %v5636 = vpop.permute.xlu0 %5635
  %5637 = vrot.lane.b32.xlu0 %v3366, 12
  %v5638 = vpop.permute.xlu0 %5637
  %5639 = vrot.lane.b32.xlu0 %v3478, 12
  %v5640 = vpop.permute.xlu0 %5639
  %5673 = vrot.lane.b32.xlu0 %v1800, 14
  %v5674 = vpop.permute.xlu0 %5673
  %5675 = vrot.lane.b32.xlu0 %v1912, 14
  %v5676 = vpop.permute.xlu0 %5675
  %5677 = vrot.lane.b32.xlu0 %v2024, 14
  %v5678 = vpop.permute.xlu0 %5677
  %5679 = vrot.lane.b32.xlu0 %v2136, 14
  %v5680 = vpop.permute.xlu0 %5679
  %5681 = vrot.lane.b32.xlu0 %v2248, 14
  %v5682 = vpop.permute.xlu0 %5681
  %5683 = vrot.lane.b32.xlu0 %v2360, 14
  %v5684 = vpop.permute.xlu0 %5683
  %5685 = vrot.lane.b32.xlu0 %v2472, 14
  %v5686 = vpop.permute.xlu0 %5685
  %5687 = vrot.lane.b32.xlu0 %v2584, 14
  %v5688 = vpop.permute.xlu0 %5687
  %5689 = vrot.lane.b32.xlu0 %v2696, 14
  %v5690 = vpop.permute.xlu0 %5689
  %5691 = vrot.lane.b32.xlu0 %v2808, 14
  %v5692 = vpop.permute.xlu0 %5691
  %5693 = vrot.lane.b32.xlu0 %v2920, 14
  %v5694 = vpop.permute.xlu0 %5693
  %5695 = vrot.lane.b32.xlu0 %v3032, 14
  %v5696 = vpop.permute.xlu0 %5695
  %5697 = vrot.lane.b32.xlu0 %v3144, 14
  %v5698 = vpop.permute.xlu0 %5697
  %5699 = vrot.lane.b32.xlu0 %v3256, 14
  %v5700 = vpop.permute.xlu0 %5699
  %5701 = vrot.lane.b32.xlu0 %v3368, 14
  %v5702 = vpop.permute.xlu0 %5701
  %5703 = vrot.lane.b32.xlu0 %v3480, 14
  %v5704 = vpop.permute.xlu0 %5703
  %5737 = vrot.lane.b32.xlu0 %v3578, 16
  %v5738 = vpop.permute.xlu0 %5737
  %5739 = vrot.lane.b32.xlu0 %v3690, 16
  %v5740 = vpop.permute.xlu0 %5739
  %5741 = vrot.lane.b32.xlu0 %v3802, 16
  %v5742 = vpop.permute.xlu0 %5741
  %5743 = vrot.lane.b32.xlu0 %v3914, 16
  %v5744 = vpop.permute.xlu0 %5743
  %5745 = vrot.lane.b32.xlu0 %v4026, 16
  %v5746 = vpop.permute.xlu0 %5745
  %5747 = vrot.lane.b32.xlu0 %v4138, 16
  %v5748 = vpop.permute.xlu0 %5747
  %5749 = vrot.lane.b32.xlu0 %v4250, 16
  %v5750 = vpop.permute.xlu0 %5749
  %5751 = vrot.lane.b32.xlu0 %v4362, 16
  %v5752 = vpop.permute.xlu0 %5751
  %5753 = vrot.lane.b32.xlu0 %v4474, 16
  %v5754 = vpop.permute.xlu0 %5753
  %5755 = vrot.lane.b32.xlu0 %v4586, 16
  %v5756 = vpop.permute.xlu0 %5755
  %5757 = vrot.lane.b32.xlu0 %v4698, 16
  %v5758 = vpop.permute.xlu0 %5757
  %5759 = vrot.lane.b32.xlu0 %v4810, 16
  %v5760 = vpop.permute.xlu0 %5759
  %5761 = vrot.lane.b32.xlu0 %v4922, 16
  %v5762 = vpop.permute.xlu0 %5761
  %5763 = vrot.lane.b32.xlu0 %v5034, 16
  %v5764 = vpop.permute.xlu0 %5763
  %5765 = vrot.lane.b32.xlu0 %v5146, 16
  %v5766 = vpop.permute.xlu0 %5765
  %5767 = vrot.lane.b32.xlu0 %v5258, 16
  %v5768 = vpop.permute.xlu0 %5767
  %5801 = vrot.lane.b32.xlu0 %v3580, 18
  %v5802 = vpop.permute.xlu0 %5801
  %5803 = vrot.lane.b32.xlu0 %v3692, 18
  %v5804 = vpop.permute.xlu0 %5803
  %5805 = vrot.lane.b32.xlu0 %v3804, 18
  %v5806 = vpop.permute.xlu0 %5805
  %5807 = vrot.lane.b32.xlu0 %v3916, 18
  %v5808 = vpop.permute.xlu0 %5807
  %5809 = vrot.lane.b32.xlu0 %v4028, 18
  %v5810 = vpop.permute.xlu0 %5809
  %5811 = vrot.lane.b32.xlu0 %v4140, 18
  %v5812 = vpop.permute.xlu0 %5811
  %5813 = vrot.lane.b32.xlu0 %v4252, 18
  %v5814 = vpop.permute.xlu0 %5813
  %5815 = vrot.lane.b32.xlu0 %v4364, 18
  %v5816 = vpop.permute.xlu0 %5815
  %5817 = vrot.lane.b32.xlu0 %v4476, 18
  %v5818 = vpop.permute.xlu0 %5817
  %5819 = vrot.lane.b32.xlu0 %v4588, 18
  %v5820 = vpop.permute.xlu0 %5819
  %5821 = vrot.lane.b32.xlu0 %v4700, 18
  %v5822 = vpop.permute.xlu0 %5821
  %5823 = vrot.lane.b32.xlu0 %v4812, 18
  %v5824 = vpop.permute.xlu0 %5823
  %5825 = vrot.lane.b32.xlu0 %v4924, 18
  %v5826 = vpop.permute.xlu0 %5825
  %5827 = vrot.lane.b32.xlu0 %v5036, 18
  %v5828 = vpop.permute.xlu0 %5827
  %5829 = vrot.lane.b32.xlu0 %v5148, 18
  %v5830 = vpop.permute.xlu0 %5829
  %5831 = vrot.lane.b32.xlu0 %v5260, 18
  %v5832 = vpop.permute.xlu0 %5831
  %5865 = vrot.lane.b32.xlu0 %v3582, 20
  %v5866 = vpop.permute.xlu0 %5865
  %5867 = vrot.lane.b32.xlu0 %v3694, 20
  %v5868 = vpop.permute.xlu0 %5867
  %5869 = vrot.lane.b32.xlu0 %v3806, 20
  %v5870 = vpop.permute.xlu0 %5869
  %5871 = vrot.lane.b32.xlu0 %v3918, 20
  %v5872 = vpop.permute.xlu0 %5871
  %5873 = vrot.lane.b32.xlu0 %v4030, 20
  %v5874 = vpop.permute.xlu0 %5873
  %5875 = vrot.lane.b32.xlu0 %v4142, 20
  %v5876 = vpop.permute.xlu0 %5875
  %5877 = vrot.lane.b32.xlu0 %v4254, 20
  %v5878 = vpop.permute.xlu0 %5877
  %5879 = vrot.lane.b32.xlu0 %v4366, 20
  %v5880 = vpop.permute.xlu0 %5879
  %5881 = vrot.lane.b32.xlu0 %v4478, 20
  %v5882 = vpop.permute.xlu0 %5881
  %5883 = vrot.lane.b32.xlu0 %v4590, 20
  %v5884 = vpop.permute.xlu0 %5883
  %5885 = vrot.lane.b32.xlu0 %v4702, 20
  %v5886 = vpop.permute.xlu0 %5885
  %5887 = vrot.lane.b32.xlu0 %v4814, 20
  %v5888 = vpop.permute.xlu0 %5887
  %5889 = vrot.lane.b32.xlu0 %v4926, 20
  %v5890 = vpop.permute.xlu0 %5889
  %5891 = vrot.lane.b32.xlu0 %v5038, 20
  %v5892 = vpop.permute.xlu0 %5891
  %5893 = vrot.lane.b32.xlu0 %v5150, 20
  %v5894 = vpop.permute.xlu0 %5893
  %5895 = vrot.lane.b32.xlu0 %v5262, 20
  %v5896 = vpop.permute.xlu0 %5895
  %5929 = vrot.lane.b32.xlu0 %v3584, 22
  %v5930 = vpop.permute.xlu0 %5929
  %5931 = vrot.lane.b32.xlu0 %v3696, 22
  %v5932 = vpop.permute.xlu0 %5931
  %5933 = vrot.lane.b32.xlu0 %v3808, 22
  %v5934 = vpop.permute.xlu0 %5933
  %5935 = vrot.lane.b32.xlu0 %v3920, 22
  %v5936 = vpop.permute.xlu0 %5935
  %5937 = vrot.lane.b32.xlu0 %v4032, 22
  %v5938 = vpop.permute.xlu0 %5937
  %5939 = vrot.lane.b32.xlu0 %v4144, 22
  %v5940 = vpop.permute.xlu0 %5939
  %5941 = vrot.lane.b32.xlu0 %v4256, 22
  %v5942 = vpop.permute.xlu0 %5941
  %5943 = vrot.lane.b32.xlu0 %v4368, 22
  %v5944 = vpop.permute.xlu0 %5943
  %5945 = vrot.lane.b32.xlu0 %v4480, 22
  %v5946 = vpop.permute.xlu0 %5945
  %5947 = vrot.lane.b32.xlu0 %v4592, 22
  %v5948 = vpop.permute.xlu0 %5947
  %5949 = vrot.lane.b32.xlu0 %v4704, 22
  %v5950 = vpop.permute.xlu0 %5949
  %5951 = vrot.lane.b32.xlu0 %v4816, 22
  %v5952 = vpop.permute.xlu0 %5951
  %5953 = vrot.lane.b32.xlu0 %v4928, 22
  %v5954 = vpop.permute.xlu0 %5953
  %5955 = vrot.lane.b32.xlu0 %v5040, 22
  %v5956 = vpop.permute.xlu0 %5955
  %5957 = vrot.lane.b32.xlu0 %v5152, 22
  %v5958 = vpop.permute.xlu0 %5957
  %5959 = vrot.lane.b32.xlu0 %v5264, 22
  %v5960 = vpop.permute.xlu0 %5959
  %5993 = vrot.lane.b32.xlu0 %v3586, 24
  %v5994 = vpop.permute.xlu0 %5993
  %5995 = vrot.lane.b32.xlu0 %v3698, 24
  %v5996 = vpop.permute.xlu0 %5995
  %5997 = vrot.lane.b32.xlu0 %v3810, 24
  %v5998 = vpop.permute.xlu0 %5997
  %5999 = vrot.lane.b32.xlu0 %v3922, 24
  %v6000 = vpop.permute.xlu0 %5999
  %6001 = vrot.lane.b32.xlu0 %v4034, 24
  %v6002 = vpop.permute.xlu0 %6001
  %6003 = vrot.lane.b32.xlu0 %v4146, 24
  %v6004 = vpop.permute.xlu0 %6003
  %6005 = vrot.lane.b32.xlu0 %v4258, 24
  %v6006 = vpop.permute.xlu0 %6005
  %6007 = vrot.lane.b32.xlu0 %v4370, 24
  %v6008 = vpop.permute.xlu0 %6007
  %6009 = vrot.lane.b32.xlu0 %v4482, 24
  %v6010 = vpop.permute.xlu0 %6009
  %6011 = vrot.lane.b32.xlu0 %v4594, 24
  %v6012 = vpop.permute.xlu0 %6011
  %6013 = vrot.lane.b32.xlu0 %v4706, 24
  %v6014 = vpop.permute.xlu0 %6013
  %6015 = vrot.lane.b32.xlu0 %v4818, 24
  %v6016 = vpop.permute.xlu0 %6015
  %6017 = vrot.lane.b32.xlu0 %v4930, 24
  %v6018 = vpop.permute.xlu0 %6017
  %6019 = vrot.lane.b32.xlu0 %v5042, 24
  %v6020 = vpop.permute.xlu0 %6019
  %6021 = vrot.lane.b32.xlu0 %v5154, 24
  %v6022 = vpop.permute.xlu0 %6021
  %6023 = vrot.lane.b32.xlu0 %v5266, 24
  %v6024 = vpop.permute.xlu0 %6023
  %6057 = vrot.lane.b32.xlu0 %v3588, 26
  %v6058 = vpop.permute.xlu0 %6057
  %6059 = vrot.lane.b32.xlu0 %v3700, 26
  %v6060 = vpop.permute.xlu0 %6059
  %6061 = vrot.lane.b32.xlu0 %v3812, 26
  %v6062 = vpop.permute.xlu0 %6061
  %6063 = vrot.lane.b32.xlu0 %v3924, 26
  %v6064 = vpop.permute.xlu0 %6063
  %6065 = vrot.lane.b32.xlu0 %v4036, 26
  %v6066 = vpop.permute.xlu0 %6065
  %6067 = vrot.lane.b32.xlu0 %v4148, 26
  %v6068 = vpop.permute.xlu0 %6067
  %6069 = vrot.lane.b32.xlu0 %v4260, 26
  %v6070 = vpop.permute.xlu0 %6069
  %6071 = vrot.lane.b32.xlu0 %v4372, 26
  %v6072 = vpop.permute.xlu0 %6071
  %6073 = vrot.lane.b32.xlu0 %v4484, 26
  %v6074 = vpop.permute.xlu0 %6073
  %6075 = vrot.lane.b32.xlu0 %v4596, 26
  %v6076 = vpop.permute.xlu0 %6075
  %6077 = vrot.lane.b32.xlu0 %v4708, 26
  %v6078 = vpop.permute.xlu0 %6077
  %6079 = vrot.lane.b32.xlu0 %v4820, 26
  %v6080 = vpop.permute.xlu0 %6079
  %6081 = vrot.lane.b32.xlu0 %v4932, 26
  %v6082 = vpop.permute.xlu0 %6081
  %6083 = vrot.lane.b32.xlu0 %v5044, 26
  %v6084 = vpop.permute.xlu0 %6083
  %6085 = vrot.lane.b32.xlu0 %v5156, 26
  %v6086 = vpop.permute.xlu0 %6085
  %6087 = vrot.lane.b32.xlu0 %v5268, 26
  %v6088 = vpop.permute.xlu0 %6087
  %6121 = vrot.lane.b32.xlu0 %v3590, 28
  %v6122 = vpop.permute.xlu0 %6121
  %6123 = vrot.lane.b32.xlu0 %v3702, 28
  %v6124 = vpop.permute.xlu0 %6123
  %6125 = vrot.lane.b32.xlu0 %v3814, 28
  %v6126 = vpop.permute.xlu0 %6125
  %6127 = vrot.lane.b32.xlu0 %v3926, 28
  %v6128 = vpop.permute.xlu0 %6127
  %6129 = vrot.lane.b32.xlu0 %v4038, 28
  %v6130 = vpop.permute.xlu0 %6129
  %6131 = vrot.lane.b32.xlu0 %v4150, 28
  %v6132 = vpop.permute.xlu0 %6131
  %6133 = vrot.lane.b32.xlu0 %v4262, 28
  %v6134 = vpop.permute.xlu0 %6133
  %6135 = vrot.lane.b32.xlu0 %v4374, 28
  %v6136 = vpop.permute.xlu0 %6135
  %6137 = vrot.lane.b32.xlu0 %v4486, 28
  %v6138 = vpop.permute.xlu0 %6137
  %6139 = vrot.lane.b32.xlu0 %v4598, 28
  %v6140 = vpop.permute.xlu0 %6139
  %6141 = vrot.lane.b32.xlu0 %v4710, 28
  %v6142 = vpop.permute.xlu0 %6141
  %6143 = vrot.lane.b32.xlu0 %v4822, 28
  %v6144 = vpop.permute.xlu0 %6143
  %6145 = vrot.lane.b32.xlu0 %v4934, 28
  %v6146 = vpop.permute.xlu0 %6145
  %6147 = vrot.lane.b32.xlu0 %v5046, 28
  %v6148 = vpop.permute.xlu0 %6147
  %6149 = vrot.lane.b32.xlu0 %v5158, 28
  %v6150 = vpop.permute.xlu0 %6149
  %6151 = vrot.lane.b32.xlu0 %v5270, 28
  %v6152 = vpop.permute.xlu0 %6151
  %6185 = vrot.lane.b32.xlu0 %v3592, 30
  %v6186 = vpop.permute.xlu0 %6185
  %6187 = vrot.lane.b32.xlu0 %v3704, 30
  %v6188 = vpop.permute.xlu0 %6187
  %6189 = vrot.lane.b32.xlu0 %v3816, 30
  %v6190 = vpop.permute.xlu0 %6189
  %6191 = vrot.lane.b32.xlu0 %v3928, 30
  %v6192 = vpop.permute.xlu0 %6191
  %6193 = vrot.lane.b32.xlu0 %v4040, 30
  %v6194 = vpop.permute.xlu0 %6193
  %6195 = vrot.lane.b32.xlu0 %v4152, 30
  %v6196 = vpop.permute.xlu0 %6195
  %6197 = vrot.lane.b32.xlu0 %v4264, 30
  %v6198 = vpop.permute.xlu0 %6197
  %6199 = vrot.lane.b32.xlu0 %v4376, 30
  %v6200 = vpop.permute.xlu0 %6199
  %6201 = vrot.lane.b32.xlu0 %v4488, 30
  %v6202 = vpop.permute.xlu0 %6201
  %6203 = vrot.lane.b32.xlu0 %v4600, 30
  %v6204 = vpop.permute.xlu0 %6203
  %6205 = vrot.lane.b32.xlu0 %v4712, 30
  %v6206 = vpop.permute.xlu0 %6205
  %6207 = vrot.lane.b32.xlu0 %v4824, 30
  %v6208 = vpop.permute.xlu0 %6207
  %6209 = vrot.lane.b32.xlu0 %v4936, 30
  %v6210 = vpop.permute.xlu0 %6209
  %6211 = vrot.lane.b32.xlu0 %v5048, 30
  %v6212 = vpop.permute.xlu0 %6211
  %6213 = vrot.lane.b32.xlu0 %v5160, 30
  %v6214 = vpop.permute.xlu0 %6213
  %6215 = vrot.lane.b32.xlu0 %v5272, 30
  %v6216 = vpop.permute.xlu0 %6215
  %vm6233 = vcmask 15360
  %v6234 = vsel %vm6233, %v1786, %v5290
  %v6235 = vsel %vm6233, %v1898, %v5292
  %v6236 = vsel %vm6233, %v2010, %v5294
  %v6237 = vsel %vm6233, %v2122, %v5296
  %v6238 = vsel %vm6233, %v2234, %v5298
  %v6239 = vsel %vm6233, %v2346, %v5300
  %v6240 = vsel %vm6233, %v2458, %v5302
  %v6241 = vsel %vm6233, %v2570, %v5304
  %v6242 = vsel %vm6233, %v2682, %v5306
  %v6243 = vsel %vm6233, %v2794, %v5308
  %v6244 = vsel %vm6233, %v2906, %v5310
  %v6245 = vsel %vm6233, %v3018, %v5312
  %v6246 = vsel %vm6233, %v3130, %v5314
  %v6247 = vsel %vm6233, %v3242, %v5316
  %v6248 = vsel %vm6233, %v3354, %v5318
  %v6249 = vsel %vm6233, %v3466, %v5320
  %vm6250 = vcmask 31744
  %v6251 = vsel %vm6250, %v6234, %v5354
  %v6252 = vsel %vm6250, %v6235, %v5356
  %v6253 = vsel %vm6250, %v6236, %v5358
  %v6254 = vsel %vm6250, %v6237, %v5360
  %v6255 = vsel %vm6250, %v6238, %v5362
  %v6256 = vsel %vm6250, %v6239, %v5364
  %v6257 = vsel %vm6250, %v6240, %v5366
  %v6258 = vsel %vm6250, %v6241, %v5368
  %v6259 = vsel %vm6250, %v6242, %v5370
  %v6260 = vsel %vm6250, %v6243, %v5372
  %v6261 = vsel %vm6250, %v6244, %v5374
  %v6262 = vsel %vm6250, %v6245, %v5376
  %v6263 = vsel %vm6250, %v6246, %v5378
  %v6264 = vsel %vm6250, %v6247, %v5380
  %v6265 = vsel %vm6250, %v6248, %v5382
  %v6266 = vsel %vm6250, %v6249, %v5384
  %vm6267 = vcmask 48128
  %v6268 = vsel %vm6267, %v6251, %v5418
  %v6269 = vsel %vm6267, %v6252, %v5420
  %v6270 = vsel %vm6267, %v6253, %v5422
  %v6271 = vsel %vm6267, %v6254, %v5424
  %v6272 = vsel %vm6267, %v6255, %v5426
  %v6273 = vsel %vm6267, %v6256, %v5428
  %v6274 = vsel %vm6267, %v6257, %v5430
  %v6275 = vsel %vm6267, %v6258, %v5432
  %v6276 = vsel %vm6267, %v6259, %v5434
  %v6277 = vsel %vm6267, %v6260, %v5436
  %v6278 = vsel %vm6267, %v6261, %v5438
  %v6279 = vsel %vm6267, %v6262, %v5440
  %v6280 = vsel %vm6267, %v6263, %v5442
  %v6281 = vsel %vm6267, %v6264, %v5444
  %v6282 = vsel %vm6267, %v6265, %v5446
  %v6283 = vsel %vm6267, %v6266, %v5448
  %vm6284 = vcmask 64512
  %v6285 = vsel %vm6284, %v6268, %v5482
  %v6286 = vsel %vm6284, %v6269, %v5484
  %v6287 = vsel %vm6284, %v6270, %v5486
  %v6288 = vsel %vm6284, %v6271, %v5488
  %v6289 = vsel %vm6284, %v6272, %v5490
  %v6290 = vsel %vm6284, %v6273, %v5492
  %v6291 = vsel %vm6284, %v6274, %v5494
  %v6292 = vsel %vm6284, %v6275, %v5496
  %v6293 = vsel %vm6284, %v6276, %v5498
  %v6294 = vsel %vm6284, %v6277, %v5500
  %v6295 = vsel %vm6284, %v6278, %v5502
  %v6296 = vsel %vm6284, %v6279, %v5504
  %v6297 = vsel %vm6284, %v6280, %v5506
  %v6298 = vsel %vm6284, %v6281, %v5508
  %v6299 = vsel %vm6284, %v6282, %v5510
  %v6300 = vsel %vm6284, %v6283, %v5512
  %vm6301 = vcmask 80896
  %v6302 = vsel %vm6301, %v6285, %v5546
  %v6303 = vsel %vm6301, %v6286, %v5548
  %v6304 = vsel %vm6301, %v6287, %v5550
  %v6305 = vsel %vm6301, %v6288, %v5552
  %v6306 = vsel %vm6301, %v6289, %v5554
  %v6307 = vsel %vm6301, %v6290, %v5556
  %v6308 = vsel %vm6301, %v6291, %v5558
  %v6309 = vsel %vm6301, %v6292, %v5560
  %v6310 = vsel %vm6301, %v6293, %v5562
  %v6311 = vsel %vm6301, %v6294, %v5564
  %v6312 = vsel %vm6301, %v6295, %v5566
  %v6313 = vsel %vm6301, %v6296, %v5568
  %v6314 = vsel %vm6301, %v6297, %v5570
  %v6315 = vsel %vm6301, %v6298, %v5572
  %v6316 = vsel %vm6301, %v6299, %v5574
  %v6317 = vsel %vm6301, %v6300, %v5576
  %vm6318 = vcmask 97280
  %v6319 = vsel %vm6318, %v6302, %v5610
  %v6320 = vsel %vm6318, %v6303, %v5612
  %v6321 = vsel %vm6318, %v6304, %v5614
  %v6322 = vsel %vm6318, %v6305, %v5616
  %v6323 = vsel %vm6318, %v6306, %v5618
  %v6324 = vsel %vm6318, %v6307, %v5620
  %v6325 = vsel %vm6318, %v6308, %v5622
  %v6326 = vsel %vm6318, %v6309, %v5624
  %v6327 = vsel %vm6318, %v6310, %v5626
  %v6328 = vsel %vm6318, %v6311, %v5628
  %v6329 = vsel %vm6318, %v6312, %v5630
  %v6330 = vsel %vm6318, %v6313, %v5632
  %v6331 = vsel %vm6318, %v6314, %v5634
  %v6332 = vsel %vm6318, %v6315, %v5636
  %v6333 = vsel %vm6318, %v6316, %v5638
  %v6334 = vsel %vm6318, %v6317, %v5640
  %vm6335 = vcmask 113664
  %v6336 = vsel %vm6335, %v6319, %v5674
  %v6337 = vsel %vm6335, %v6320, %v5676
  %v6338 = vsel %vm6335, %v6321, %v5678
  %v6339 = vsel %vm6335, %v6322, %v5680
  %v6340 = vsel %vm6335, %v6323, %v5682
  %v6341 = vsel %vm6335, %v6324, %v5684
  %v6342 = vsel %vm6335, %v6325, %v5686
  %v6343 = vsel %vm6335, %v6326, %v5688
  %v6344 = vsel %vm6335, %v6327, %v5690
  %v6345 = vsel %vm6335, %v6328, %v5692
  %v6346 = vsel %vm6335, %v6329, %v5694
  %v6347 = vsel %vm6335, %v6330, %v5696
  %v6348 = vsel %vm6335, %v6331, %v5698
  %v6349 = vsel %vm6335, %v6332, %v5700
  %v6350 = vsel %vm6335, %v6333, %v5702
  %v6351 = vsel %vm6335, %v6334, %v5704
  %vm6352 = vcmask 130048
  %v6353 = vsel %vm6352, %v6336, %v5738
  %v6354 = vsel %vm6352, %v6337, %v5740
  %v6355 = vsel %vm6352, %v6338, %v5742
  %v6356 = vsel %vm6352, %v6339, %v5744
  %v6357 = vsel %vm6352, %v6340, %v5746
  %v6358 = vsel %vm6352, %v6341, %v5748
  %v6359 = vsel %vm6352, %v6342, %v5750
  %v6360 = vsel %vm6352, %v6343, %v5752
  %v6361 = vsel %vm6352, %v6344, %v5754
  %v6362 = vsel %vm6352, %v6345, %v5756
  %v6363 = vsel %vm6352, %v6346, %v5758
  %v6364 = vsel %vm6352, %v6347, %v5760
  %v6365 = vsel %vm6352, %v6348, %v5762
  %v6366 = vsel %vm6352, %v6349, %v5764
  %v6367 = vsel %vm6352, %v6350, %v5766
  %v6368 = vsel %vm6352, %v6351, %v5768
  %vm6369 = vcmask 146432
  %v6370 = vsel %vm6369, %v6353, %v5802
  %v6371 = vsel %vm6369, %v6354, %v5804
  %v6372 = vsel %vm6369, %v6355, %v5806
  %v6373 = vsel %vm6369, %v6356, %v5808
  %v6374 = vsel %vm6369, %v6357, %v5810
  %v6375 = vsel %vm6369, %v6358, %v5812
  %v6376 = vsel %vm6369, %v6359, %v5814
  %v6377 = vsel %vm6369, %v6360, %v5816
  %v6378 = vsel %vm6369, %v6361, %v5818
  %v6379 = vsel %vm6369, %v6362, %v5820
  %v6380 = vsel %vm6369, %v6363, %v5822
  %v6381 = vsel %vm6369, %v6364, %v5824
  %v6382 = vsel %vm6369, %v6365, %v5826
  %v6383 = vsel %vm6369, %v6366, %v5828
  %v6384 = vsel %vm6369, %v6367, %v5830
  %v6385 = vsel %vm6369, %v6368, %v5832
  %vm6386 = vcmask 162816
  %v6387 = vsel %vm6386, %v6370, %v5866
  %v6388 = vsel %vm6386, %v6371, %v5868
  %v6389 = vsel %vm6386, %v6372, %v5870
  %v6390 = vsel %vm6386, %v6373, %v5872
  %v6391 = vsel %vm6386, %v6374, %v5874
  %v6392 = vsel %vm6386, %v6375, %v5876
  %v6393 = vsel %vm6386, %v6376, %v5878
  %v6394 = vsel %vm6386, %v6377, %v5880
  %v6395 = vsel %vm6386, %v6378, %v5882
  %v6396 = vsel %vm6386, %v6379, %v5884
  %v6397 = vsel %vm6386, %v6380, %v5886
  %v6398 = vsel %vm6386, %v6381, %v5888
  %v6399 = vsel %vm6386, %v6382, %v5890
  %v6400 = vsel %vm6386, %v6383, %v5892
  %v6401 = vsel %vm6386, %v6384, %v5894
  %v6402 = vsel %vm6386, %v6385, %v5896
  %vm6403 = vcmask 179200
  %v6404 = vsel %vm6403, %v6387, %v5930
  %v6405 = vsel %vm6403, %v6388, %v5932
  %v6406 = vsel %vm6403, %v6389, %v5934
  %v6407 = vsel %vm6403, %v6390, %v5936
  %v6408 = vsel %vm6403, %v6391, %v5938
  %v6409 = vsel %vm6403, %v6392, %v5940
  %v6410 = vsel %vm6403, %v6393, %v5942
  %v6411 = vsel %vm6403, %v6394, %v5944
  %v6412 = vsel %vm6403, %v6395, %v5946
  %v6413 = vsel %vm6403, %v6396, %v5948
  %v6414 = vsel %vm6403, %v6397, %v5950
  %v6415 = vsel %vm6403, %v6398, %v5952
  %v6416 = vsel %vm6403, %v6399, %v5954
  %v6417 = vsel %vm6403, %v6400, %v5956
  %v6418 = vsel %vm6403, %v6401, %v5958
  %v6419 = vsel %vm6403, %v6402, %v5960
  %vm6420 = vcmask 195584
  %v6421 = vsel %vm6420, %v6404, %v5994
  %v6422 = vsel %vm6420, %v6405, %v5996
  %v6423 = vsel %vm6420, %v6406, %v5998
  %v6424 = vsel %vm6420, %v6407, %v6000
  %v6425 = vsel %vm6420, %v6408, %v6002
  %v6426 = vsel %vm6420, %v6409, %v6004
  %v6427 = vsel %vm6420, %v6410, %v6006
  %v6428 = vsel %vm6420, %v6411, %v6008
  %v6429 = vsel %vm6420, %v6412, %v6010
  %v6430 = vsel %vm6420, %v6413, %v6012
  %v6431 = vsel %vm6420, %v6414, %v6014
  %v6432 = vsel %vm6420, %v6415, %v6016
  %v6433 = vsel %vm6420, %v6416, %v6018
  %v6434 = vsel %vm6420, %v6417, %v6020
  %v6435 = vsel %vm6420, %v6418, %v6022
  %v6436 = vsel %vm6420, %v6419, %v6024
  %vm6437 = vcmask 211968
  %v6438 = vsel %vm6437, %v6421, %v6058
  %v6439 = vsel %vm6437, %v6422, %v6060
  %v6440 = vsel %vm6437, %v6423, %v6062
  %v6441 = vsel %vm6437, %v6424, %v6064
  %v6442 = vsel %vm6437, %v6425, %v6066
  %v6443 = vsel %vm6437, %v6426, %v6068
  %v6444 = vsel %vm6437, %v6427, %v6070
  %v6445 = vsel %vm6437, %v6428, %v6072
  %v6446 = vsel %vm6437, %v6429, %v6074
  %v6447 = vsel %vm6437, %v6430, %v6076
  %v6448 = vsel %vm6437, %v6431, %v6078
  %v6449 = vsel %vm6437, %v6432, %v6080
  %v6450 = vsel %vm6437, %v6433, %v6082
  %v6451 = vsel %vm6437, %v6434, %v6084
  %v6452 = vsel %vm6437, %v6435, %v6086
  %v6453 = vsel %vm6437, %v6436, %v6088
  %vm6454 = vcmask 228352
  %v6455 = vsel %vm6454, %v6438, %v6122
  %v6456 = vsel %vm6454, %v6439, %v6124
  %v6457 = vsel %vm6454, %v6440, %v6126
  %v6458 = vsel %vm6454, %v6441, %v6128
  %v6459 = vsel %vm6454, %v6442, %v6130
  %v6460 = vsel %vm6454, %v6443, %v6132
  %v6461 = vsel %vm6454, %v6444, %v6134
  %v6462 = vsel %vm6454, %v6445, %v6136
  %v6463 = vsel %vm6454, %v6446, %v6138
  %v6464 = vsel %vm6454, %v6447, %v6140
  %v6465 = vsel %vm6454, %v6448, %v6142
  %v6466 = vsel %vm6454, %v6449, %v6144
  %v6467 = vsel %vm6454, %v6450, %v6146
  %v6468 = vsel %vm6454, %v6451, %v6148
  %v6469 = vsel %vm6454, %v6452, %v6150
  %v6470 = vsel %vm6454, %v6453, %v6152
  %vm6471 = vcmask 244736
  %v6472 = vsel %vm6471, %v6455, %v6186
  %v6473 = vsel %vm6471, %v6456, %v6188
  %v6474 = vsel %vm6471, %v6457, %v6190
  %v6475 = vsel %vm6471, %v6458, %v6192
  %v6476 = vsel %vm6471, %v6459, %v6194
  %v6477 = vsel %vm6471, %v6460, %v6196
  %v6478 = vsel %vm6471, %v6461, %v6198
  %v6479 = vsel %vm6471, %v6462, %v6200
  %v6480 = vsel %vm6471, %v6463, %v6202
  %v6481 = vsel %vm6471, %v6464, %v6204
  %v6482 = vsel %vm6471, %v6465, %v6206
  %v6483 = vsel %vm6471, %v6466, %v6208
  %v6484 = vsel %vm6471, %v6467, %v6210
  %v6485 = vsel %vm6471, %v6468, %v6212
  %v6486 = vsel %vm6471, %v6469, %v6214
  %v6487 = vsel %vm6471, %v6470, %v6216
  %vm6488 = vcmask 261120
  %6489 = vst.msk [vmem:[%s1] sm:$0xff] %vm6488, %v6472
  %6490 = vst.msk [vmem:[%s1 + $0x8] sm:$0xff] %vm6488, %v6473
  %6491 = vst.msk [vmem:[%s1 + $0x10] sm:$0xff] %vm6488, %v6474
  %6492 = vst.msk [vmem:[%s1 + $0x18] sm:$0xff] %vm6488, %v6475
  %6493 = vst.msk [vmem:[%s1 + $0x20] sm:$0xff] %vm6488, %v6476
  %6494 = vst.msk [vmem:[%s1 + $0x28] sm:$0xff] %vm6488, %v6477
  %6495 = vst.msk [vmem:[%s1 + $0x30] sm:$0xff] %vm6488, %v6478
  %6496 = vst.msk [vmem:[%s1 + $0x38] sm:$0xff] %vm6488, %v6479
  %6497 = vst.msk [vmem:[%s1 + $0x40] sm:$0xff] %vm6488, %v6480
  %6498 = vst.msk [vmem:[%s1 + $0x48] sm:$0xff] %vm6488, %v6481
  %6499 = vst.msk [vmem:[%s1 + $0x50] sm:$0xff] %vm6488, %v6482
  %6500 = vst.msk [vmem:[%s1 + $0x58] sm:$0xff] %vm6488, %v6483
  %6501 = vst.msk [vmem:[%s1 + $0x60] sm:$0xff] %vm6488, %v6484
  %6502 = vst.msk [vmem:[%s1 + $0x68] sm:$0xff] %vm6488, %v6485
  %6503 = vst.msk [vmem:[%s1 + $0x70] sm:$0xff] %vm6488, %v6486
  %6504 = vst.msk [vmem:[%s1 + $0x78] sm:$0xff] %vm6488, %v6487
  %6521 = vrot.lane.b32.xlu0 %v6472, 32
  %v6522 = vpop.permute.xlu0 %6521
  %6523 = vrot.lane.b32.xlu0 %v6473, 32
  %v6524 = vpop.permute.xlu0 %6523
  %6525 = vrot.lane.b32.xlu0 %v6474, 32
  %v6526 = vpop.permute.xlu0 %6525
  %6527 = vrot.lane.b32.xlu0 %v6475, 32
  %v6528 = vpop.permute.xlu0 %6527
  %6529 = vrot.lane.b32.xlu0 %v6476, 32
  %v6530 = vpop.permute.xlu0 %6529
  %6531 = vrot.lane.b32.xlu0 %v6477, 32
  %v6532 = vpop.permute.xlu0 %6531
  %6533 = vrot.lane.b32.xlu0 %v6478, 32
  %v6534 = vpop.permute.xlu0 %6533
  %6535 = vrot.lane.b32.xlu0 %v6479, 32
  %v6536 = vpop.permute.xlu0 %6535
  %6537 = vrot.lane.b32.xlu0 %v6480, 32
  %v6538 = vpop.permute.xlu0 %6537
  %6539 = vrot.lane.b32.xlu0 %v6481, 32
  %v6540 = vpop.permute.xlu0 %6539
  %6541 = vrot.lane.b32.xlu0 %v6482, 32
  %v6542 = vpop.permute.xlu0 %6541
  %6543 = vrot.lane.b32.xlu0 %v6483, 32
  %v6544 = vpop.permute.xlu0 %6543
  %6545 = vrot.lane.b32.xlu0 %v6484, 32
  %v6546 = vpop.permute.xlu0 %6545
  %6547 = vrot.lane.b32.xlu0 %v6485, 32
  %v6548 = vpop.permute.xlu0 %6547
  %6549 = vrot.lane.b32.xlu0 %v6486, 32
  %v6550 = vpop.permute.xlu0 %6549
  %6551 = vrot.lane.b32.xlu0 %v6487, 32
  %v6552 = vpop.permute.xlu0 %6551
  %vm6569 = vcmask 523520
  %6570 = vst.msk [vmem:[%s1] sm:$0xff] %vm6569, %v6522
  %6571 = vst.msk [vmem:[%s1 + $0x8] sm:$0xff] %vm6569, %v6524
  %6572 = vst.msk [vmem:[%s1 + $0x10] sm:$0xff] %vm6569, %v6526
  %6573 = vst.msk [vmem:[%s1 + $0x18] sm:$0xff] %vm6569, %v6528
  %6574 = vst.msk [vmem:[%s1 + $0x20] sm:$0xff] %vm6569, %v6530
  %6575 = vst.msk [vmem:[%s1 + $0x28] sm:$0xff] %vm6569, %v6532
  %6576 = vst.msk [vmem:[%s1 + $0x30] sm:$0xff] %vm6569, %v6534
  %6577 = vst.msk [vmem:[%s1 + $0x38] sm:$0xff] %vm6569, %v6536
  %6578 = vst.msk [vmem:[%s1 + $0x40] sm:$0xff] %vm6569, %v6538
  %6579 = vst.msk [vmem:[%s1 + $0x48] sm:$0xff] %vm6569, %v6540
  %6580 = vst.msk [vmem:[%s1 + $0x50] sm:$0xff] %vm6569, %v6542
  %6581 = vst.msk [vmem:[%s1 + $0x58] sm:$0xff] %vm6569, %v6544
  %6582 = vst.msk [vmem:[%s1 + $0x60] sm:$0xff] %vm6569, %v6546
  %6583 = vst.msk [vmem:[%s1 + $0x68] sm:$0xff] %vm6569, %v6548
  %6584 = vst.msk [vmem:[%s1 + $0x70] sm:$0xff] %vm6569, %v6550
  %6585 = vst.msk [vmem:[%s1 + $0x78] sm:$0xff] %vm6569, %v6552
  // Predicated region
  $region6: #{tpu_custom_call.1} parent=0 // pred_check
    _
  $region7: #{tpu_custom_call.1} parent=0 // pred_check_branch
    %6587 = sbr.rel (0) target = $region9
  $region8: #{tpu_custom_call.1} parent=0 // pred_region
    _
  $region9: #{tpu_custom_call.1} parent=0 // pred_fallthru
    _
  // Predicated region
  $region10: #{tpu_custom_call.1} parent=0 // pred_check
    _
  $region11: #{tpu_custom_call.1} parent=0 // pred_check_branch
    %6589 = sbr.rel (0) target = $region13
  $region12: #{tpu_custom_call.1} parent=0 // pred_region
    _
  $region13: #{tpu_custom_call.1} parent=0 // pred_fallthru
    _

</llo_original>
